<compile_context>
chip_gen: v7x
topology: tpu7x:2x2x1
jax: 0.10.0
libtpu: 0.0.40
codegen_flags: <defaults>
</compile_context>

<pallas_src>
import functools

import jax
import jax.numpy as jnp
from jax import lax
from jax.experimental import pallas as pl
from jax.experimental.pallas import tpu as pltpu


def _layer_norm(x, g, b, eps=1e-5):
    mu = jnp.mean(x, axis=-1, keepdims=True)
    xc = x - mu
    var = jnp.mean(xc * xc, axis=-1, keepdims=True)
    return xc * lax.rsqrt(var + eps) * g + b


# ------------------------------- kernel --------------------------------------

def gt_encoder_layer_kernel(
    n_res_ref, q_ref, kv_ref, e_ref,
    ln_e1_g, ln_e1_b,
    w_eg, w_on, w_oe,
    ln_n2_g, ln_n2_b, w1_n, w2_n,
    ln_e2_g, ln_e2_b, w1_e, w2_e,
    n_out_ref, e_out_ref,
    ehat_acc,
    *, n_heads, n_e_chunks,
):
    TQ, N, D = e_ref.shape                  # batch dim squeezed by BlockSpec
    H = n_heads
    DK = D // H
    scale = DK ** -0.5
    f32, bf16 = jnp.float32, jnp.bfloat16

    def mm(a, w):                           # bf16 operands on the MXU, f32 accumulation
        return jnp.dot(a.astype(bf16), w, preferred_element_type=f32)

    # ---- edge pre-LN + fused, head-major E/G projection (one NT MXU matmul) --
    e_ln = _layer_norm(e_ref[...], ln_e1_g[...], ln_e1_b[...])          # [TQ, N, D]
    eg = lax.dot_general(
        w_eg[...], e_ln.reshape(TQ * N, D).astype(bf16),
        (((1,), (1,)), ((), ())), preferred_element_type=f32)           # [2H, TQ*N]
    eg = eg.reshape(2 * H, TQ, N)                                       # head-major, N in lanes
    gate = 1.0 / (1.0 + jnp.exp(-eg[H:]))                               # exact sigmoid [H, TQ, N]
    cent = jnp.log(1.0 + jnp.sum(gate, axis=-1, keepdims=True))         # [H, TQ, 1]

    # ---- attention: per-head scores / softmax / gated context ----------------
    q = q_ref[...]                                                      # [TQ, D]
    kv = kv_ref[...]                                                    # [N, 2D]
    k_all, v_all = kv[:, :D], kv[:, D:]
    ctx_heads = []
    for h in range(H):
        lo = h * DK
        qh = q[:, lo:lo + DK].astype(bf16)
        kh = k_all[:, lo:lo + DK].astype(bf16)
        vh = v_all[:, lo:lo + DK].astype(bf16)
        s = lax.dot_general(qh, kh, (((1,), (1,)), ((), ())),
                            preferred_element_type=f32) * scale         # [TQ, N]
        s = jnp.clip(s, -5.0, 5.0)
        ehat = s + eg[h]                                                 # pre-softmax logits
        ehat_acc[h] = ehat                                               # lane-dense store
        m = jnp.max(ehat, axis=-1, keepdims=True)
        p = jnp.exp(ehat - m)
        # softmax normalisation folded into the post-matmul scale (with the gate)
        sc = pl.reciprocal(jnp.sum(p, axis=-1, keepdims=True), approx=True) * cent[h]
        ctx_heads.append(mm(p, vh) * sc)                                 # [TQ, DK]

    # one fused O_n matmul over the concatenated heads
    n_attn = mm(jnp.concatenate(ctx_heads, axis=-1), w_on[...])          # [TQ, D]

    # ---- node residual + MLP (ReLU on both linears) ---------------------------
    n1 = n_res_ref[...] + n_attn
    hn = jnp.maximum(mm(_layer_norm(n1, ln_n2_g[...], ln_n2_b[...]), w1_n[...]), 0.0)
    hn = jnp.maximum(mm(hn, w2_n[...]), 0.0)
    n_out_ref[...] = (n1 + hn).astype(n_out_ref.dtype)

    # ---- edge path, chunked over query rows (bounds the DH-wide hidden slab) --
    CQ = TQ // n_e_chunks
    for c in range(n_e_chunks):
        r0 = c * CQ
        e_in_c = e_ref[r0:r0 + CQ]                                       # [CQ, N, D]
        ehat_c = ehat_acc[:, r0:r0 + CQ, :]                              # [H, CQ, N]
        e_attn_c = lax.dot_general(                                      # O_e: contract leading H
            ehat_c.reshape(H, CQ * N).astype(bf16), w_oe[...],
            (((0,), (0,)), ((), ())),
            preferred_element_type=f32).reshape(CQ, N, D)
        e1 = e_in_c + e_attn_c
        e_ln2 = _layer_norm(e1, ln_e2_g[...], ln_e2_b[...])
        he = jnp.maximum(mm(e_ln2.reshape(CQ * N, D), w1_e[...]), 0.0)
        he = jnp.maximum(mm(he, w2_e[...]), 0.0)
        e_out_ref[r0:r0 + CQ] = (e1 + he.reshape(CQ, N, D)).astype(e_out_ref.dtype)


# ------------------------------- wrapper --------------------------------------

def _vmem_capacity_bytes():
    try:
        return int(pltpu.get_tpu_info().vmem_capacity_bytes)
    except Exception:
        return 64 * 1024 * 1024          # conservative fallback (v7x per-TensorCore)


def _choose_tq(n_nodes, d_emb, n_heads, budget_bytes):
    """Largest multiple-of-8 divisor of n_nodes whose per-step edge working set
    fits the budget: ~7 f32 [TQ, N, D] slabs (double-buffered e-in and e-out plus
    e_ln / eg / residual temporaries) + the [H, TQ, N] logits scratch."""
    per_row = n_nodes * d_emb * 4 * 7 + n_nodes * n_heads * 4
    cap = max(8, budget_bytes // per_row)
    if cap >= n_nodes:
        return n_nodes
    tq = (cap // 8) * 8
    while tq >= 8:
        if n_nodes % tq == 0:
            return tq
        tq -= 8
    # TODO(synk): ragged n_nodes (no multiple-of-8 divisor <= cap) falls back to
    # whole query rows per step; pad N on the host for such shapes.
    return n_nodes


def _choose_edge_chunks(tq, n_nodes, d_hid, budget_bytes=4 * 1024 * 1024):
    """Smallest chunk count so the edge-MLP hidden slab [TQ/c * N, DH] stays small."""
    def fits(c):
        return tq % c == 0 and (tq // c) * n_nodes * d_hid * 4 <= budget_bytes
    for c in range(1, tq + 1):           # prefer sublane-aligned chunks
        if fits(c) and (tq // c) % 8 == 0:
            return c
    for c in range(1, tq + 1):
        if fits(c):
            return c
    return tq


def gt_encoder_layer(n, e, params, n_heads):
    B, N, D = n.shape
    H = n_heads
    assert D % H == 0
    DH = params["w1_n"].shape[1]
    f32, bf16 = jnp.float32, jnp.bfloat16

    # ---- generation-aware VMEM budgeting --------------------------------------
    vmem_phys = _vmem_capacity_bytes()
    vmem_limit = int(min(vmem_phys * 3 // 4, 112 * 1024 * 1024))
    tq = _choose_tq(N, D, H, (vmem_limit * 6) // 10)
    if B * (N // tq) < 2:                # keep >= 2 grid steps for 2-TC chips (v7x)
        for t in range(tq - 8, 7, -8):
            if N % t == 0:
                tq = t
                break
    n_qt = N // tq
    n_e_chunks = _choose_edge_chunks(tq, N, DH)

    # ---- node pre-LN + QKV projection hoisted out of the kernel (computed once
    #      per node instead of once per query tile) ------------------------------
    n_ln1 = _layer_norm(n, params["ln_n1_g"], params["ln_n1_b"])
    qkv = jnp.dot(n_ln1, params["w_qkv"])                 # [B, N, 3D]
    q_all, kv_all = qkv[..., :D], qkv[..., D:]

    # ---- pre-cast MXU-feeding weights to bf16 ----------------------------------
    w_eg = jnp.concatenate([params["w_e"], params["w_g"]], axis=0).astype(bf16)  # [2H, D]
    w_on = params["w_on"].astype(bf16)
    w_oe = params["w_oe"].astype(bf16)
    w1_n = params["w1_n"].astype(bf16)
    w2_n = params["w2_n"].astype(bf16)
    w1_e = params["w1_e"].astype(bf16)
    w2_e = params["w2_e"].astype(bf16)
    # TODO(synk): on v5e, stream e (and e_out) as bf16 to halve the dominant HBM term.

    kernel = functools.partial(gt_encoder_layer_kernel,
                               n_heads=H, n_e_chunks=n_e_chunks)
    zw = lambda b, q: (0, 0)
    in_specs = [
        pl.BlockSpec((None, tq, D), lambda b, q: (b, q, 0)),          # n residual tile
        pl.BlockSpec((None, tq, D), lambda b, q: (b, q, 0)),          # Q tile
        pl.BlockSpec((None, N, 2 * D), lambda b, q: (b, 0, 0)),       # K|V (all nodes)
        pl.BlockSpec((None, tq, N, D), lambda b, q: (b, q, 0, 0)),    # e tile
        pl.BlockSpec((1, D), zw), pl.BlockSpec((1, D), zw),           # ln_e1
        pl.BlockSpec((2 * H, D), zw),                                 # [W_e ; W_g]
        pl.BlockSpec((D, D), zw),                                     # O_n^T
        pl.BlockSpec((H, D), zw),                                     # O_e^T
        pl.BlockSpec((1, D), zw), pl.BlockSpec((1, D), zw),           # ln_n2
        pl.BlockSpec((D, DH), zw), pl.BlockSpec((DH, D), zw),         # node MLP
        pl.BlockSpec((1, D), zw), pl.BlockSpec((1, D), zw),           # ln_e2
        pl.BlockSpec((D, DH), zw), pl.BlockSpec((DH, D), zw),         # edge MLP
    ]
    out_specs = (
        pl.BlockSpec((None, tq, D), lambda b, q: (b, q, 0)),
        pl.BlockSpec((None, tq, N, D), lambda b, q: (b, q, 0, 0)),
    )
    out_shape = (
        jax.ShapeDtypeStruct((B, N, D), f32),
        jax.ShapeDtypeStruct((B, N, N, D), f32),
    )
    return pl.pallas_call(
        kernel,
        grid=(B, n_qt),
        in_specs=in_specs,
        out_specs=out_specs,
        out_shape=out_shape,
        scratch_shapes=[pltpu.VMEM((H, tq, N), f32)],   # lane-dense per-head logits
        compiler_params=pltpu.CompilerParams(
            dimension_semantics=("parallel", "parallel"),
            vmem_limit_bytes=vmem_limit),
    )(n, q_all, kv_all, e,
      params["ln_e1_g"], params["ln_e1_b"],
      w_eg, w_on, w_oe,
      params["ln_n2_g"], params["ln_n2_b"], w1_n, w2_n,
      params["ln_e2_g"], params["ln_e2_b"], w1_e, w2_e)


# ------------------------- params / pure-JAX reference ------------------------

def init_params(key, d_emb, n_heads, h2i_ratio):
    dh = h2i_ratio * d_emb
    ks = jax.random.split(key, 16)
    w = lambda k, s: 0.1 * jax.random.normal(k, s, jnp.float32)
    return dict(
        ln_n1_g=1.0 + 0.1 * jax.random.normal(ks[9], (1, d_emb), jnp.float32),
        ln_n1_b=0.1 * jax.random.normal(ks[10], (1, d_emb), jnp.float32),
        ln_e1_g=1.0 + 0.1 * jax.random.normal(ks[11], (1, d_emb), jnp.float32),
        ln_e1_b=0.1 * jax.random.normal(ks[12], (1, d_emb), jnp.float32),
        w_qkv=w(ks[0], (d_emb, 3 * d_emb)),      # = W_qkv.weight.T
        w_e=w(ks[1], (n_heads, d_emb)),          # = W_e.weight
        w_g=w(ks[2], (n_heads, d_emb)),          # = W_g.weight
        w_on=w(ks[3], (d_emb, d_emb)),           # = O_n.weight.T
        w_oe=w(ks[4], (n_heads, d_emb)),         # = O_e.weight.T
        ln_n2_g=1.0 + 0.1 * jax.random.normal(ks[13], (1, d_emb), jnp.float32),
        ln_n2_b=0.1 * jax.random.normal(ks[14], (1, d_emb), jnp.float32),
        w1_n=w(ks[5], (d_emb, dh)),
        w2_n=w(ks[6], (dh, d_emb)),
        ln_e2_g=1.0 + 0.1 * jax.random.normal(ks[15], (1, d_emb), jnp.float32),
        ln_e2_b=0.1 * jax.random.normal(ks[7], (1, d_emb), jnp.float32),
        w1_e=w(ks[8], (d_emb, dh)),
        w2_e=0.1 * jax.random.normal(jax.random.fold_in(key, 99), (dh, d_emb), jnp.float32),
    )


def reference(n, e, p, n_heads):
    def ln(x, g, b, eps=1e-5):
        mu = x.mean(-1, keepdims=True)
        var = ((x - mu) ** 2).mean(-1, keepdims=True)
        return (x - mu) / jnp.sqrt(var + eps) * g + b

    B, N, D = n.shape
    H, DK = n_heads, D // n_heads
    n_ln = ln(n, p["ln_n1_g"], p["ln_n1_b"])
    e_ln = ln(e, p["ln_e1_g"], p["ln_e1_b"])
    qkv = (n_ln @ p["w_qkv"]).reshape(B, N, 3, H, DK).transpose(2, 0, 3, 1, 4)
    Q, K, V = qkv[0], qkv[1], qkv[2]
    E = (e_ln @ p["w_e"].T).transpose(0, 3, 1, 2)               # [B,H,N,N]
    G = jax.nn.sigmoid(e_ln @ p["w_g"].T).transpose(0, 3, 1, 2)
    cent = jnp.log(1.0 + G.sum(-1))                              # [B,H,N]
    A_raw = jnp.clip(jnp.einsum("bhqd,bhkd->bhqk", Q, K) * DK ** -0.5, -5.0, 5.0)
    Ehat = A_raw + E
    A = jax.nn.softmax(Ehat, axis=-1)
    Vh = jnp.einsum("bhqk,bhkd->bhqd", A, V) * cent[..., None]
    n_attn = Vh.transpose(0, 2, 1, 3).reshape(B, N, D) @ p["w_on"]
    e_attn = Ehat.transpose(0, 2, 3, 1) @ p["w_oe"]
    n1 = n + n_attn
    hn = jnp.maximum(ln(n1, p["ln_n2_g"], p["ln_n2_b"]) @ p["w1_n"], 0.0)
    hn = jnp.maximum(hn @ p["w2_n"], 0.0)
    e1 = e + e_attn
    he = jnp.maximum(ln(e1, p["ln_e2_g"], p["ln_e2_b"]) @ p["w1_e"], 0.0)
    he = jnp.maximum(he @ p["w2_e"], 0.0)
    return n1 + hn, e1 + he


# ---------------------------------- main ---------------------------------------

if __name__ == "__main__":
    B, N, D, H, R = 2, 8, 32, 4, 2   # batch, n_nodes, d_emb, n_heads, h2i_ratio
    key = jax.random.PRNGKey(0)
    kn, ke, kp = jax.random.split(key, 3)
    n = jax.random.normal(kn, (B, N, D), jnp.float32)
    e = jax.random.normal(ke, (B, N, N, D), jnp.float32)
    params = init_params(kp, D, H, R)

    n_out, e_out = gt_encoder_layer(n, e, params, H)
    jax.block_until_ready((n_out, e_out))

    n_exp, e_exp = reference(n, e, params, H)
    assert jnp.allclose(n_out, n_exp, atol=2e-2, rtol=2e-2), "node output mismatch"
    assert jnp.allclose(e_out, e_exp, atol=2e-2, rtol=2e-2), "edge output mismatch"
    print("KERNEL_OK")
</pallas_src>

<mosaic_0001>
module attributes {stable_mosaic.version = 11 : i64} {
  func.func @gt_encoder_layer_kernel(%arg0: i32, %arg1: i32, %arg2: memref<1x8x32xf32, #tpu.memory_space<vmem>>, %arg3: memref<1x8x32xf32, #tpu.memory_space<vmem>>, %arg4: memref<1x8x64xf32, #tpu.memory_space<vmem>>, %arg5: memref<1x8x8x32xf32, #tpu.memory_space<vmem>>, %arg6: memref<1x32xf32, #tpu.memory_space<vmem>>, %arg7: memref<1x32xf32, #tpu.memory_space<vmem>>, %arg8: memref<8x32xbf16, #tpu.memory_space<vmem>>, %arg9: memref<32x32xbf16, #tpu.memory_space<vmem>>, %arg10: memref<4x32xbf16, #tpu.memory_space<vmem>>, %arg11: memref<1x32xf32, #tpu.memory_space<vmem>>, %arg12: memref<1x32xf32, #tpu.memory_space<vmem>>, %arg13: memref<32x64xbf16, #tpu.memory_space<vmem>>, %arg14: memref<64x32xbf16, #tpu.memory_space<vmem>>, %arg15: memref<1x32xf32, #tpu.memory_space<vmem>>, %arg16: memref<1x32xf32, #tpu.memory_space<vmem>>, %arg17: memref<32x64xbf16, #tpu.memory_space<vmem>>, %arg18: memref<64x32xbf16, #tpu.memory_space<vmem>>, %arg19: memref<1x8x32xf32, #tpu.memory_space<vmem>>, %arg20: memref<1x8x8x32xf32, #tpu.memory_space<vmem>>, %arg21: memref<4x8x8xf32, #tpu.memory_space<vmem>>) attributes {dimension_semantics = [#tpu.dimension_semantics<parallel>, #tpu.dimension_semantics<parallel>], iteration_bounds = array<i64: 2, 1>, scalar_prefetch = 0 : i64, scratch_operands = 1 : i64, tpu.core_type = #tpu.core_type<tc>, window_params = [{transform_indices = @transform_0, window_bounds = array<i64: 1, 8, 32>}, {transform_indices = @transform_1, window_bounds = array<i64: 1, 8, 32>}, {transform_indices = @transform_2, window_bounds = array<i64: 1, 8, 64>}, {transform_indices = @transform_3, window_bounds = array<i64: 1, 8, 8, 32>}, {pipeline_mode = #tpu.pipeline_mode<synchronous>, transform_indices = @transform_4, window_bounds = array<i64: 1, 32>}, {pipeline_mode = #tpu.pipeline_mode<synchronous>, transform_indices = @transform_5, window_bounds = array<i64: 1, 32>}, {pipeline_mode = #tpu.pipeline_mode<synchronous>, transform_indices = @transform_6, window_bounds = array<i64: 8, 32>}, {pipeline_mode = #tpu.pipeline_mode<synchronous>, transform_indices = @transform_7, window_bounds = array<i64: 32, 32>}, {pipeline_mode = #tpu.pipeline_mode<synchronous>, transform_indices = @transform_8, window_bounds = array<i64: 4, 32>}, {pipeline_mode = #tpu.pipeline_mode<synchronous>, transform_indices = @transform_9, window_bounds = array<i64: 1, 32>}, {pipeline_mode = #tpu.pipeline_mode<synchronous>, transform_indices = @transform_10, window_bounds = array<i64: 1, 32>}, {pipeline_mode = #tpu.pipeline_mode<synchronous>, transform_indices = @transform_11, window_bounds = array<i64: 32, 64>}, {pipeline_mode = #tpu.pipeline_mode<synchronous>, transform_indices = @transform_12, window_bounds = array<i64: 64, 32>}, {pipeline_mode = #tpu.pipeline_mode<synchronous>, transform_indices = @transform_13, window_bounds = array<i64: 1, 32>}, {pipeline_mode = #tpu.pipeline_mode<synchronous>, transform_indices = @transform_14, window_bounds = array<i64: 1, 32>}, {pipeline_mode = #tpu.pipeline_mode<synchronous>, transform_indices = @transform_15, window_bounds = array<i64: 32, 64>}, {pipeline_mode = #tpu.pipeline_mode<synchronous>, transform_indices = @transform_16, window_bounds = array<i64: 64, 32>}, {transform_indices = @transform_17, window_bounds = array<i64: 1, 8, 32>}, {transform_indices = @transform_18, window_bounds = array<i64: 1, 8, 8, 32>}]} {
    %c0 = arith.constant 0 : index
    %c0_0 = arith.constant 0 : index
    %c0_1 = arith.constant 0 : index
    %c0_2 = arith.constant 0 : index
    %0 = vector.load %arg5[%c0, %c0_0, %c0_1, %c0_2] : memref<1x8x8x32xf32, #tpu.memory_space<vmem>>, vector<1x8x8x32xf32>
    %1 = vector.shape_cast %0 : vector<1x8x8x32xf32> to vector<8x8x32xf32>
    %c0_3 = arith.constant 0 : index
    %c0_4 = arith.constant 0 : index
    %2 = vector.load %arg6[%c0_3, %c0_4] : memref<1x32xf32, #tpu.memory_space<vmem>>, vector<1x32xf32>
    %c0_5 = arith.constant 0 : index
    %c0_6 = arith.constant 0 : index
    %3 = vector.load %arg7[%c0_5, %c0_6] : memref<1x32xf32, #tpu.memory_space<vmem>>, vector<1x32xf32>
    %cst = arith.constant dense<0.000000e+00> : vector<8x8xf32>
    %4 = vector.multi_reduction <add>, %1, %cst [2] : vector<8x8x32xf32> to vector<8x8xf32>
    %5 = vector.shape_cast %4 : vector<8x8xf32> to vector<8x8x1xf32>
    %cst_7 = arith.constant 3.200000e+01 : f32
    %6 = vector.broadcast %cst_7 : f32 to vector<8x8x1xf32>
    %7 = arith.divf %5, %6 : vector<8x8x1xf32>
    %8 = vector.broadcast %7 : vector<8x8x1xf32> to vector<8x8x32xf32>
    %9 = arith.subf %1, %8 : vector<8x8x32xf32>
    %10 = arith.mulf %9, %9 : vector<8x8x32xf32>
    %cst_8 = arith.constant dense<0.000000e+00> : vector<8x8xf32>
    %11 = vector.multi_reduction <add>, %10, %cst_8 [2] : vector<8x8x32xf32> to vector<8x8xf32>
    %12 = vector.shape_cast %11 : vector<8x8xf32> to vector<8x8x1xf32>
    %cst_9 = arith.constant 3.200000e+01 : f32
    %13 = vector.broadcast %cst_9 : f32 to vector<8x8x1xf32>
    %14 = arith.divf %12, %13 : vector<8x8x1xf32>
    %cst_10 = arith.constant 9.99999974E-6 : f32
    %15 = vector.broadcast %cst_10 : f32 to vector<8x8x1xf32>
    %16 = arith.addf %14, %15 : vector<8x8x1xf32>
    %17 = math.rsqrt %16 : vector<8x8x1xf32>
    %18 = vector.broadcast %17 : vector<8x8x1xf32> to vector<8x8x32xf32>
    %19 = arith.mulf %9, %18 : vector<8x8x32xf32>
    %20 = vector.shape_cast %2 : vector<1x32xf32> to vector<1x1x32xf32>
    %21 = vector.broadcast %20 : vector<1x1x32xf32> to vector<8x8x32xf32>
    %22 = arith.mulf %19, %21 : vector<8x8x32xf32>
    %23 = vector.shape_cast %3 : vector<1x32xf32> to vector<1x1x32xf32>
    %24 = vector.broadcast %23 : vector<1x1x32xf32> to vector<8x8x32xf32>
    %25 = arith.addf %22, %24 : vector<8x8x32xf32>
    %c0_11 = arith.constant 0 : index
    %c0_12 = arith.constant 0 : index
    %26 = vector.load %arg8[%c0_11, %c0_12] : memref<8x32xbf16, #tpu.memory_space<vmem>>, vector<8x32xbf16>
    %27 = vector.shape_cast %25 : vector<8x8x32xf32> to vector<64x32xf32>
    %28 = arith.truncf %27 : vector<64x32xf32> to vector<64x32xbf16>
    %cst_13 = arith.constant dense<0.000000e+00> : vector<8x64xf32>
    %29 = tpu.matmul %26, %28, %cst_13 {dimension_numbers = #tpu.dot_dimension_numbers<[1], [1], [0], [0], [0, 0, 1, 0], [], []>} : vector<8x32xbf16>, vector<64x32xbf16>, vector<8x64xf32> -> vector<8x64xf32>
    %30 = vector.shape_cast %29 : vector<8x64xf32> to vector<8x8x8xf32>
    %31 = vector.extract_strided_slice %30 {offsets = [4, 0, 0], sizes = [4, 8, 8], strides = [1, 1, 1]} : vector<8x8x8xf32> to vector<4x8x8xf32>
    %cst_14 = arith.constant 0.000000e+00 : f32
    %32 = vector.broadcast %cst_14 : f32 to vector<4x8x8xf32>
    %33 = arith.subf %32, %31 : vector<4x8x8xf32>
    %34 = math.exp %33 : vector<4x8x8xf32>
    %cst_15 = arith.constant 1.000000e+00 : f32
    %35 = vector.broadcast %cst_15 : f32 to vector<4x8x8xf32>
    %36 = arith.addf %35, %34 : vector<4x8x8xf32>
    %cst_16 = arith.constant 1.000000e+00 : f32
    %37 = vector.broadcast %cst_16 : f32 to vector<4x8x8xf32>
    %38 = arith.divf %37, %36 : vector<4x8x8xf32>
    %cst_17 = arith.constant dense<0.000000e+00> : vector<4x8xf32>
    %39 = vector.multi_reduction <add>, %38, %cst_17 [2] : vector<4x8x8xf32> to vector<4x8xf32>
    %40 = vector.shape_cast %39 : vector<4x8xf32> to vector<4x8x1xf32>
    %cst_18 = arith.constant 1.000000e+00 : f32
    %41 = vector.broadcast %cst_18 : f32 to vector<4x8x1xf32>
    %42 = arith.addf %41, %40 : vector<4x8x1xf32>
    %43 = math.log %42 : vector<4x8x1xf32>
    %c0_19 = arith.constant 0 : index
    %c0_20 = arith.constant 0 : index
    %c0_21 = arith.constant 0 : index
    %44 = vector.load %arg3[%c0_19, %c0_20, %c0_21] : memref<1x8x32xf32, #tpu.memory_space<vmem>>, vector<1x8x32xf32>
    %45 = vector.shape_cast %44 : vector<1x8x32xf32> to vector<8x32xf32>
    %c0_22 = arith.constant 0 : index
    %c0_23 = arith.constant 0 : index
    %c0_24 = arith.constant 0 : index
    %46 = vector.load %arg4[%c0_22, %c0_23, %c0_24] : memref<1x8x64xf32, #tpu.memory_space<vmem>>, vector<1x8x64xf32>
    %47 = vector.shape_cast %46 : vector<1x8x64xf32> to vector<8x64xf32>
    %48 = vector.extract_strided_slice %47 {offsets = [0, 0], sizes = [8, 32], strides = [1, 1]} : vector<8x64xf32> to vector<8x32xf32>
    %49 = vector.extract_strided_slice %47 {offsets = [0, 32], sizes = [8, 32], strides = [1, 1]} : vector<8x64xf32> to vector<8x32xf32>
    %50 = vector.extract_strided_slice %45 {offsets = [0, 0], sizes = [8, 8], strides = [1, 1]} : vector<8x32xf32> to vector<8x8xf32>
    %51 = arith.truncf %50 : vector<8x8xf32> to vector<8x8xbf16>
    %52 = vector.extract_strided_slice %48 {offsets = [0, 0], sizes = [8, 8], strides = [1, 1]} : vector<8x32xf32> to vector<8x8xf32>
    %53 = arith.truncf %52 : vector<8x8xf32> to vector<8x8xbf16>
    %54 = vector.extract_strided_slice %49 {offsets = [0, 0], sizes = [8, 8], strides = [1, 1]} : vector<8x32xf32> to vector<8x8xf32>
    %55 = arith.truncf %54 : vector<8x8xf32> to vector<8x8xbf16>
    %cst_25 = arith.constant dense<0.000000e+00> : vector<8x8xf32>
    %56 = tpu.matmul %51, %53, %cst_25 {dimension_numbers = #tpu.dot_dimension_numbers<[1], [1], [0], [0], [0, 0, 1, 0], [], []>} : vector<8x8xbf16>, vector<8x8xbf16>, vector<8x8xf32> -> vector<8x8xf32>
    %cst_26 = arith.constant 0.353553385 : f32
    %57 = vector.broadcast %cst_26 : f32 to vector<8x8xf32>
    %58 = arith.mulf %56, %57 : vector<8x8xf32>
    %cst_27 = arith.constant -5.000000e+00 : f32
    %cst_28 = arith.constant 5.000000e+00 : f32
    %59 = vector.broadcast %cst_27 : f32 to vector<8x8xf32>
    %60 = arith.maximumf %59, %58 : vector<8x8xf32>
    %61 = vector.broadcast %cst_28 : f32 to vector<8x8xf32>
    %62 = arith.minimumf %61, %60 : vector<8x8xf32>
    %63 = vector.extract_strided_slice %30 {offsets = [0, 0, 0], sizes = [1, 8, 8], strides = [1, 1, 1]} : vector<8x8x8xf32> to vector<1x8x8xf32>
    %64 = vector.shape_cast %63 : vector<1x8x8xf32> to vector<8x8xf32>
    %65 = arith.addf %62, %64 : vector<8x8xf32>
    %c0_29 = arith.constant 0 : index
    %c0_30 = arith.constant 0 : index
    %c0_31 = arith.constant 0 : index
    %66 = vector.load %arg21[%c0_29, %c0_30, %c0_31] : memref<4x8x8xf32, #tpu.memory_space<vmem>>, vector<1x8x8xf32>
    %67 = vector.shape_cast %66 : vector<1x8x8xf32> to vector<8x8xf32>
    %68 = vector.shape_cast %65 : vector<8x8xf32> to vector<1x8x8xf32>
    tpu.vector_store %arg21[%c0_29, %c0_30, %c0_31], %68 {strides = array<i32>} : memref<4x8x8xf32, #tpu.memory_space<vmem>>, vector<1x8x8xf32>,
    %cst_32 = arith.constant dense<0xFF800000> : vector<8xf32>
    %69 = vector.multi_reduction <maximumf>, %65, %cst_32 [1] : vector<8x8xf32> to vector<8xf32>
    %70 = vector.shape_cast %69 : vector<8xf32> to vector<8x1xf32>
    %71 = vector.broadcast %70 : vector<8x1xf32> to vector<8x8xf32>
    %72 = arith.subf %65, %71 : vector<8x8xf32>
    %73 = math.exp %72 : vector<8x8xf32>
    %cst_33 = arith.constant dense<0.000000e+00> : vector<8xf32>
    %74 = vector.multi_reduction <add>, %73, %cst_33 [1] : vector<8x8xf32> to vector<8xf32>
    %75 = vector.shape_cast %74 : vector<8xf32> to vector<8x1xf32>
    %76 = tpu.reciprocal %75 {approx = true} : vector<8x1xf32> -> vector<8x1xf32>
    %77 = vector.extract_strided_slice %43 {offsets = [0, 0, 0], sizes = [1, 8, 1], strides = [1, 1, 1]} : vector<4x8x1xf32> to vector<1x8x1xf32>
    %78 = vector.shape_cast %77 : vector<1x8x1xf32> to vector<8x1xf32>
    %79 = arith.mulf %76, %78 : vector<8x1xf32>
    %80 = arith.truncf %73 : vector<8x8xf32> to vector<8x8xbf16>
    %cst_34 = arith.constant dense<0.000000e+00> : vector<8x8xf32>
    %81 = tpu.matmul %80, %55, %cst_34 {dimension_numbers = #tpu.dot_dimension_numbers<[1], [0], [0], [1], [0, 0, 1, 1], [], []>} : vector<8x8xbf16>, vector<8x8xbf16>, vector<8x8xf32> -> vector<8x8xf32>
    %82 = vector.broadcast %79 : vector<8x1xf32> to vector<8x8xf32>
    %83 = arith.mulf %81, %82 : vector<8x8xf32>
    %84 = vector.extract_strided_slice %45 {offsets = [0, 8], sizes = [8, 8], strides = [1, 1]} : vector<8x32xf32> to vector<8x8xf32>
    %85 = arith.truncf %84 : vector<8x8xf32> to vector<8x8xbf16>
    %86 = vector.extract_strided_slice %48 {offsets = [0, 8], sizes = [8, 8], strides = [1, 1]} : vector<8x32xf32> to vector<8x8xf32>
    %87 = arith.truncf %86 : vector<8x8xf32> to vector<8x8xbf16>
    %88 = vector.extract_strided_slice %49 {offsets = [0, 8], sizes = [8, 8], strides = [1, 1]} : vector<8x32xf32> to vector<8x8xf32>
    %89 = arith.truncf %88 : vector<8x8xf32> to vector<8x8xbf16>
    %cst_35 = arith.constant dense<0.000000e+00> : vector<8x8xf32>
    %90 = tpu.matmul %85, %87, %cst_35 {dimension_numbers = #tpu.dot_dimension_numbers<[1], [1], [0], [0], [0, 0, 1, 0], [], []>} : vector<8x8xbf16>, vector<8x8xbf16>, vector<8x8xf32> -> vector<8x8xf32>
    %cst_36 = arith.constant 0.353553385 : f32
    %91 = vector.broadcast %cst_36 : f32 to vector<8x8xf32>
    %92 = arith.mulf %90, %91 : vector<8x8xf32>
    %cst_37 = arith.constant -5.000000e+00 : f32
    %cst_38 = arith.constant 5.000000e+00 : f32
    %93 = vector.broadcast %cst_37 : f32 to vector<8x8xf32>
    %94 = arith.maximumf %93, %92 : vector<8x8xf32>
    %95 = vector.broadcast %cst_38 : f32 to vector<8x8xf32>
    %96 = arith.minimumf %95, %94 : vector<8x8xf32>
    %97 = vector.extract_strided_slice %30 {offsets = [1, 0, 0], sizes = [1, 8, 8], strides = [1, 1, 1]} : vector<8x8x8xf32> to vector<1x8x8xf32>
    %98 = vector.shape_cast %97 : vector<1x8x8xf32> to vector<8x8xf32>
    %99 = arith.addf %96, %98 : vector<8x8xf32>
    %c1 = arith.constant 1 : index
    %c0_39 = arith.constant 0 : index
    %c0_40 = arith.constant 0 : index
    %100 = vector.load %arg21[%c1, %c0_39, %c0_40] : memref<4x8x8xf32, #tpu.memory_space<vmem>>, vector<1x8x8xf32>
    %101 = vector.shape_cast %100 : vector<1x8x8xf32> to vector<8x8xf32>
    %102 = vector.shape_cast %99 : vector<8x8xf32> to vector<1x8x8xf32>
    tpu.vector_store %arg21[%c1, %c0_39, %c0_40], %102 {strides = array<i32>} : memref<4x8x8xf32, #tpu.memory_space<vmem>>, vector<1x8x8xf32>,
    %cst_41 = arith.constant dense<0xFF800000> : vector<8xf32>
    %103 = vector.multi_reduction <maximumf>, %99, %cst_41 [1] : vector<8x8xf32> to vector<8xf32>
    %104 = vector.shape_cast %103 : vector<8xf32> to vector<8x1xf32>
    %105 = vector.broadcast %104 : vector<8x1xf32> to vector<8x8xf32>
    %106 = arith.subf %99, %105 : vector<8x8xf32>
    %107 = math.exp %106 : vector<8x8xf32>
    %cst_42 = arith.constant dense<0.000000e+00> : vector<8xf32>
    %108 = vector.multi_reduction <add>, %107, %cst_42 [1] : vector<8x8xf32> to vector<8xf32>
    %109 = vector.shape_cast %108 : vector<8xf32> to vector<8x1xf32>
    %110 = tpu.reciprocal %109 {approx = true} : vector<8x1xf32> -> vector<8x1xf32>
    %111 = vector.extract_strided_slice %43 {offsets = [1, 0, 0], sizes = [1, 8, 1], strides = [1, 1, 1]} : vector<4x8x1xf32> to vector<1x8x1xf32>
    %112 = vector.shape_cast %111 : vector<1x8x1xf32> to vector<8x1xf32>
    %113 = arith.mulf %110, %112 : vector<8x1xf32>
    %114 = arith.truncf %107 : vector<8x8xf32> to vector<8x8xbf16>
    %cst_43 = arith.constant dense<0.000000e+00> : vector<8x8xf32>
    %115 = tpu.matmul %114, %89, %cst_43 {dimension_numbers = #tpu.dot_dimension_numbers<[1], [0], [0], [1], [0, 0, 1, 1], [], []>} : vector<8x8xbf16>, vector<8x8xbf16>, vector<8x8xf32> -> vector<8x8xf32>
    %116 = vector.broadcast %113 : vector<8x1xf32> to vector<8x8xf32>
    %117 = arith.mulf %115, %116 : vector<8x8xf32>
    %118 = vector.extract_strided_slice %45 {offsets = [0, 16], sizes = [8, 8], strides = [1, 1]} : vector<8x32xf32> to vector<8x8xf32>
    %119 = arith.truncf %118 : vector<8x8xf32> to vector<8x8xbf16>
    %120 = vector.extract_strided_slice %48 {offsets = [0, 16], sizes = [8, 8], strides = [1, 1]} : vector<8x32xf32> to vector<8x8xf32>
    %121 = arith.truncf %120 : vector<8x8xf32> to vector<8x8xbf16>
    %122 = vector.extract_strided_slice %49 {offsets = [0, 16], sizes = [8, 8], strides = [1, 1]} : vector<8x32xf32> to vector<8x8xf32>
    %123 = arith.truncf %122 : vector<8x8xf32> to vector<8x8xbf16>
    %cst_44 = arith.constant dense<0.000000e+00> : vector<8x8xf32>
    %124 = tpu.matmul %119, %121, %cst_44 {dimension_numbers = #tpu.dot_dimension_numbers<[1], [1], [0], [0], [0, 0, 1, 0], [], []>} : vector<8x8xbf16>, vector<8x8xbf16>, vector<8x8xf32> -> vector<8x8xf32>
    %cst_45 = arith.constant 0.353553385 : f32
    %125 = vector.broadcast %cst_45 : f32 to vector<8x8xf32>
    %126 = arith.mulf %124, %125 : vector<8x8xf32>
    %cst_46 = arith.constant -5.000000e+00 : f32
    %cst_47 = arith.constant 5.000000e+00 : f32
    %127 = vector.broadcast %cst_46 : f32 to vector<8x8xf32>
    %128 = arith.maximumf %127, %126 : vector<8x8xf32>
    %129 = vector.broadcast %cst_47 : f32 to vector<8x8xf32>
    %130 = arith.minimumf %129, %128 : vector<8x8xf32>
    %131 = vector.extract_strided_slice %30 {offsets = [2, 0, 0], sizes = [1, 8, 8], strides = [1, 1, 1]} : vector<8x8x8xf32> to vector<1x8x8xf32>
    %132 = vector.shape_cast %131 : vector<1x8x8xf32> to vector<8x8xf32>
    %133 = arith.addf %130, %132 : vector<8x8xf32>
    %c2 = arith.constant 2 : index
    %c0_48 = arith.constant 0 : index
    %c0_49 = arith.constant 0 : index
    %134 = vector.load %arg21[%c2, %c0_48, %c0_49] : memref<4x8x8xf32, #tpu.memory_space<vmem>>, vector<1x8x8xf32>
    %135 = vector.shape_cast %134 : vector<1x8x8xf32> to vector<8x8xf32>
    %136 = vector.shape_cast %133 : vector<8x8xf32> to vector<1x8x8xf32>
    tpu.vector_store %arg21[%c2, %c0_48, %c0_49], %136 {strides = array<i32>} : memref<4x8x8xf32, #tpu.memory_space<vmem>>, vector<1x8x8xf32>,
    %cst_50 = arith.constant dense<0xFF800000> : vector<8xf32>
    %137 = vector.multi_reduction <maximumf>, %133, %cst_50 [1] : vector<8x8xf32> to vector<8xf32>
    %138 = vector.shape_cast %137 : vector<8xf32> to vector<8x1xf32>
    %139 = vector.broadcast %138 : vector<8x1xf32> to vector<8x8xf32>
    %140 = arith.subf %133, %139 : vector<8x8xf32>
    %141 = math.exp %140 : vector<8x8xf32>
    %cst_51 = arith.constant dense<0.000000e+00> : vector<8xf32>
    %142 = vector.multi_reduction <add>, %141, %cst_51 [1] : vector<8x8xf32> to vector<8xf32>
    %143 = vector.shape_cast %142 : vector<8xf32> to vector<8x1xf32>
    %144 = tpu.reciprocal %143 {approx = true} : vector<8x1xf32> -> vector<8x1xf32>
    %145 = vector.extract_strided_slice %43 {offsets = [2, 0, 0], sizes = [1, 8, 1], strides = [1, 1, 1]} : vector<4x8x1xf32> to vector<1x8x1xf32>
    %146 = vector.shape_cast %145 : vector<1x8x1xf32> to vector<8x1xf32>
    %147 = arith.mulf %144, %146 : vector<8x1xf32>
    %148 = arith.truncf %141 : vector<8x8xf32> to vector<8x8xbf16>
    %cst_52 = arith.constant dense<0.000000e+00> : vector<8x8xf32>
    %149 = tpu.matmul %148, %123, %cst_52 {dimension_numbers = #tpu.dot_dimension_numbers<[1], [0], [0], [1], [0, 0, 1, 1], [], []>} : vector<8x8xbf16>, vector<8x8xbf16>, vector<8x8xf32> -> vector<8x8xf32>
    %150 = vector.broadcast %147 : vector<8x1xf32> to vector<8x8xf32>
    %151 = arith.mulf %149, %150 : vector<8x8xf32>
    %152 = vector.extract_strided_slice %45 {offsets = [0, 24], sizes = [8, 8], strides = [1, 1]} : vector<8x32xf32> to vector<8x8xf32>
    %153 = arith.truncf %152 : vector<8x8xf32> to vector<8x8xbf16>
    %154 = vector.extract_strided_slice %48 {offsets = [0, 24], sizes = [8, 8], strides = [1, 1]} : vector<8x32xf32> to vector<8x8xf32>
    %155 = arith.truncf %154 : vector<8x8xf32> to vector<8x8xbf16>
    %156 = vector.extract_strided_slice %49 {offsets = [0, 24], sizes = [8, 8], strides = [1, 1]} : vector<8x32xf32> to vector<8x8xf32>
    %157 = arith.truncf %156 : vector<8x8xf32> to vector<8x8xbf16>
    %cst_53 = arith.constant dense<0.000000e+00> : vector<8x8xf32>
    %158 = tpu.matmul %153, %155, %cst_53 {dimension_numbers = #tpu.dot_dimension_numbers<[1], [1], [0], [0], [0, 0, 1, 0], [], []>} : vector<8x8xbf16>, vector<8x8xbf16>, vector<8x8xf32> -> vector<8x8xf32>
    %cst_54 = arith.constant 0.353553385 : f32
    %159 = vector.broadcast %cst_54 : f32 to vector<8x8xf32>
    %160 = arith.mulf %158, %159 : vector<8x8xf32>
    %cst_55 = arith.constant -5.000000e+00 : f32
    %cst_56 = arith.constant 5.000000e+00 : f32
    %161 = vector.broadcast %cst_55 : f32 to vector<8x8xf32>
    %162 = arith.maximumf %161, %160 : vector<8x8xf32>
    %163 = vector.broadcast %cst_56 : f32 to vector<8x8xf32>
    %164 = arith.minimumf %163, %162 : vector<8x8xf32>
    %165 = vector.extract_strided_slice %30 {offsets = [3, 0, 0], sizes = [1, 8, 8], strides = [1, 1, 1]} : vector<8x8x8xf32> to vector<1x8x8xf32>
    %166 = vector.shape_cast %165 : vector<1x8x8xf32> to vector<8x8xf32>
    %167 = arith.addf %164, %166 : vector<8x8xf32>
    %c3 = arith.constant 3 : index
    %c0_57 = arith.constant 0 : index
    %c0_58 = arith.constant 0 : index
    %168 = vector.load %arg21[%c3, %c0_57, %c0_58] : memref<4x8x8xf32, #tpu.memory_space<vmem>>, vector<1x8x8xf32>
    %169 = vector.shape_cast %168 : vector<1x8x8xf32> to vector<8x8xf32>
    %170 = vector.shape_cast %167 : vector<8x8xf32> to vector<1x8x8xf32>
    tpu.vector_store %arg21[%c3, %c0_57, %c0_58], %170 {strides = array<i32>} : memref<4x8x8xf32, #tpu.memory_space<vmem>>, vector<1x8x8xf32>,
    %cst_59 = arith.constant dense<0xFF800000> : vector<8xf32>
    %171 = vector.multi_reduction <maximumf>, %167, %cst_59 [1] : vector<8x8xf32> to vector<8xf32>
    %172 = vector.shape_cast %171 : vector<8xf32> to vector<8x1xf32>
    %173 = vector.broadcast %172 : vector<8x1xf32> to vector<8x8xf32>
    %174 = arith.subf %167, %173 : vector<8x8xf32>
    %175 = math.exp %174 : vector<8x8xf32>
    %cst_60 = arith.constant dense<0.000000e+00> : vector<8xf32>
    %176 = vector.multi_reduction <add>, %175, %cst_60 [1] : vector<8x8xf32> to vector<8xf32>
    %177 = vector.shape_cast %176 : vector<8xf32> to vector<8x1xf32>
    %178 = tpu.reciprocal %177 {approx = true} : vector<8x1xf32> -> vector<8x1xf32>
    %179 = vector.extract_strided_slice %43 {offsets = [3, 0, 0], sizes = [1, 8, 1], strides = [1, 1, 1]} : vector<4x8x1xf32> to vector<1x8x1xf32>
    %180 = vector.shape_cast %179 : vector<1x8x1xf32> to vector<8x1xf32>
    %181 = arith.mulf %178, %180 : vector<8x1xf32>
    %182 = arith.truncf %175 : vector<8x8xf32> to vector<8x8xbf16>
    %cst_61 = arith.constant dense<0.000000e+00> : vector<8x8xf32>
    %183 = tpu.matmul %182, %157, %cst_61 {dimension_numbers = #tpu.dot_dimension_numbers<[1], [0], [0], [1], [0, 0, 1, 1], [], []>} : vector<8x8xbf16>, vector<8x8xbf16>, vector<8x8xf32> -> vector<8x8xf32>
    %184 = vector.broadcast %181 : vector<8x1xf32> to vector<8x8xf32>
    %185 = arith.mulf %183, %184 : vector<8x8xf32>
    %186 = tpu.concatenate %83, %117, %151, %185 in 1 : vector<8x8xf32>, vector<8x8xf32>, vector<8x8xf32>, vector<8x8xf32> -> vector<8x32xf32>
    %c0_62 = arith.constant 0 : index
    %c0_63 = arith.constant 0 : index
    %187 = vector.load %arg9[%c0_62, %c0_63] : memref<32x32xbf16, #tpu.memory_space<vmem>>, vector<32x32xbf16>
    %188 = arith.truncf %186 : vector<8x32xf32> to vector<8x32xbf16>
    %cst_64 = arith.constant dense<0.000000e+00> : vector<8x32xf32>
    %189 = tpu.matmul %188, %187, %cst_64 {dimension_numbers = #tpu.dot_dimension_numbers<[1], [0], [0], [1], [0, 0, 1, 1], [], []>} : vector<8x32xbf16>, vector<32x32xbf16>, vector<8x32xf32> -> vector<8x32xf32>
    %c0_65 = arith.constant 0 : index
    %c0_66 = arith.constant 0 : index
    %c0_67 = arith.constant 0 : index
    %190 = vector.load %arg2[%c0_65, %c0_66, %c0_67] : memref<1x8x32xf32, #tpu.memory_space<vmem>>, vector<1x8x32xf32>
    %191 = vector.shape_cast %190 : vector<1x8x32xf32> to vector<8x32xf32>
    %192 = arith.addf %191, %189 : vector<8x32xf32>
    %c0_68 = arith.constant 0 : index
    %c0_69 = arith.constant 0 : index
    %193 = vector.load %arg11[%c0_68, %c0_69] : memref<1x32xf32, #tpu.memory_space<vmem>>, vector<1x32xf32>
    %c0_70 = arith.constant 0 : index
    %c0_71 = arith.constant 0 : index
    %194 = vector.load %arg12[%c0_70, %c0_71] : memref<1x32xf32, #tpu.memory_space<vmem>>, vector<1x32xf32>
    %cst_72 = arith.constant dense<0.000000e+00> : vector<8xf32>
    %195 = vector.multi_reduction <add>, %192, %cst_72 [1] : vector<8x32xf32> to vector<8xf32>
    %196 = vector.shape_cast %195 : vector<8xf32> to vector<8x1xf32>
    %cst_73 = arith.constant 3.200000e+01 : f32
    %197 = vector.broadcast %cst_73 : f32 to vector<8x1xf32>
    %198 = arith.divf %196, %197 : vector<8x1xf32>
    %199 = vector.broadcast %198 : vector<8x1xf32> to vector<8x32xf32>
    %200 = arith.subf %192, %199 : vector<8x32xf32>
    %201 = arith.mulf %200, %200 : vector<8x32xf32>
    %cst_74 = arith.constant dense<0.000000e+00> : vector<8xf32>
    %202 = vector.multi_reduction <add>, %201, %cst_74 [1] : vector<8x32xf32> to vector<8xf32>
    %203 = vector.shape_cast %202 : vector<8xf32> to vector<8x1xf32>
    %cst_75 = arith.constant 3.200000e+01 : f32
    %204 = vector.broadcast %cst_75 : f32 to vector<8x1xf32>
    %205 = arith.divf %203, %204 : vector<8x1xf32>
    %cst_76 = arith.constant 9.99999974E-6 : f32
    %206 = vector.broadcast %cst_76 : f32 to vector<8x1xf32>
    %207 = arith.addf %205, %206 : vector<8x1xf32>
    %208 = math.rsqrt %207 : vector<8x1xf32>
    %209 = vector.broadcast %208 : vector<8x1xf32> to vector<8x32xf32>
    %210 = arith.mulf %200, %209 : vector<8x32xf32>
    %211 = vector.broadcast %193 : vector<1x32xf32> to vector<8x32xf32>
    %212 = arith.mulf %210, %211 : vector<8x32xf32>
    %213 = vector.broadcast %194 : vector<1x32xf32> to vector<8x32xf32>
    %214 = arith.addf %212, %213 : vector<8x32xf32>
    %c0_77 = arith.constant 0 : index
    %c0_78 = arith.constant 0 : index
    %215 = vector.load %arg13[%c0_77, %c0_78] : memref<32x64xbf16, #tpu.memory_space<vmem>>, vector<32x64xbf16>
    %216 = arith.truncf %214 : vector<8x32xf32> to vector<8x32xbf16>
    %cst_79 = arith.constant dense<0.000000e+00> : vector<8x64xf32>
    %217 = tpu.matmul %216, %215, %cst_79 {dimension_numbers = #tpu.dot_dimension_numbers<[1], [0], [0], [1], [0, 0, 1, 1], [], []>} : vector<8x32xbf16>, vector<32x64xbf16>, vector<8x64xf32> -> vector<8x64xf32>
    %cst_80 = arith.constant 0.000000e+00 : f32
    %218 = vector.broadcast %cst_80 : f32 to vector<8x64xf32>
    %219 = arith.maximumf %217, %218 : vector<8x64xf32>
    %c0_81 = arith.constant 0 : index
    %c0_82 = arith.constant 0 : index
    %220 = vector.load %arg14[%c0_81, %c0_82] : memref<64x32xbf16, #tpu.memory_space<vmem>>, vector<64x32xbf16>
    %221 = arith.truncf %219 : vector<8x64xf32> to vector<8x64xbf16>
    %cst_83 = arith.constant dense<0.000000e+00> : vector<8x32xf32>
    %222 = tpu.matmul %221, %220, %cst_83 {dimension_numbers = #tpu.dot_dimension_numbers<[1], [0], [0], [1], [0, 0, 1, 1], [], []>} : vector<8x64xbf16>, vector<64x32xbf16>, vector<8x32xf32> -> vector<8x32xf32>
    %cst_84 = arith.constant 0.000000e+00 : f32
    %223 = vector.broadcast %cst_84 : f32 to vector<8x32xf32>
    %224 = arith.maximumf %222, %223 : vector<8x32xf32>
    %225 = arith.addf %192, %224 : vector<8x32xf32>
    %c0_85 = arith.constant 0 : index
    %c0_86 = arith.constant 0 : index
    %c0_87 = arith.constant 0 : index
    %226 = vector.load %arg19[%c0_85, %c0_86, %c0_87] : memref<1x8x32xf32, #tpu.memory_space<vmem>>, vector<1x8x32xf32>
    %227 = vector.shape_cast %226 : vector<1x8x32xf32> to vector<8x32xf32>
    %228 = vector.shape_cast %225 : vector<8x32xf32> to vector<1x8x32xf32>
    tpu.vector_store %arg19[%c0_85, %c0_86, %c0_87], %228 {strides = array<i32>} : memref<1x8x32xf32, #tpu.memory_space<vmem>>, vector<1x8x32xf32>,
    %c0_88 = arith.constant 0 : index
    %c0_89 = arith.constant 0 : index
    %c0_90 = arith.constant 0 : index
    %c0_91 = arith.constant 0 : index
    %229 = vector.load %arg5[%c0_88, %c0_89, %c0_90, %c0_91] : memref<1x8x8x32xf32, #tpu.memory_space<vmem>>, vector<1x8x8x32xf32>
    %230 = vector.shape_cast %229 : vector<1x8x8x32xf32> to vector<8x8x32xf32>
    %c0_92 = arith.constant 0 : index
    %c0_93 = arith.constant 0 : index
    %c0_94 = arith.constant 0 : index
    %231 = vector.load %arg21[%c0_92, %c0_93, %c0_94] : memref<4x8x8xf32, #tpu.memory_space<vmem>>, vector<4x8x8xf32>
    %232 = vector.shape_cast %231 : vector<4x8x8xf32> to vector<4x64xf32>
    %233 = arith.truncf %232 : vector<4x64xf32> to vector<4x64xbf16>
    %c0_95 = arith.constant 0 : index
    %c0_96 = arith.constant 0 : index
    %234 = vector.load %arg10[%c0_95, %c0_96] : memref<4x32xbf16, #tpu.memory_space<vmem>>, vector<4x32xbf16>
    %cst_97 = arith.constant dense<0.000000e+00> : vector<64x32xf32>
    %235 = tpu.matmul %233, %234, %cst_97 {dimension_numbers = #tpu.dot_dimension_numbers<[0], [0], [1], [1], [0, 1, 1, 1], [], []>} : vector<4x64xbf16>, vector<4x32xbf16>, vector<64x32xf32> -> vector<64x32xf32>
    %236 = vector.shape_cast %235 : vector<64x32xf32> to vector<8x8x32xf32>
    %237 = arith.addf %230, %236 : vector<8x8x32xf32>
    %c0_98 = arith.constant 0 : index
    %c0_99 = arith.constant 0 : index
    %238 = vector.load %arg15[%c0_98, %c0_99] : memref<1x32xf32, #tpu.memory_space<vmem>>, vector<1x32xf32>
    %c0_100 = arith.constant 0 : index
    %c0_101 = arith.constant 0 : index
    %239 = vector.load %arg16[%c0_100, %c0_101] : memref<1x32xf32, #tpu.memory_space<vmem>>, vector<1x32xf32>
    %cst_102 = arith.constant dense<0.000000e+00> : vector<8x8xf32>
    %240 = vector.multi_reduction <add>, %237, %cst_102 [2] : vector<8x8x32xf32> to vector<8x8xf32>
    %241 = vector.shape_cast %240 : vector<8x8xf32> to vector<8x8x1xf32>
    %cst_103 = arith.constant 3.200000e+01 : f32
    %242 = vector.broadcast %cst_103 : f32 to vector<8x8x1xf32>
    %243 = arith.divf %241, %242 : vector<8x8x1xf32>
    %244 = vector.broadcast %243 : vector<8x8x1xf32> to vector<8x8x32xf32>
    %245 = arith.subf %237, %244 : vector<8x8x32xf32>
    %246 = arith.mulf %245, %245 : vector<8x8x32xf32>
    %cst_104 = arith.constant dense<0.000000e+00> : vector<8x8xf32>
    %247 = vector.multi_reduction <add>, %246, %cst_104 [2] : vector<8x8x32xf32> to vector<8x8xf32>
    %248 = vector.shape_cast %247 : vector<8x8xf32> to vector<8x8x1xf32>
    %cst_105 = arith.constant 3.200000e+01 : f32
    %249 = vector.broadcast %cst_105 : f32 to vector<8x8x1xf32>
    %250 = arith.divf %248, %249 : vector<8x8x1xf32>
    %cst_106 = arith.constant 9.99999974E-6 : f32
    %251 = vector.broadcast %cst_106 : f32 to vector<8x8x1xf32>
    %252 = arith.addf %250, %251 : vector<8x8x1xf32>
    %253 = math.rsqrt %252 : vector<8x8x1xf32>
    %254 = vector.broadcast %253 : vector<8x8x1xf32> to vector<8x8x32xf32>
    %255 = arith.mulf %245, %254 : vector<8x8x32xf32>
    %256 = vector.shape_cast %238 : vector<1x32xf32> to vector<1x1x32xf32>
    %257 = vector.broadcast %256 : vector<1x1x32xf32> to vector<8x8x32xf32>
    %258 = arith.mulf %255, %257 : vector<8x8x32xf32>
    %259 = vector.shape_cast %239 : vector<1x32xf32> to vector<1x1x32xf32>
    %260 = vector.broadcast %259 : vector<1x1x32xf32> to vector<8x8x32xf32>
    %261 = arith.addf %258, %260 : vector<8x8x32xf32>
    %262 = vector.shape_cast %261 : vector<8x8x32xf32> to vector<64x32xf32>
    %c0_107 = arith.constant 0 : index
    %c0_108 = arith.constant 0 : index
    %263 = vector.load %arg17[%c0_107, %c0_108] : memref<32x64xbf16, #tpu.memory_space<vmem>>, vector<32x64xbf16>
    %264 = arith.truncf %262 : vector<64x32xf32> to vector<64x32xbf16>
    %cst_109 = arith.constant dense<0.000000e+00> : vector<64x64xf32>
    %265 = tpu.matmul %264, %263, %cst_109 {dimension_numbers = #tpu.dot_dimension_numbers<[1], [0], [0], [1], [0, 0, 1, 1], [], []>} : vector<64x32xbf16>, vector<32x64xbf16>, vector<64x64xf32> -> vector<64x64xf32>
    %cst_110 = arith.constant 0.000000e+00 : f32
    %266 = vector.broadcast %cst_110 : f32 to vector<64x64xf32>
    %267 = arith.maximumf %265, %266 : vector<64x64xf32>
    %c0_111 = arith.constant 0 : index
    %c0_112 = arith.constant 0 : index
    %268 = vector.load %arg18[%c0_111, %c0_112] : memref<64x32xbf16, #tpu.memory_space<vmem>>, vector<64x32xbf16>
    %269 = arith.truncf %267 : vector<64x64xf32> to vector<64x64xbf16>
    %cst_113 = arith.constant dense<0.000000e+00> : vector<64x32xf32>
    %270 = tpu.matmul %269, %268, %cst_113 {dimension_numbers = #tpu.dot_dimension_numbers<[1], [0], [0], [1], [0, 0, 1, 1], [], []>} : vector<64x64xbf16>, vector<64x32xbf16>, vector<64x32xf32> -> vector<64x32xf32>
    %cst_114 = arith.constant 0.000000e+00 : f32
    %271 = vector.broadcast %cst_114 : f32 to vector<64x32xf32>
    %272 = arith.maximumf %270, %271 : vector<64x32xf32>
    %273 = vector.shape_cast %272 : vector<64x32xf32> to vector<8x8x32xf32>
    %274 = arith.addf %237, %273 : vector<8x8x32xf32>
    %c0_115 = arith.constant 0 : index
    %c0_116 = arith.constant 0 : index
    %c0_117 = arith.constant 0 : index
    %c0_118 = arith.constant 0 : index
    %275 = vector.load %arg20[%c0_115, %c0_116, %c0_117, %c0_118] : memref<1x8x8x32xf32, #tpu.memory_space<vmem>>, vector<1x8x8x32xf32>
    %276 = vector.shape_cast %275 : vector<1x8x8x32xf32> to vector<8x8x32xf32>
    %277 = vector.shape_cast %274 : vector<8x8x32xf32> to vector<1x8x8x32xf32>
    tpu.vector_store %arg20[%c0_115, %c0_116, %c0_117, %c0_118], %277 {strides = array<i32>} : memref<1x8x8x32xf32, #tpu.memory_space<vmem>>, vector<1x8x8x32xf32>,
    return
  }
  func.func @transform_0(%arg0: i32, %arg1: i32) -> (i32, i32, i32) {
    %c0_i32 = arith.constant 0 : i32
    %c0_i32_0 = arith.constant 0 : i32
    return %arg0, %arg1, %c0_i32 : i32, i32, i32
  }
  func.func @transform_1(%arg0: i32, %arg1: i32) -> (i32, i32, i32) {
    %c0_i32 = arith.constant 0 : i32
    %c0_i32_0 = arith.constant 0 : i32
    return %arg0, %arg1, %c0_i32 : i32, i32, i32
  }
  func.func @transform_2(%arg0: i32, %arg1: i32) -> (i32, i32, i32) {
    %c0_i32 = arith.constant 0 : i32
    %c0_i32_0 = arith.constant 0 : i32
    %c0_i32_1 = arith.constant 0 : i32
    return %arg0, %c0_i32, %c0_i32_0 : i32, i32, i32
  }
  func.func @transform_3(%arg0: i32, %arg1: i32) -> (i32, i32, i32, i32) {
    %c0_i32 = arith.constant 0 : i32
    %c0_i32_0 = arith.constant 0 : i32
    %c0_i32_1 = arith.constant 0 : i32
    return %arg0, %arg1, %c0_i32, %c0_i32_0 : i32, i32, i32, i32
  }
  func.func @transform_4(%arg0: i32, %arg1: i32) -> (i32, i32) {
    %c0_i32 = arith.constant 0 : i32
    %c0_i32_0 = arith.constant 0 : i32
    %c0_i32_1 = arith.constant 0 : i32
    return %c0_i32, %c0_i32_0 : i32, i32
  }
  func.func @transform_5(%arg0: i32, %arg1: i32) -> (i32, i32) {
    %c0_i32 = arith.constant 0 : i32
    %c0_i32_0 = arith.constant 0 : i32
    %c0_i32_1 = arith.constant 0 : i32
    return %c0_i32, %c0_i32_0 : i32, i32
  }
  func.func @transform_6(%arg0: i32, %arg1: i32) -> (i32, i32) {
    %c0_i32 = arith.constant 0 : i32
    %c0_i32_0 = arith.constant 0 : i32
    %c0_i32_1 = arith.constant 0 : i32
    return %c0_i32, %c0_i32_0 : i32, i32
  }
  func.func @transform_7(%arg0: i32, %arg1: i32) -> (i32, i32) {
    %c0_i32 = arith.constant 0 : i32
    %c0_i32_0 = arith.constant 0 : i32
    %c0_i32_1 = arith.constant 0 : i32
    return %c0_i32, %c0_i32_0 : i32, i32
  }
  func.func @transform_8(%arg0: i32, %arg1: i32) -> (i32, i32) {
    %c0_i32 = arith.constant 0 : i32
    %c0_i32_0 = arith.constant 0 : i32
    %c0_i32_1 = arith.constant 0 : i32
    return %c0_i32, %c0_i32_0 : i32, i32
  }
  func.func @transform_9(%arg0: i32, %arg1: i32) -> (i32, i32) {
    %c0_i32 = arith.constant 0 : i32
    %c0_i32_0 = arith.constant 0 : i32
    %c0_i32_1 = arith.constant 0 : i32
    return %c0_i32, %c0_i32_0 : i32, i32
  }
  func.func @transform_10(%arg0: i32, %arg1: i32) -> (i32, i32) {
    %c0_i32 = arith.constant 0 : i32
    %c0_i32_0 = arith.constant 0 : i32
    %c0_i32_1 = arith.constant 0 : i32
    return %c0_i32, %c0_i32_0 : i32, i32
  }
  func.func @transform_11(%arg0: i32, %arg1: i32) -> (i32, i32) {
    %c0_i32 = arith.constant 0 : i32
    %c0_i32_0 = arith.constant 0 : i32
    %c0_i32_1 = arith.constant 0 : i32
    return %c0_i32, %c0_i32_0 : i32, i32
  }
  func.func @transform_12(%arg0: i32, %arg1: i32) -> (i32, i32) {
    %c0_i32 = arith.constant 0 : i32
    %c0_i32_0 = arith.constant 0 : i32
    %c0_i32_1 = arith.constant 0 : i32
    return %c0_i32, %c0_i32_0 : i32, i32
  }
  func.func @transform_13(%arg0: i32, %arg1: i32) -> (i32, i32) {
    %c0_i32 = arith.constant 0 : i32
    %c0_i32_0 = arith.constant 0 : i32
    %c0_i32_1 = arith.constant 0 : i32
    return %c0_i32, %c0_i32_0 : i32, i32
  }
  func.func @transform_14(%arg0: i32, %arg1: i32) -> (i32, i32) {
    %c0_i32 = arith.constant 0 : i32
    %c0_i32_0 = arith.constant 0 : i32
    %c0_i32_1 = arith.constant 0 : i32
    return %c0_i32, %c0_i32_0 : i32, i32
  }
  func.func @transform_15(%arg0: i32, %arg1: i32) -> (i32, i32) {
    %c0_i32 = arith.constant 0 : i32
    %c0_i32_0 = arith.constant 0 : i32
    %c0_i32_1 = arith.constant 0 : i32
    return %c0_i32, %c0_i32_0 : i32, i32
  }
  func.func @transform_16(%arg0: i32, %arg1: i32) -> (i32, i32) {
    %c0_i32 = arith.constant 0 : i32
    %c0_i32_0 = arith.constant 0 : i32
    %c0_i32_1 = arith.constant 0 : i32
    return %c0_i32, %c0_i32_0 : i32, i32
  }
  func.func @transform_17(%arg0: i32, %arg1: i32) -> (i32, i32, i32) {
    %c0_i32 = arith.constant 0 : i32
    %c0_i32_0 = arith.constant 0 : i32
    return %arg0, %arg1, %c0_i32 : i32, i32, i32
  }
  func.func @transform_18(%arg0: i32, %arg1: i32) -> (i32, i32, i32, i32) {
    %c0_i32 = arith.constant 0 : i32
    %c0_i32_0 = arith.constant 0 : i32
    %c0_i32_1 = arith.constant 0 : i32
    return %arg0, %arg1, %c0_i32, %c0_i32_0 : i32, i32, i32, i32
  }
}

</mosaic_0001>

<llo_original>
// kernel: tpu_custom_call.1
$region0: #{tpu_custom_call.1}
  #allocation0 [shape = 'u32[]', space=smem, size = 0x4, offset = 0x4, fixed_abs, tag = 'smem constant byte address 0x4 - core index']
  #allocation1 [shape = 'u32[144,128]{1,0:T(1,128)}', space=vmem, size = 0x12000, scoped, tag = 'internal scratch']
  #allocation2 [shape = 'f32[4,8,8]{2,1,0:T(8,128)}', space=vmem, size = 0x4000, scoped, tag = 'scratch operand']
  %s0 = inlined_call_operand.vmem [shape: f32[2,8,32], index: 0, kind: input, shape index: {}]
  %s1 = inlined_call_operand.vmem [shape: f32[2,8,32], index: 1, kind: input, shape index: {}]
  %s2 = inlined_call_operand.vmem [shape: f32[2,8,64], index: 2, kind: input, shape index: {}]
  %s3 = inlined_call_operand.hbm [shape: f32[2,8,8,32], index: 3, kind: input, shape index: {}]
  %s4 = inlined_call_operand.hbm [shape: f32[1,32], index: 4, kind: input, shape index: {}]
  %s5 = inlined_call_operand.hbm [shape: f32[1,32], index: 5, kind: input, shape index: {}]
  %s6 = inlined_call_operand.hbm [shape: bf16[8,32], index: 6, kind: input, shape index: {}]
  %s7 = inlined_call_operand.vmem [shape: bf16[32,32], index: 7, kind: input, shape index: {}]
  %s8 = inlined_call_operand.vmem [shape: bf16[4,32], index: 8, kind: input, shape index: {}]
  %s9 = inlined_call_operand.hbm [shape: f32[1,32], index: 9, kind: input, shape index: {}]
  %s10 = inlined_call_operand.vmem [shape: f32[1,32], index: 10, kind: input, shape index: {}]
  %s11 = inlined_call_operand.vmem [shape: bf16[32,64], index: 11, kind: input, shape index: {}]
  %s12 = inlined_call_operand.vmem [shape: bf16[64,32], index: 12, kind: input, shape index: {}]
  %s13 = inlined_call_operand.vmem [shape: f32[1,32], index: 13, kind: input, shape index: {}]
  %s14 = inlined_call_operand.vmem [shape: f32[1,32], index: 14, kind: input, shape index: {}]
  %s15 = inlined_call_operand.vmem [shape: bf16[32,64], index: 15, kind: input, shape index: {}]
  %s16 = inlined_call_operand.vmem [shape: bf16[64,32], index: 16, kind: input, shape index: {}]
  %s17 = inlined_call_operand.hbm [shape: f32[2,8,32], index: 17, kind: output, shape index: {0}]
  %s18 = inlined_call_operand.hbm [shape: f32[2,8,8,32], index: 18, kind: output, shape index: {1}]
  %19 = xla_tuple %s17, %s18
  %s20 = sld [smem:[#allocation0]]
  $region129: #{tpu_custom_call.1} parent=0
    _
  %s22 = ssub.s32 1, %s20
  %s23 = scalar_select 0, %s22, %s20
  $region1: #{tpu_custom_call.1} parent=0
    #allocation3 [shape = 'u8[65536]{0}', space=vmem, size = 0x10000, scoped, tag = 'input window, operand 3']
    #allocation4 [shape = 's32[2]{0}', space=sflag, size = 0x8, scoped, tag = 'scoped memory for tpu_custom_call.1']
    #allocation5 [shape = 's32[2]{0}', space=sflag, size = 0x8, scoped, tag = 'scoped memory for tpu_custom_call.1']
    #allocation6 [shape = 'u8[512]{0}', space=vmem, size = 0x400, scoped, tag = 'input window, operand 4, single buffered']
    #allocation7 [shape = 's32[1]{0}', space=sflag, size = 0x4, scoped, tag = 'scoped memory for tpu_custom_call.1']
    #allocation8 [shape = 'u8[512]{0}', space=vmem, size = 0x400, scoped, tag = 'input window, operand 5, single buffered']
    #allocation9 [shape = 'u8[2048]{0}', space=vmem, size = 0x800, scoped, tag = 'input window, operand 6, single buffered']
    #allocation10 [shape = 's32[1]{0}', space=sflag, size = 0x4, scoped, tag = 'scoped memory for tpu_custom_call.1']
    #allocation11 [shape = 'u8[512]{0}', space=vmem, size = 0x400, scoped, tag = 'input window, operand 9, single buffered']
    #allocation12 [shape = 'u8[8192]{0}', space=vmem, size = 0x2000, scoped, tag = 'output window, operand 0']
    #allocation13 [shape = 'u8[65536]{0}', space=vmem, size = 0x10000, scoped, tag = 'output window, operand 1']
    #allocation14 [shape = 's32[2]{0}', space=sflag, size = 0x8, scoped, tag = 'scoped memory for tpu_custom_call.1']
    %24 = vsyncpa [#allocation4], 0
    %s25 = scalar_lea.sflag [#allocation4], 1
    %26 = vsyncpa %s25, 0
    %27 = vsyncpa [#allocation7], 0
    %28 = vsyncpa [#allocation10], 0
    %29 = vsyncpa [#allocation5], 0
    %s30 = scalar_lea.sflag [#allocation5], 1
    %31 = vsyncpa %s30, 0
    %32 = vsyncpa [#allocation14], 0
    %s33 = scalar_lea.sflag [#allocation14], 1
    %34 = vsyncpa %s33, 0
    loop: start=0, step=1, limit=4
    $region2: #{tpu_custom_call.1} parent=1 // loop_pre_header
      _
    $region3: #{tpu_custom_call.1} parent=1 // loop_header
      %s36 = sphi 0, %s40
      %p37 = scmp.ge.s32.totalorder %s36, 4
      %s43 = sphi 0, %s55
      %s44 = sphi 0, %s51
      %s45 = sphi 0, %s43
      %s46 = sphi 0, %s44
      %s47 = sphi 0, %s45
      %s48 = sphi 0, %s46
      %s60 = sphi 0, %s62
      %s63 = sphi 0, %s60
      %s64 = sphi 0, %s63
      %s80 = sphi 0, %s64
      %s88 = sphi 0, %s90
      %s91 = sphi 0, %s88
      %s92 = sphi 0, %s91
      %s108 = sphi 0, %s92
      %s114 = sphi 0, %s116
      %s117 = sphi 0, %s114
      %s118 = sphi 0, %s117
      %s134 = sphi 0, %s118
      %s142 = sphi 0, %s144
      %s145 = sphi 0, %s142
      %s146 = sphi 0, %s145
      %s162 = sphi 0, %s146
      %s166 = sphi 0, %s166
      %s168 = sphi 0, %s166
      %s169 = sphi 0, %s168
      %s183 = sphi 0, %s169
      %s187 = sphi 0, %s187
      %s189 = sphi 0, %s187
      %s190 = sphi 0, %s189
      %s204 = sphi 0, %s190
      %s208 = sphi 0, %s208
      %s210 = sphi 0, %s208
      %s211 = sphi 0, %s210
      %s225 = sphi 0, %s211
      %s229 = sphi 0, %s229
      %s231 = sphi 0, %s229
      %s232 = sphi 0, %s231
      %s246 = sphi 0, %s232
      %s250 = sphi 0, %s250
      %s252 = sphi 0, %s250
      %s253 = sphi 0, %s252
      %s267 = sphi 0, %s253
      %s271 = sphi 0, %s271
      %s273 = sphi 0, %s271
      %s274 = sphi 0, %s273
      %s288 = sphi 0, %s274
      %s292 = sphi 0, %s292
      %s294 = sphi 0, %s292
      %s295 = sphi 0, %s294
      %s309 = sphi 0, %s295
      %s313 = sphi 0, %s313
      %s315 = sphi 0, %s313
      %s316 = sphi 0, %s315
      %s330 = sphi 0, %s316
      %s334 = sphi 0, %s334
      %s336 = sphi 0, %s334
      %s337 = sphi 0, %s336
      %s351 = sphi 0, %s337
      %s355 = sphi 0, %s355
      %s357 = sphi 0, %s355
      %s358 = sphi 0, %s357
      %s372 = sphi 0, %s358
      %s376 = sphi 0, %s376
      %s378 = sphi 0, %s376
      %s379 = sphi 0, %s378
      %s393 = sphi 0, %s379
      %s397 = sphi 0, %s397
      %s399 = sphi 0, %s397
      %s400 = sphi 0, %s399
      %s414 = sphi 0, %s400
      %s418 = sphi 0, %s418
      %s420 = sphi 0, %s418
      %s421 = sphi 0, %s420
      %s435 = sphi 0, %s421
      %s443 = sphi 0, %s445
      %s446 = sphi 0, %s443
      %s447 = sphi 0, %s446
      %s463 = sphi 0, %s447
      %s471 = sphi 0, %s473
      %s474 = sphi 0, %s471
      %s475 = sphi 0, %s474
      %s491 = sphi 0, %s475
    $region4: #{tpu_custom_call.1} parent=1 // loop_header_branch
      %39 = sbr.rel (%p37) target = $region8
    $region5: #{tpu_custom_call.1} parent=1 // loop_body
      %s41 = ssub.s32 %s36, 1
      %s42 = ssub.s32 %s36, 2
      %s49 = sadd.s32 1, %s44
      %p50 = scmp.ge.s32.totalorder %s49, 1
      %s51 = scalar_select %p50, 0, %s49
      %s52 = sadd.s32 1, %s43
      %s53 = scalar_select %p50, %s52, %s43
      %p54 = scmp.ge.s32.totalorder %s53, 2
      %s55 = scalar_select %p54, 0, %s53
      %s56 = ssub.s32 %s43, %s55
      %s57 = ssub.s32 %s44, %s51
      %s58 = sor.u32 %s56, %s57
      %p59 = scmp.eq.s32.totalorder %s58, 0
      %s61 = sadd.s32 %s60, 1
      %s62 = scalar_select %p59, %s60, %s61
      %p65 = pneg %p59
      %p66 = scmp.eq.s32.totalorder %s36, 1
      %p67 = por %p65, %p66
      %p68 = scmp.ne.s32.totalorder %s60, %s63
      %p69 = scmp.eq.s32.totalorder %s36, 0
      %p70 = por %p68, %p69
      %p71 = scmp.ne.s32.totalorder %s60, %s63
      %p72 = scmp.eq.s32.totalorder %s41, 1
      %p73 = por %p71, %p72
      %p74 = scmp.ne.s32.totalorder %s63, %s64
      %p75 = scmp.eq.s32.totalorder %s41, 0
      %p76 = por %p74, %p75
      %p77 = scmp.ne.s32.totalorder %s63, %s64
      %p78 = scmp.eq.s32.totalorder %s42, 1
      %p79 = por %p77, %p78
      %p81 = scmp.ne.s32.totalorder %s64, %s80
      %p82 = scmp.eq.s32.totalorder %s42, 0
      %p83 = por %p81, %p82
      %s84 = ssub.s32 %s43, %s55
      %s85 = ssub.s32 %s44, %s51
      %s86 = sor.u32 %s84, %s85
      %p87 = scmp.eq.s32.totalorder %s86, 0
      %s89 = sadd.s32 %s88, 1
      %s90 = scalar_select %p87, %s88, %s89
      %p93 = pneg %p87
      %p94 = scmp.eq.s32.totalorder %s36, 1
      %p95 = por %p93, %p94
      %p96 = scmp.ne.s32.totalorder %s88, %s91
      %p97 = scmp.eq.s32.totalorder %s36, 0
      %p98 = por %p96, %p97
      %p99 = scmp.ne.s32.totalorder %s88, %s91
      %p100 = scmp.eq.s32.totalorder %s41, 1
      %p101 = por %p99, %p100
      %p102 = scmp.ne.s32.totalorder %s91, %s92
      %p103 = scmp.eq.s32.totalorder %s41, 0
      %p104 = por %p102, %p103
      %p105 = scmp.ne.s32.totalorder %s91, %s92
      %p106 = scmp.eq.s32.totalorder %s42, 1
      %p107 = por %p105, %p106
      %p109 = scmp.ne.s32.totalorder %s92, %s108
      %p110 = scmp.eq.s32.totalorder %s42, 0
      %p111 = por %p109, %p110
      %s112 = ssub.s32 %s43, %s55
      %p113 = scmp.eq.s32.totalorder %s112, 0
      %s115 = sadd.s32 %s114, 1
      %s116 = scalar_select %p113, %s114, %s115
      %p119 = pneg %p113
      %p120 = scmp.eq.s32.totalorder %s36, 1
      %p121 = por %p119, %p120
      %p122 = scmp.ne.s32.totalorder %s114, %s117
      %p123 = scmp.eq.s32.totalorder %s36, 0
      %p124 = por %p122, %p123
      %p125 = scmp.ne.s32.totalorder %s114, %s117
      %p126 = scmp.eq.s32.totalorder %s41, 1
      %p127 = por %p125, %p126
      %p128 = scmp.ne.s32.totalorder %s117, %s118
      %p129 = scmp.eq.s32.totalorder %s41, 0
      %p130 = por %p128, %p129
      %p131 = scmp.ne.s32.totalorder %s117, %s118
      %p132 = scmp.eq.s32.totalorder %s42, 1
      %p133 = por %p131, %p132
      %p135 = scmp.ne.s32.totalorder %s118, %s134
      %p136 = scmp.eq.s32.totalorder %s42, 0
      %p137 = por %p135, %p136
      %s138 = ssub.s32 %s43, %s55
      %s139 = ssub.s32 %s44, %s51
      %s140 = sor.u32 %s138, %s139
      %p141 = scmp.eq.s32.totalorder %s140, 0
      %s143 = sadd.s32 %s142, 1
      %s144 = scalar_select %p141, %s142, %s143
      %p147 = pneg %p141
      %p148 = scmp.eq.s32.totalorder %s36, 1
      %p149 = por %p147, %p148
      %p150 = scmp.ne.s32.totalorder %s142, %s145
      %p151 = scmp.eq.s32.totalorder %s36, 0
      %p152 = por %p150, %p151
      %p153 = scmp.ne.s32.totalorder %s142, %s145
      %p154 = scmp.eq.s32.totalorder %s41, 1
      %p155 = por %p153, %p154
      %p156 = scmp.ne.s32.totalorder %s145, %s146
      %p157 = scmp.eq.s32.totalorder %s41, 0
      %p158 = por %p156, %p157
      %p159 = scmp.ne.s32.totalorder %s145, %s146
      %p160 = scmp.eq.s32.totalorder %s42, 1
      %p161 = por %p159, %p160
      %p163 = scmp.ne.s32.totalorder %s146, %s162
      %p164 = scmp.eq.s32.totalorder %s42, 0
      %p165 = por %p163, %p164
      %s167 = sadd.s32 %s166, 1
      %p170 = scmp.eq.s32.totalorder %s36, 1
      %p171 = scmp.ne.s32.totalorder %s166, %s168
      %p172 = scmp.eq.s32.totalorder %s36, 0
      %p173 = por %p171, %p172
      %p174 = scmp.ne.s32.totalorder %s166, %s168
      %p175 = scmp.eq.s32.totalorder %s41, 1
      %p176 = por %p174, %p175
      %p177 = scmp.ne.s32.totalorder %s168, %s169
      %p178 = scmp.eq.s32.totalorder %s41, 0
      %p179 = por %p177, %p178
      %p180 = scmp.ne.s32.totalorder %s168, %s169
      %p181 = scmp.eq.s32.totalorder %s42, 1
      %p182 = por %p180, %p181
      %p184 = scmp.ne.s32.totalorder %s169, %s183
      %p185 = scmp.eq.s32.totalorder %s42, 0
      %p186 = por %p184, %p185
      %s188 = sadd.s32 %s187, 1
      %p191 = scmp.eq.s32.totalorder %s36, 1
      %p192 = scmp.ne.s32.totalorder %s187, %s189
      %p193 = scmp.eq.s32.totalorder %s36, 0
      %p194 = por %p192, %p193
      %p195 = scmp.ne.s32.totalorder %s187, %s189
      %p196 = scmp.eq.s32.totalorder %s41, 1
      %p197 = por %p195, %p196
      %p198 = scmp.ne.s32.totalorder %s189, %s190
      %p199 = scmp.eq.s32.totalorder %s41, 0
      %p200 = por %p198, %p199
      %p201 = scmp.ne.s32.totalorder %s189, %s190
      %p202 = scmp.eq.s32.totalorder %s42, 1
      %p203 = por %p201, %p202
      %p205 = scmp.ne.s32.totalorder %s190, %s204
      %p206 = scmp.eq.s32.totalorder %s42, 0
      %p207 = por %p205, %p206
      %s209 = sadd.s32 %s208, 1
      %p212 = scmp.eq.s32.totalorder %s36, 1
      %p213 = scmp.ne.s32.totalorder %s208, %s210
      %p214 = scmp.eq.s32.totalorder %s36, 0
      %p215 = por %p213, %p214
      %p216 = scmp.ne.s32.totalorder %s208, %s210
      %p217 = scmp.eq.s32.totalorder %s41, 1
      %p218 = por %p216, %p217
      %p219 = scmp.ne.s32.totalorder %s210, %s211
      %p220 = scmp.eq.s32.totalorder %s41, 0
      %p221 = por %p219, %p220
      %p222 = scmp.ne.s32.totalorder %s210, %s211
      %p223 = scmp.eq.s32.totalorder %s42, 1
      %p224 = por %p222, %p223
      %p226 = scmp.ne.s32.totalorder %s211, %s225
      %p227 = scmp.eq.s32.totalorder %s42, 0
      %p228 = por %p226, %p227
      %s230 = sadd.s32 %s229, 1
      %p233 = scmp.eq.s32.totalorder %s36, 1
      %p234 = scmp.ne.s32.totalorder %s229, %s231
      %p235 = scmp.eq.s32.totalorder %s36, 0
      %p236 = por %p234, %p235
      %p237 = scmp.ne.s32.totalorder %s229, %s231
      %p238 = scmp.eq.s32.totalorder %s41, 1
      %p239 = por %p237, %p238
      %p240 = scmp.ne.s32.totalorder %s231, %s232
      %p241 = scmp.eq.s32.totalorder %s41, 0
      %p242 = por %p240, %p241
      %p243 = scmp.ne.s32.totalorder %s231, %s232
      %p244 = scmp.eq.s32.totalorder %s42, 1
      %p245 = por %p243, %p244
      %p247 = scmp.ne.s32.totalorder %s232, %s246
      %p248 = scmp.eq.s32.totalorder %s42, 0
      %p249 = por %p247, %p248
      %s251 = sadd.s32 %s250, 1
      %p254 = scmp.eq.s32.totalorder %s36, 1
      %p255 = scmp.ne.s32.totalorder %s250, %s252
      %p256 = scmp.eq.s32.totalorder %s36, 0
      %p257 = por %p255, %p256
      %p258 = scmp.ne.s32.totalorder %s250, %s252
      %p259 = scmp.eq.s32.totalorder %s41, 1
      %p260 = por %p258, %p259
      %p261 = scmp.ne.s32.totalorder %s252, %s253
      %p262 = scmp.eq.s32.totalorder %s41, 0
      %p263 = por %p261, %p262
      %p264 = scmp.ne.s32.totalorder %s252, %s253
      %p265 = scmp.eq.s32.totalorder %s42, 1
      %p266 = por %p264, %p265
      %p268 = scmp.ne.s32.totalorder %s253, %s267
      %p269 = scmp.eq.s32.totalorder %s42, 0
      %p270 = por %p268, %p269
      %s272 = sadd.s32 %s271, 1
      %p275 = scmp.eq.s32.totalorder %s36, 1
      %p276 = scmp.ne.s32.totalorder %s271, %s273
      %p277 = scmp.eq.s32.totalorder %s36, 0
      %p278 = por %p276, %p277
      %p279 = scmp.ne.s32.totalorder %s271, %s273
      %p280 = scmp.eq.s32.totalorder %s41, 1
      %p281 = por %p279, %p280
      %p282 = scmp.ne.s32.totalorder %s273, %s274
      %p283 = scmp.eq.s32.totalorder %s41, 0
      %p284 = por %p282, %p283
      %p285 = scmp.ne.s32.totalorder %s273, %s274
      %p286 = scmp.eq.s32.totalorder %s42, 1
      %p287 = por %p285, %p286
      %p289 = scmp.ne.s32.totalorder %s274, %s288
      %p290 = scmp.eq.s32.totalorder %s42, 0
      %p291 = por %p289, %p290
      %s293 = sadd.s32 %s292, 1
      %p296 = scmp.eq.s32.totalorder %s36, 1
      %p297 = scmp.ne.s32.totalorder %s292, %s294
      %p298 = scmp.eq.s32.totalorder %s36, 0
      %p299 = por %p297, %p298
      %p300 = scmp.ne.s32.totalorder %s292, %s294
      %p301 = scmp.eq.s32.totalorder %s41, 1
      %p302 = por %p300, %p301
      %p303 = scmp.ne.s32.totalorder %s294, %s295
      %p304 = scmp.eq.s32.totalorder %s41, 0
      %p305 = por %p303, %p304
      %p306 = scmp.ne.s32.totalorder %s294, %s295
      %p307 = scmp.eq.s32.totalorder %s42, 1
      %p308 = por %p306, %p307
      %p310 = scmp.ne.s32.totalorder %s295, %s309
      %p311 = scmp.eq.s32.totalorder %s42, 0
      %p312 = por %p310, %p311
      %s314 = sadd.s32 %s313, 1
      %p317 = scmp.eq.s32.totalorder %s36, 1
      %p318 = scmp.ne.s32.totalorder %s313, %s315
      %p319 = scmp.eq.s32.totalorder %s36, 0
      %p320 = por %p318, %p319
      %p321 = scmp.ne.s32.totalorder %s313, %s315
      %p322 = scmp.eq.s32.totalorder %s41, 1
      %p323 = por %p321, %p322
      %p324 = scmp.ne.s32.totalorder %s315, %s316
      %p325 = scmp.eq.s32.totalorder %s41, 0
      %p326 = por %p324, %p325
      %p327 = scmp.ne.s32.totalorder %s315, %s316
      %p328 = scmp.eq.s32.totalorder %s42, 1
      %p329 = por %p327, %p328
      %p331 = scmp.ne.s32.totalorder %s316, %s330
      %p332 = scmp.eq.s32.totalorder %s42, 0
      %p333 = por %p331, %p332
      %s335 = sadd.s32 %s334, 1
      %p338 = scmp.eq.s32.totalorder %s36, 1
      %p339 = scmp.ne.s32.totalorder %s334, %s336
      %p340 = scmp.eq.s32.totalorder %s36, 0
      %p341 = por %p339, %p340
      %p342 = scmp.ne.s32.totalorder %s334, %s336
      %p343 = scmp.eq.s32.totalorder %s41, 1
      %p344 = por %p342, %p343
      %p345 = scmp.ne.s32.totalorder %s336, %s337
      %p346 = scmp.eq.s32.totalorder %s41, 0
      %p347 = por %p345, %p346
      %p348 = scmp.ne.s32.totalorder %s336, %s337
      %p349 = scmp.eq.s32.totalorder %s42, 1
      %p350 = por %p348, %p349
      %p352 = scmp.ne.s32.totalorder %s337, %s351
      %p353 = scmp.eq.s32.totalorder %s42, 0
      %p354 = por %p352, %p353
      %s356 = sadd.s32 %s355, 1
      %p359 = scmp.eq.s32.totalorder %s36, 1
      %p360 = scmp.ne.s32.totalorder %s355, %s357
      %p361 = scmp.eq.s32.totalorder %s36, 0
      %p362 = por %p360, %p361
      %p363 = scmp.ne.s32.totalorder %s355, %s357
      %p364 = scmp.eq.s32.totalorder %s41, 1
      %p365 = por %p363, %p364
      %p366 = scmp.ne.s32.totalorder %s357, %s358
      %p367 = scmp.eq.s32.totalorder %s41, 0
      %p368 = por %p366, %p367
      %p369 = scmp.ne.s32.totalorder %s357, %s358
      %p370 = scmp.eq.s32.totalorder %s42, 1
      %p371 = por %p369, %p370
      %p373 = scmp.ne.s32.totalorder %s358, %s372
      %p374 = scmp.eq.s32.totalorder %s42, 0
      %p375 = por %p373, %p374
      %s377 = sadd.s32 %s376, 1
      %p380 = scmp.eq.s32.totalorder %s36, 1
      %p381 = scmp.ne.s32.totalorder %s376, %s378
      %p382 = scmp.eq.s32.totalorder %s36, 0
      %p383 = por %p381, %p382
      %p384 = scmp.ne.s32.totalorder %s376, %s378
      %p385 = scmp.eq.s32.totalorder %s41, 1
      %p386 = por %p384, %p385
      %p387 = scmp.ne.s32.totalorder %s378, %s379
      %p388 = scmp.eq.s32.totalorder %s41, 0
      %p389 = por %p387, %p388
      %p390 = scmp.ne.s32.totalorder %s378, %s379
      %p391 = scmp.eq.s32.totalorder %s42, 1
      %p392 = por %p390, %p391
      %p394 = scmp.ne.s32.totalorder %s379, %s393
      %p395 = scmp.eq.s32.totalorder %s42, 0
      %p396 = por %p394, %p395
      %s398 = sadd.s32 %s397, 1
      %p401 = scmp.eq.s32.totalorder %s36, 1
      %p402 = scmp.ne.s32.totalorder %s397, %s399
      %p403 = scmp.eq.s32.totalorder %s36, 0
      %p404 = por %p402, %p403
      %p405 = scmp.ne.s32.totalorder %s397, %s399
      %p406 = scmp.eq.s32.totalorder %s41, 1
      %p407 = por %p405, %p406
      %p408 = scmp.ne.s32.totalorder %s399, %s400
      %p409 = scmp.eq.s32.totalorder %s41, 0
      %p410 = por %p408, %p409
      %p411 = scmp.ne.s32.totalorder %s399, %s400
      %p412 = scmp.eq.s32.totalorder %s42, 1
      %p413 = por %p411, %p412
      %p415 = scmp.ne.s32.totalorder %s400, %s414
      %p416 = scmp.eq.s32.totalorder %s42, 0
      %p417 = por %p415, %p416
      %s419 = sadd.s32 %s418, 1
      %p422 = scmp.eq.s32.totalorder %s36, 1
      %p423 = scmp.ne.s32.totalorder %s418, %s420
      %p424 = scmp.eq.s32.totalorder %s36, 0
      %p425 = por %p423, %p424
      %p426 = scmp.ne.s32.totalorder %s418, %s420
      %p427 = scmp.eq.s32.totalorder %s41, 1
      %p428 = por %p426, %p427
      %p429 = scmp.ne.s32.totalorder %s420, %s421
      %p430 = scmp.eq.s32.totalorder %s41, 0
      %p431 = por %p429, %p430
      %p432 = scmp.ne.s32.totalorder %s420, %s421
      %p433 = scmp.eq.s32.totalorder %s42, 1
      %p434 = por %p432, %p433
      %p436 = scmp.ne.s32.totalorder %s421, %s435
      %p437 = scmp.eq.s32.totalorder %s42, 0
      %p438 = por %p436, %p437
      %s439 = ssub.s32 %s43, %s55
      %s440 = ssub.s32 %s44, %s51
      %s441 = sor.u32 %s439, %s440
      %p442 = scmp.eq.s32.totalorder %s441, 0
      %s444 = sadd.s32 %s443, 1
      %s445 = scalar_select %p442, %s443, %s444
      %p448 = pneg %p442
      %p449 = scmp.eq.s32.totalorder %s36, 1
      %p450 = por %p448, %p449
      %p451 = scmp.ne.s32.totalorder %s443, %s446
      %p452 = scmp.eq.s32.totalorder %s36, 0
      %p453 = por %p451, %p452
      %p454 = scmp.ne.s32.totalorder %s443, %s446
      %p455 = scmp.eq.s32.totalorder %s41, 1
      %p456 = por %p454, %p455
      %p457 = scmp.ne.s32.totalorder %s446, %s447
      %p458 = scmp.eq.s32.totalorder %s41, 0
      %p459 = por %p457, %p458
      %p460 = scmp.ne.s32.totalorder %s446, %s447
      %p461 = scmp.eq.s32.totalorder %s42, 1
      %p462 = por %p460, %p461
      %p464 = scmp.ne.s32.totalorder %s447, %s463
      %p465 = scmp.eq.s32.totalorder %s42, 0
      %p466 = por %p464, %p465
      %s467 = ssub.s32 %s43, %s55
      %s468 = ssub.s32 %s44, %s51
      %s469 = sor.u32 %s467, %s468
      %p470 = scmp.eq.s32.totalorder %s469, 0
      %s472 = sadd.s32 %s471, 1
      %s473 = scalar_select %p470, %s471, %s472
      %p476 = pneg %p470
      %p477 = scmp.eq.s32.totalorder %s36, 1
      %p478 = por %p476, %p477
      %p479 = scmp.ne.s32.totalorder %s471, %s474
      %p480 = scmp.eq.s32.totalorder %s36, 0
      %p481 = por %p479, %p480
      %p482 = scmp.ne.s32.totalorder %s471, %s474
      %p483 = scmp.eq.s32.totalorder %s41, 1
      %p484 = por %p482, %p483
      %p485 = scmp.ne.s32.totalorder %s474, %s475
      %p486 = scmp.eq.s32.totalorder %s41, 0
      %p487 = por %p485, %p486
      %p488 = scmp.ne.s32.totalorder %s474, %s475
      %p489 = scmp.eq.s32.totalorder %s42, 1
      %p490 = por %p488, %p489
      %p492 = scmp.ne.s32.totalorder %s475, %s491
      %p493 = scmp.eq.s32.totalorder %s42, 0
      %p494 = por %p492, %p493
      %p495 = scmp.le.s32.totalorder 1, %s36
      %p496 = scmp.lt.s32.totalorder %s36, 3
      %p497 = pnand %p495, %p496
      %p498 = pneg %p497
      // Predicated region
      $region9: #{tpu_custom_call.1} parent=5 // pred_check
        _
      $region10: #{tpu_custom_call.1} parent=5 // pred_check_branch
        %500 = sbr.rel (%p497) target = $region12
      $region11: #{tpu_custom_call.1} parent=5 // pred_region
        %s501 = ssub.s32 %s36, 1
        // Predicated region
        $region13: #{tpu_custom_call.1} parent=11 // pred_check
          %p502 = pneg %p179
        $region14: #{tpu_custom_call.1} parent=11 // pred_check_branch
          %504 = sbr.rel (%p502) target = $region16
        $region15: #{tpu_custom_call.1} parent=11 // pred_region
          %s506 = ssub.s32 16, 16
          %507 = vsyncadd [#allocation7], %s506
          %s509 = sshll.u32 [#allocation6], 4
          %s510 = int_to_ptr.vmem [resolvable:$true] %s509
          %512 = dma.hbm_to_vmem [thread:$0]  %s4, 16, %s510, [#allocation7]
        $region16: #{tpu_custom_call.1} parent=11 // pred_fallthru
          _
        // Predicated region
        $region17: #{tpu_custom_call.1} parent=11 // pred_check
          %p513 = pneg %p200
        $region18: #{tpu_custom_call.1} parent=11 // pred_check_branch
          %515 = sbr.rel (%p513) target = $region20
        $region19: #{tpu_custom_call.1} parent=11 // pred_region
          %s517 = ssub.s32 16, 16
          %518 = vsyncadd [#allocation7], %s517
          %s520 = sshll.u32 [#allocation8], 4
          %s521 = int_to_ptr.vmem [resolvable:$true] %s520
          %523 = dma.hbm_to_vmem [thread:$0]  %s5, 16, %s521, [#allocation7]
        $region20: #{tpu_custom_call.1} parent=11 // pred_fallthru
          _
        // Predicated region
        $region21: #{tpu_custom_call.1} parent=11 // pred_check
          %p524 = pneg %p221
        $region22: #{tpu_custom_call.1} parent=11 // pred_check_branch
          %526 = sbr.rel (%p524) target = $region24
        $region23: #{tpu_custom_call.1} parent=11 // pred_region
          %s528 = ssub.s32 64, 64
          %529 = vsyncadd [#allocation10], %s528
          %s531 = sshll.u32 [#allocation9], 4
          %s532 = int_to_ptr.vmem [resolvable:$true] %s531
          %534 = dma.hbm_to_vmem [thread:$0]  %s6, 64, %s532, [#allocation10]
        $region24: #{tpu_custom_call.1} parent=11 // pred_fallthru
          _
        // Predicated region
        $region25: #{tpu_custom_call.1} parent=11 // pred_check
          %p535 = pneg %p242
        $region26: #{tpu_custom_call.1} parent=11 // pred_check_branch
          %537 = sbr.rel (%p535) target = $region28
        $region27: #{tpu_custom_call.1} parent=11 // pred_region
          _
        $region28: #{tpu_custom_call.1} parent=11 // pred_fallthru
          _
        // Predicated region
        $region29: #{tpu_custom_call.1} parent=11 // pred_check
          %p538 = pneg %p263
        $region30: #{tpu_custom_call.1} parent=11 // pred_check_branch
          %540 = sbr.rel (%p538) target = $region32
        $region31: #{tpu_custom_call.1} parent=11 // pred_region
          _
        $region32: #{tpu_custom_call.1} parent=11 // pred_fallthru
          _
        // Predicated region
        $region33: #{tpu_custom_call.1} parent=11 // pred_check
          %p541 = pneg %p284
        $region34: #{tpu_custom_call.1} parent=11 // pred_check_branch
          %543 = sbr.rel (%p541) target = $region36
        $region35: #{tpu_custom_call.1} parent=11 // pred_region
          %s545 = ssub.s32 16, 16
          %546 = vsyncadd [#allocation10], %s545
          %s548 = sshll.u32 [#allocation11], 4
          %s549 = int_to_ptr.vmem [resolvable:$true] %s548
          %551 = dma.hbm_to_vmem [thread:$0]  %s9, 16, %s549, [#allocation10]
        $region36: #{tpu_custom_call.1} parent=11 // pred_fallthru
          _
        // Predicated region
        $region37: #{tpu_custom_call.1} parent=11 // pred_check
          %p552 = pneg %p305
        $region38: #{tpu_custom_call.1} parent=11 // pred_check_branch
          %554 = sbr.rel (%p552) target = $region40
        $region39: #{tpu_custom_call.1} parent=11 // pred_region
          _
        $region40: #{tpu_custom_call.1} parent=11 // pred_fallthru
          _
        // Predicated region
        $region41: #{tpu_custom_call.1} parent=11 // pred_check
          %p555 = pneg %p326
        $region42: #{tpu_custom_call.1} parent=11 // pred_check_branch
          %557 = sbr.rel (%p555) target = $region44
        $region43: #{tpu_custom_call.1} parent=11 // pred_region
          _
        $region44: #{tpu_custom_call.1} parent=11 // pred_fallthru
          _
        // Predicated region
        $region45: #{tpu_custom_call.1} parent=11 // pred_check
          %p558 = pneg %p347
        $region46: #{tpu_custom_call.1} parent=11 // pred_check_branch
          %560 = sbr.rel (%p558) target = $region48
        $region47: #{tpu_custom_call.1} parent=11 // pred_region
          _
        $region48: #{tpu_custom_call.1} parent=11 // pred_fallthru
          _
        // Predicated region
        $region49: #{tpu_custom_call.1} parent=11 // pred_check
          %p561 = pneg %p368
        $region50: #{tpu_custom_call.1} parent=11 // pred_check_branch
          %563 = sbr.rel (%p561) target = $region52
        $region51: #{tpu_custom_call.1} parent=11 // pred_region
          _
        $region52: #{tpu_custom_call.1} parent=11 // pred_fallthru
          _
        // Predicated region
        $region53: #{tpu_custom_call.1} parent=11 // pred_check
          %p564 = pneg %p389
        $region54: #{tpu_custom_call.1} parent=11 // pred_check_branch
          %566 = sbr.rel (%p564) target = $region56
        $region55: #{tpu_custom_call.1} parent=11 // pred_region
          _
        $region56: #{tpu_custom_call.1} parent=11 // pred_fallthru
          _
        // Predicated region
        $region57: #{tpu_custom_call.1} parent=11 // pred_check
          %p567 = pneg %p410
        $region58: #{tpu_custom_call.1} parent=11 // pred_check_branch
          %569 = sbr.rel (%p567) target = $region60
        $region59: #{tpu_custom_call.1} parent=11 // pred_region
          _
        $region60: #{tpu_custom_call.1} parent=11 // pred_fallthru
          _
        // Predicated region
        $region61: #{tpu_custom_call.1} parent=11 // pred_check
          %p570 = pneg %p431
        $region62: #{tpu_custom_call.1} parent=11 // pred_check_branch
          %572 = sbr.rel (%p570) target = $region64
        $region63: #{tpu_custom_call.1} parent=11 // pred_region
          _
        $region64: #{tpu_custom_call.1} parent=11 // pred_fallthru
          _
      $region12: #{tpu_custom_call.1} parent=5 // pred_fallthru
        _
      %p573 = scmp.lt.s32.totalorder %s36, 2
      // Predicated region
      $region65: #{tpu_custom_call.1} parent=5 // pred_check
        %p574 = pneg %p573
      $region66: #{tpu_custom_call.1} parent=5 // pred_check_branch
        %576 = sbr.rel (%p574) target = $region68
      $region67: #{tpu_custom_call.1} parent=5 // pred_region
        // Predicated region
        $region69: #{tpu_custom_call.1} parent=67 // pred_check
          %p577 = pneg %p70
        $region70: #{tpu_custom_call.1} parent=67 // pred_check_branch
          %579 = sbr.rel (%p577) target = $region72
        $region71: #{tpu_custom_call.1} parent=67 // pred_region
          %p580 = scmp.lt.s32.totalorder %s43, 1
          %s581 = scalar_select %p580, %s43, 1
          %p582 = scmp.lt.s32.totalorder %s44, 0
          %s583 = scalar_select %p582, %s44, 0
          %s584 = sadd.s32 %s583, %s581
          %s585 = smul.addr %s584, 8
          %s586 = scalar_lea.vmem %s0, %s585
        $region72: #{tpu_custom_call.1} parent=67 // pred_fallthru
          _
        // Predicated region
        $region73: #{tpu_custom_call.1} parent=67 // pred_check
          %p587 = pneg %p98
        $region74: #{tpu_custom_call.1} parent=67 // pred_check_branch
          %589 = sbr.rel (%p587) target = $region76
        $region75: #{tpu_custom_call.1} parent=67 // pred_region
          %p590 = scmp.lt.s32.totalorder %s43, 1
          %s591 = scalar_select %p590, %s43, 1
          %p592 = scmp.lt.s32.totalorder %s44, 0
          %s593 = scalar_select %p592, %s44, 0
          %s594 = sadd.s32 %s593, %s591
          %s595 = smul.addr %s594, 8
          %s596 = scalar_lea.vmem %s1, %s595
        $region76: #{tpu_custom_call.1} parent=67 // pred_fallthru
          _
        // Predicated region
        $region77: #{tpu_custom_call.1} parent=67 // pred_check
          %p597 = pneg %p124
        $region78: #{tpu_custom_call.1} parent=67 // pred_check_branch
          %599 = sbr.rel (%p597) target = $region80
        $region79: #{tpu_custom_call.1} parent=67 // pred_region
          %p600 = scmp.lt.s32.totalorder %s43, 1
          %s601 = scalar_select %p600, %s43, 1
          %s602 = smul.addr %s601, 8
          %s603 = scalar_lea.vmem %s2, %s602
        $region80: #{tpu_custom_call.1} parent=67 // pred_fallthru
          _
        // Predicated region
        $region81: #{tpu_custom_call.1} parent=67 // pred_check
          %p604 = pneg %p152
        $region82: #{tpu_custom_call.1} parent=67 // pred_check_branch
          %606 = sbr.rel (%p604) target = $region84
        $region83: #{tpu_custom_call.1} parent=67 // pred_region
          %s607 = sand.u32 %s142, 1
          %s608 = scalar_lea.sflag [#allocation4], %s607
          %s609 = sand.u32 %s142, 1
          %s610 = smul.addr %s609, 64
          %s611 = scalar_lea.vmem [#allocation3], %s610
          %s612 = smul.u32 8, %s44
          %s614 = ssub.s32 1024, 1024
          %615 = vsyncadd %s608, %s614
          %s616 = smul.addr %s43, 8
          %s617 = sadd.s32 %s612, %s616
          %s618 = smul.addr %s617, 128
          %s619 = scalar_lea.hbm %s3, %s618
          %s620 = sshll.u32 %s611, 4
          %s621 = int_to_ptr.vmem [resolvable:$true] %s620
          %626 = dma.hbm_to_vmem [thread:$0]  %s619, 1024, %s621, %s608, 128, 128, 8
        $region84: #{tpu_custom_call.1} parent=67 // pred_fallthru
          _
      $region68: #{tpu_custom_call.1} parent=5 // pred_fallthru
        _
      %p627 = scmp.le.s32.totalorder 1, %s36
      %p628 = scmp.lt.s32.totalorder %s36, 3
      %p629 = pnand %p627, %p628
      %p630 = pneg %p629
      // Predicated region
      $region85: #{tpu_custom_call.1} parent=5 // pred_check
        _
      $region86: #{tpu_custom_call.1} parent=5 // pred_check_branch
        %632 = sbr.rel (%p629) target = $region88
      $region87: #{tpu_custom_call.1} parent=5 // pred_region
        %s633 = ssub.s32 %s36, 1
        %s634 = sand.u32 %s145, 1
        %s635 = scalar_lea.sflag [#allocation4], %s634
        %s636 = sand.u32 %s145, 1
        %s637 = smul.addr %s636, 64
        %s638 = scalar_lea.vmem [#allocation3], %s637
        // Predicated region
        $region89: #{tpu_custom_call.1} parent=87 // pred_check
          %p639 = pneg %p158
        $region90: #{tpu_custom_call.1} parent=87 // pred_check_branch
          %641 = sbr.rel (%p639) target = $region92
        $region91: #{tpu_custom_call.1} parent=87 // pred_region
          %642 = dma.done %s635, 1024
        $region92: #{tpu_custom_call.1} parent=87 // pred_fallthru
          _
        // Predicated region
        $region93: #{tpu_custom_call.1} parent=87 // pred_check
          %p643 = pneg %p179
        $region94: #{tpu_custom_call.1} parent=87 // pred_check_branch
          %645 = sbr.rel (%p643) target = $region96
        $region95: #{tpu_custom_call.1} parent=87 // pred_region
          %646 = dma.done [#allocation7], 16
        $region96: #{tpu_custom_call.1} parent=87 // pred_fallthru
          _
        // Predicated region
        $region97: #{tpu_custom_call.1} parent=87 // pred_check
          %p647 = pneg %p200
        $region98: #{tpu_custom_call.1} parent=87 // pred_check_branch
          %649 = sbr.rel (%p647) target = $region100
        $region99: #{tpu_custom_call.1} parent=87 // pred_region
          %650 = dma.done [#allocation7], 16
        $region100: #{tpu_custom_call.1} parent=87 // pred_fallthru
          _
        // Predicated region
        $region101: #{tpu_custom_call.1} parent=87 // pred_check
          %p651 = pneg %p221
        $region102: #{tpu_custom_call.1} parent=87 // pred_check_branch
          %653 = sbr.rel (%p651) target = $region104
        $region103: #{tpu_custom_call.1} parent=87 // pred_region
          %654 = dma.done [#allocation10], 64
        $region104: #{tpu_custom_call.1} parent=87 // pred_fallthru
          _
        // Predicated region
        $region105: #{tpu_custom_call.1} parent=87 // pred_check
          %p655 = pneg %p284
        $region106: #{tpu_custom_call.1} parent=87 // pred_check_branch
          %657 = sbr.rel (%p655) target = $region108
        $region107: #{tpu_custom_call.1} parent=87 // pred_region
          %658 = dma.done [#allocation10], 16
        $region108: #{tpu_custom_call.1} parent=87 // pred_fallthru
          _
        %p659 = scmp.lt.s32.totalorder %s45, 1
        %s660 = scalar_select %p659, %s45, 1
        %p661 = scmp.lt.s32.totalorder %s46, 0
        %s662 = scalar_select %p661, %s46, 0
        %s663 = sadd.s32 %s662, %s660
        %s664 = smul.addr %s663, 8
        %s665 = scalar_lea.vmem %s0, %s664
        %p666 = pneg %p76
        %p667 = pneg %p73
        %p668 = scmp.lt.s32.totalorder %s45, 1
        %s669 = scalar_select %p668, %s45, 1
        %p670 = scmp.lt.s32.totalorder %s46, 0
        %s671 = scalar_select %p670, %s46, 0
        %s672 = sadd.s32 %s671, %s669
        %s673 = smul.addr %s672, 8
        %s674 = scalar_lea.vmem %s1, %s673
        %p675 = pneg %p104
        %p676 = pneg %p101
        %p677 = scmp.lt.s32.totalorder %s45, 1
        %s678 = scalar_select %p677, %s45, 1
        %s679 = smul.addr %s678, 8
        %s680 = scalar_lea.vmem %s2, %s679
        %p681 = pneg %p130
        %p682 = pneg %p127
        %s683 = sand.u32 %s145, 1
        %s684 = scalar_lea.sflag [#allocation4], %s683
        %s685 = sand.u32 %s145, 1
        %s686 = smul.addr %s685, 64
        %s687 = scalar_lea.vmem [#allocation3], %s686
        %p688 = pneg %p158
        %p689 = pneg %p155
        %p690 = pneg %p179
        %p691 = pneg %p176
        %p692 = pneg %p200
        %p693 = pneg %p197
        %p694 = pneg %p221
        %p695 = pneg %p218
        %p696 = pneg %p242
        %p697 = pneg %p239
        %p698 = pneg %p263
        %p699 = pneg %p260
        %p700 = pneg %p284
        %p701 = pneg %p281
        %p702 = pneg %p305
        %p703 = pneg %p302
        %p704 = pneg %p326
        %p705 = pneg %p323
        %p706 = pneg %p347
        %p707 = pneg %p344
        %p708 = pneg %p368
        %p709 = pneg %p365
        %p710 = pneg %p389
        %p711 = pneg %p386
        %p712 = pneg %p410
        %p713 = pneg %p407
        %p714 = pneg %p431
        %p715 = pneg %p428
        %p716 = pneg %p459
        %p717 = pneg %p456
        %s718 = sand.u32 %s446, 1
        %s719 = scalar_lea.sflag [#allocation5], %s718
        %s720 = sand.u32 %s446, 1
        %s721 = smul.addr %s720, 8
        %s722 = scalar_lea.vmem [#allocation12], %s721
        %p723 = pneg %p487
        %p724 = pneg %p484
        %s725 = sand.u32 %s474, 1
        %s726 = scalar_lea.sflag [#allocation14], %s725
        %s727 = sand.u32 %s474, 1
        %s728 = smul.addr %s727, 64
        %s729 = scalar_lea.vmem [#allocation13], %s728
        %p730 = scmp.lt.s32.totalorder %s45, 1
        %s731 = scalar_select %p730, %s45, 1
        %p732 = scmp.lt.s32.totalorder %s46, 0
        %s733 = scalar_select %p732, %s46, 0
        %s734 = sadd.s32 %s733, %s731
        %s735 = smul.addr %s734, 8
        %s736 = scalar_lea.vmem %s0, %s735
        %p737 = scmp.lt.s32.totalorder %s45, 1
        %s738 = scalar_select %p737, %s45, 1
        %p739 = scmp.lt.s32.totalorder %s46, 0
        %s740 = scalar_select %p739, %s46, 0
        %s741 = sadd.s32 %s740, %s738
        %s742 = smul.addr %s741, 8
        %s743 = scalar_lea.vmem %s1, %s742
        %p744 = scmp.lt.s32.totalorder %s45, 1
        %s745 = scalar_select %p744, %s45, 1
        %s746 = smul.addr %s745, 8
        %s747 = scalar_lea.vmem %s2, %s746
        %s748 = smul.u32 8, %s46
        %s749 = smul.u32 8, %s46
        %v751 = vld [vmem:[%s638] sm:$0xff]
        %v752 = vld [vmem:[%s638 + $0x8] sm:$0xff]
        %v753 = vld [vmem:[%s638 + $0x10] sm:$0xff]
        %v754 = vld [vmem:[%s638 + $0x18] sm:$0xff]
        %v755 = vld [vmem:[%s638 + $0x20] sm:$0xff]
        %v756 = vld [vmem:[%s638 + $0x28] sm:$0xff]
        %v757 = vld [vmem:[%s638 + $0x30] sm:$0xff]
        %v758 = vld [vmem:[%s638 + $0x38] sm:$0xff]
        %v759 = vld [vmem:[#allocation6] sm:$0x1]
        %v760 = vld [vmem:[#allocation8] sm:$0x1]
        %vm761 = vcmask 261120
        %v762 = vsel %vm761, %v751, 0.0
        %763 = vadd.xlane.f32.xlu0 %v762
        %v764 = vpop.xlane.xlu0 %763
        %v765 = vsel %vm761, %v752, 0.0
        %766 = vadd.xlane.f32.xlu0 %v765
        %v767 = vpop.xlane.xlu0 %766
        %v768 = vsel %vm761, %v753, 0.0
        %769 = vadd.xlane.f32.xlu0 %v768
        %v770 = vpop.xlane.xlu0 %769
        %v771 = vsel %vm761, %v754, 0.0
        %772 = vadd.xlane.f32.xlu0 %v771
        %v773 = vpop.xlane.xlu0 %772
        %v774 = vsel %vm761, %v755, 0.0
        %775 = vadd.xlane.f32.xlu0 %v774
        %v776 = vpop.xlane.xlu0 %775
        %v777 = vsel %vm761, %v756, 0.0
        %778 = vadd.xlane.f32.xlu0 %v777
        %v779 = vpop.xlane.xlu0 %778
        %v780 = vsel %vm761, %v757, 0.0
        %781 = vadd.xlane.f32.xlu0 %v780
        %v782 = vpop.xlane.xlu0 %781
        %v783 = vsel %vm761, %v758, 0.0
        %784 = vadd.xlane.f32.xlu0 %v783
        %v785 = vpop.xlane.xlu0 %784
        %v786 = vrcp.pop 32.0
        %v787 = vmul.f32 %v764, %v786
        %v788 = vmul.f32 %v767, %v786
        %v789 = vmul.f32 %v770, %v786
        %v790 = vmul.f32 %v773, %v786
        %v791 = vmul.f32 %v776, %v786
        %v792 = vmul.f32 %v779, %v786
        %v793 = vmul.f32 %v782, %v786
        %v794 = vmul.f32 %v785, %v786
        %v795 = vsub.f32 %v751, %v787
        %v796 = vsub.f32 %v752, %v788
        %v797 = vsub.f32 %v753, %v789
        %v798 = vsub.f32 %v754, %v790
        %v799 = vsub.f32 %v755, %v791
        %v800 = vsub.f32 %v756, %v792
        %v801 = vsub.f32 %v757, %v793
        %v802 = vsub.f32 %v758, %v794
        %v803 = vmul.f32 %v795, %v795
        %v804 = vmul.f32 %v796, %v796
        %v805 = vmul.f32 %v797, %v797
        %v806 = vmul.f32 %v798, %v798
        %v807 = vmul.f32 %v799, %v799
        %v808 = vmul.f32 %v800, %v800
        %v809 = vmul.f32 %v801, %v801
        %v810 = vmul.f32 %v802, %v802
        %v811 = vsel %vm761, %v803, 0.0
        %812 = vadd.xlane.f32.xlu0 %v811
        %v813 = vpop.xlane.xlu0 %812
        %v814 = vsel %vm761, %v804, 0.0
        %815 = vadd.xlane.f32.xlu0 %v814
        %v816 = vpop.xlane.xlu0 %815
        %v817 = vsel %vm761, %v805, 0.0
        %818 = vadd.xlane.f32.xlu0 %v817
        %v819 = vpop.xlane.xlu0 %818
        %v820 = vsel %vm761, %v806, 0.0
        %821 = vadd.xlane.f32.xlu0 %v820
        %v822 = vpop.xlane.xlu0 %821
        %v823 = vsel %vm761, %v807, 0.0
        %824 = vadd.xlane.f32.xlu0 %v823
        %v825 = vpop.xlane.xlu0 %824
        %v826 = vsel %vm761, %v808, 0.0
        %827 = vadd.xlane.f32.xlu0 %v826
        %v828 = vpop.xlane.xlu0 %827
        %v829 = vsel %vm761, %v809, 0.0
        %830 = vadd.xlane.f32.xlu0 %v829
        %v831 = vpop.xlane.xlu0 %830
        %v832 = vsel %vm761, %v810, 0.0
        %833 = vadd.xlane.f32.xlu0 %v832
        %v834 = vpop.xlane.xlu0 %833
        %v835 = vmul.f32 %v813, %v786
        %v836 = vmul.f32 %v816, %v786
        %v837 = vmul.f32 %v819, %v786
        %v838 = vmul.f32 %v822, %v786
        %v839 = vmul.f32 %v825, %v786
        %v840 = vmul.f32 %v828, %v786
        %v841 = vmul.f32 %v831, %v786
        %v842 = vmul.f32 %v834, %v786
        %v843 = vadd.f32 %v835, 1e-05
        %v844 = vadd.f32 %v836, 1e-05
        %v845 = vadd.f32 %v837, 1e-05
        %v846 = vadd.f32 %v838, 1e-05
        %v847 = vadd.f32 %v839, 1e-05
        %v848 = vadd.f32 %v840, 1e-05
        %v849 = vadd.f32 %v841, 1e-05
        %v850 = vadd.f32 %v842, 1e-05
        %v851 = vrsqrt.pop %v843
        %v852 = vrsqrt.pop %v844
        %v853 = vrsqrt.pop %v845
        %v854 = vrsqrt.pop %v846
        %v855 = vrsqrt.pop %v847
        %v856 = vrsqrt.pop %v848
        %v857 = vrsqrt.pop %v849
        %v858 = vrsqrt.pop %v850
        %v859 = vmul.f32 %v795, %v851
        %v860 = vmul.f32 %v796, %v852
        %v861 = vmul.f32 %v797, %v853
        %v862 = vmul.f32 %v798, %v854
        %v863 = vmul.f32 %v799, %v855
        %v864 = vmul.f32 %v800, %v856
        %v865 = vmul.f32 %v801, %v857
        %v866 = vmul.f32 %v802, %v858
        %v868 = vlaneseq
        %v869 = vshrl.u32 %v868, 7
        %v870 = vsub.s32 0, %v869
        %v871 = vrot.slane %v759, %v870
        %v873 = vmul.f32 %v859, %v871
        %v874 = vmul.f32 %v860, %v871
        %v875 = vmul.f32 %v861, %v871
        %v876 = vmul.f32 %v862, %v871
        %v877 = vmul.f32 %v863, %v871
        %v878 = vmul.f32 %v864, %v871
        %v879 = vmul.f32 %v865, %v871
        %v880 = vmul.f32 %v866, %v871
        %v882 = vlaneseq
        %v883 = vshrl.u32 %v882, 7
        %v884 = vsub.s32 0, %v883
        %v885 = vrot.slane %v760, %v884
        %v887 = vadd.f32 %v873, %v885
        %v888 = vadd.f32 %v874, %v885
        %v889 = vadd.f32 %v875, %v885
        %v890 = vadd.f32 %v876, %v885
        %v891 = vadd.f32 %v877, %v885
        %v892 = vadd.f32 %v878, %v885
        %v893 = vadd.f32 %v879, %v885
        %v894 = vadd.f32 %v880, %v885
        %v895 = vld [vmem:[#allocation9] sm:$0xf]
        %v896 = vpack.c.bf16 %v888, %v887
        %v897 = vpack.c.bf16 %v890, %v889
        %v898 = vpack.c.bf16 %v892, %v891
        %v899 = vpack.c.bf16 %v894, %v893
        %v901 = vsel %vm761, %v895, 0
        %v904 = vsel %vm761, %v896, 0
        %v907 = vsel %vm761, %v897, 0
        %v910 = vsel %vm761, %v898, 0
        %v913 = vsel %vm761, %v899, 0
        %915 = vmatprep.subr.bf16.mxu0 0
        %916 = vmatpush1.bf16.xpose.msra.mxu0 %v904
        %917 = vmatprep.subr.bf16.mxu0 0
        %918 = vmatpush1.bf16.xpose.msra.mxu0 %v907
        %919 = vmatprep.subr.bf16.mxu0 0
        %920 = vmatpush1.bf16.xpose.msra.mxu0 %v910
        %921 = vmatprep.subr.bf16.mxu0 0
        %922 = vmatpush1.bf16.xpose.msra.mxu0 %v913
        %923 = vmatprep.subr.bf16.mxu0 0
        %924 = vmatpush1.bf16.xpose.msra.mxu0 0
        %925 = vmatprep.subr.bf16.mxu0 0
        %926 = vmatpush1.bf16.xpose.msra.mxu0 0
        %927 = vmatprep.subr.bf16.mxu0 0
        %928 = vmatpush1.bf16.xpose.msra.mxu0 0
        %929 = vmatprep.subr.bf16.mxu0 0
        %930 = vmatpush1.bf16.xpose.msra.mxu0 0
        %931 = vmatprep.subr.bf16.mxu0 0
        %932 = vmatpush1.bf16.xpose.msra.mxu0 0
        %933 = vmatprep.subr.bf16.mxu0 0
        %934 = vmatpush1.bf16.xpose.msra.mxu0 0
        %935 = vmatprep.subr.bf16.mxu0 0
        %936 = vmatpush1.bf16.xpose.msra.mxu0 0
        %937 = vmatprep.subr.bf16.mxu0 0
        %938 = vmatpush1.bf16.xpose.msra.mxu0 0
        %939 = vmatprep.subr.bf16.mxu0 0
        %940 = vmatpush1.bf16.xpose.msra.mxu0 0
        %941 = vmatprep.subr.bf16.mxu0 0
        %942 = vmatpush1.bf16.xpose.msra.mxu0 0
        %943 = vmatprep.subr.bf16.mxu0 0
        %944 = vmatpush1.bf16.xpose.msra.mxu0 0
        %945 = vmatprep.subr.bf16.mxu0 0
        %946 = vmatpush1.bf16.xpose.msra.mxu0 0
        %947 = vmatprep.mubr.bf16.mxu0 0
        %948 = vmatmul.mubr.bf16.gmra.mrb[0].mxu0 %v901
        %v949 = vpop.f32.mrb[0].mxu0
        %v950 = vadd.f32 0.0, %v949
        %v951 = vpop.f32.mrb[0].mxu0
        %v952 = vpop.f32.mrb[0].mxu0
        %v953 = vpop.f32.mrb[0].mxu0
        %954 = vdwg.mxu0
        %956 = vrot.lane.b32.xlu0 %v950, 120
        %v957 = vpop.permute.xlu0 %956
        %959 = vrot.lane.b32.xlu0 %v950, 112
        %v960 = vpop.permute.xlu0 %959
        %962 = vrot.lane.b32.xlu0 %v950, 104
        %v963 = vpop.permute.xlu0 %962
        %965 = vrot.lane.b32.xlu0 %v950, 96
        %v966 = vpop.permute.xlu0 %965
        %968 = vrot.lane.b32.xlu0 %v950, 88
        %v969 = vpop.permute.xlu0 %968
        %971 = vrot.lane.b32.xlu0 %v950, 80
        %v972 = vpop.permute.xlu0 %971
        %974 = vrot.lane.b32.xlu0 %v950, 72
        %v975 = vpop.permute.xlu0 %974
        %v977 = vcombine.low %v950, %v960
        %v978 = vcombine.high %v950, %v960
        %v980 = vunpack.c.l.s4 1983009808
        %v981 = vunpack.c.0.s8 %v980
        %v982 = vlaneseq
        %v983 = vshrl.u32 %v982, 7
        %v984 = vsub.s32 %v981, %v983
        %v985 = vrot.slane %v977, %v984
        %v987 = vunpack.c.l.s4 1983009808
        %v988 = vunpack.c.0.s8 %v987
        %v989 = vlaneseq
        %v990 = vshrl.u32 %v989, 7
        %v991 = vsub.s32 %v988, %v990
        %v992 = vrot.slane %v978, %v991
        %v993 = vcombine.low %v957, %v963
        %v994 = vcombine.high %v957, %v963
        %v996 = vunpack.c.l.s4 1983009808
        %v997 = vunpack.c.0.s8 %v996
        %v998 = vlaneseq
        %v999 = vshrl.u32 %v998, 7
        %v1000 = vsub.s32 %v997, %v999
        %v1001 = vrot.slane %v993, %v1000
        %v1003 = vunpack.c.l.s4 1983009808
        %v1004 = vunpack.c.0.s8 %v1003
        %v1005 = vlaneseq
        %v1006 = vshrl.u32 %v1005, 7
        %v1007 = vsub.s32 %v1004, %v1006
        %v1008 = vrot.slane %v994, %v1007
        %v1009 = vcombine.low %v966, %v972
        %v1010 = vcombine.high %v966, %v972
        %v1012 = vunpack.c.l.s4 1983009808
        %v1013 = vunpack.c.0.s8 %v1012
        %v1014 = vlaneseq
        %v1015 = vshrl.u32 %v1014, 7
        %v1016 = vsub.s32 %v1013, %v1015
        %v1017 = vrot.slane %v1009, %v1016
        %v1019 = vunpack.c.l.s4 1983009808
        %v1020 = vunpack.c.0.s8 %v1019
        %v1021 = vlaneseq
        %v1022 = vshrl.u32 %v1021, 7
        %v1023 = vsub.s32 %v1020, %v1022
        %v1024 = vrot.slane %v1010, %v1023
        %v1025 = vcombine.low %v969, %v975
        %v1026 = vcombine.high %v969, %v975
        %v1028 = vunpack.c.l.s4 1983009808
        %v1029 = vunpack.c.0.s8 %v1028
        %v1030 = vlaneseq
        %v1031 = vshrl.u32 %v1030, 7
        %v1032 = vsub.s32 %v1029, %v1031
        %v1033 = vrot.slane %v1025, %v1032
        %v1035 = vunpack.c.l.s4 1983009808
        %v1036 = vunpack.c.0.s8 %v1035
        %v1037 = vlaneseq
        %v1038 = vshrl.u32 %v1037, 7
        %v1039 = vsub.s32 %v1036, %v1038
        %v1040 = vrot.slane %v1026, %v1039
        %v1041 = vcombine.low %v985, %v1001
        %v1042 = vcombine.high %v985, %v1001
        %v1044 = vunpack.c.l.s4 1934713408
        %v1045 = vunpack.c.0.s8 %v1044
        %v1046 = vlaneseq
        %v1047 = vshrl.u32 %v1046, 7
        %v1048 = vsub.s32 %v1045, %v1047
        %v1049 = vrot.slane %v1041, %v1048
        %v1051 = vunpack.c.l.s4 1934713408
        %v1052 = vunpack.c.0.s8 %v1051
        %v1053 = vlaneseq
        %v1054 = vshrl.u32 %v1053, 7
        %v1055 = vsub.s32 %v1052, %v1054
        %v1056 = vrot.slane %v1042, %v1055
        %v1057 = vcombine.low %v992, %v1008
        %v1058 = vcombine.high %v992, %v1008
        %v1060 = vunpack.c.l.s4 1934713408
        %v1061 = vunpack.c.0.s8 %v1060
        %v1062 = vlaneseq
        %v1063 = vshrl.u32 %v1062, 7
        %v1064 = vsub.s32 %v1061, %v1063
        %v1065 = vrot.slane %v1057, %v1064
        %v1067 = vunpack.c.l.s4 1934713408
        %v1068 = vunpack.c.0.s8 %v1067
        %v1069 = vlaneseq
        %v1070 = vshrl.u32 %v1069, 7
        %v1071 = vsub.s32 %v1068, %v1070
        %v1072 = vrot.slane %v1058, %v1071
        %v1073 = vcombine.low %v1017, %v1033
        %v1074 = vcombine.high %v1017, %v1033
        %v1076 = vunpack.c.l.s4 1934713408
        %v1077 = vunpack.c.0.s8 %v1076
        %v1078 = vlaneseq
        %v1079 = vshrl.u32 %v1078, 7
        %v1080 = vsub.s32 %v1077, %v1079
        %v1081 = vrot.slane %v1073, %v1080
        %v1083 = vunpack.c.l.s4 1934713408
        %v1084 = vunpack.c.0.s8 %v1083
        %v1085 = vlaneseq
        %v1086 = vshrl.u32 %v1085, 7
        %v1087 = vsub.s32 %v1084, %v1086
        %v1088 = vrot.slane %v1074, %v1087
        %v1089 = vcombine.low %v1024, %v1040
        %v1090 = vcombine.high %v1024, %v1040
        %v1092 = vunpack.c.l.s4 1934713408
        %v1093 = vunpack.c.0.s8 %v1092
        %v1094 = vlaneseq
        %v1095 = vshrl.u32 %v1094, 7
        %v1096 = vsub.s32 %v1093, %v1095
        %v1097 = vrot.slane %v1089, %v1096
        %v1099 = vunpack.c.l.s4 1934713408
        %v1100 = vunpack.c.0.s8 %v1099
        %v1101 = vlaneseq
        %v1102 = vshrl.u32 %v1101, 7
        %v1103 = vsub.s32 %v1100, %v1102
        %v1104 = vrot.slane %v1090, %v1103
        %v1105 = vcombine.low %v1049, %v1081
        %v1106 = vcombine.high %v1049, %v1081
        %v1107 = vcombine.low %v1056, %v1088
        %v1108 = vcombine.high %v1056, %v1088
        %v1109 = vcombine.low %v1065, %v1097
        %v1110 = vcombine.high %v1065, %v1097
        %v1111 = vcombine.low %v1072, %v1104
        %v1112 = vcombine.high %v1072, %v1104
        %v1113 = vsub.f32 0.0, %v1109
        %v1114 = vsub.f32 0.0, %v1110
        %v1115 = vsub.f32 0.0, %v1111
        %v1116 = vsub.f32 0.0, %v1112
        %v1117 = vmul.f32 %v1113, 1.442695
        %v1118 = vpow.pop %v1117
        %v1119 = vmul.f32 %v1114, 1.442695
        %v1120 = vpow.pop %v1119
        %v1121 = vmul.f32 %v1115, 1.442695
        %v1122 = vpow.pop %v1121
        %v1123 = vmul.f32 %v1116, 1.442695
        %v1124 = vpow.pop %v1123
        %v1125 = vadd.f32 %v1118, 1.0
        %v1126 = vadd.f32 %v1120, 1.0
        %v1127 = vadd.f32 %v1122, 1.0
        %v1128 = vadd.f32 %v1124, 1.0
        %v1129 = vrcp.pop %v1125
        %v1130 = vmul.f32 1.0, %v1129
        %v1131 = vrcp.pop %v1126
        %v1132 = vmul.f32 1.0, %v1131
        %v1133 = vrcp.pop %v1127
        %v1134 = vmul.f32 1.0, %v1133
        %v1135 = vrcp.pop %v1128
        %v1136 = vmul.f32 1.0, %v1135
        %vm1137 = vcmask 64512
        %v1138 = vsel %vm1137, %v1130, 0.0
        %1139 = vadd.xlane.f32.xlu0 %v1138
        %v1140 = vpop.xlane.xlu0 %1139
        %v1141 = vsel %vm1137, %v1132, 0.0
        %1142 = vadd.xlane.f32.xlu0 %v1141
        %v1143 = vpop.xlane.xlu0 %1142
        %v1144 = vsel %vm1137, %v1134, 0.0
        %1145 = vadd.xlane.f32.xlu0 %v1144
        %v1146 = vpop.xlane.xlu0 %1145
        %v1147 = vsel %vm1137, %v1136, 0.0
        %1148 = vadd.xlane.f32.xlu0 %v1147
        %v1149 = vpop.xlane.xlu0 %1148
        %v1150 = vadd.f32 %v1140, 1.0
        %v1151 = vadd.f32 %v1143, 1.0
        %v1152 = vadd.f32 %v1146, 1.0
        %v1153 = vadd.f32 %v1149, 1.0
        %v1154 = vlog2.pop %v1150
        %v1155 = vmul.f32 %v1154, 0.6931472
        %v1156 = vlog2.pop %v1151
        %v1157 = vmul.f32 %v1156, 0.6931472
        %v1158 = vlog2.pop %v1152
        %v1159 = vmul.f32 %v1158, 0.6931472
        %v1160 = vlog2.pop %v1153
        %v1161 = vmul.f32 %v1160, 0.6931472
        %v1162 = vld [vmem:[%s743] sm:$0xff]
        %v1163 = vld [vmem:[%s747] sm:$0xff]
        %v1164 = vpack.c.bf16 %v1162, %v1162
        %v1165 = vpack.c.bf16 %v1163, %v1163
        %v1167 = vsel %vm1137, %v1164, 0
        %v1170 = vsel %vm1137, %v1165, 0
        %1172 = vmatprep.subr.bf16.mxu0 0
        %1173 = vmatpush1.bf16.xpose.msra.mxu0 %v1170
        %1174 = vmatprep.subr.bf16.mxu0 0
        %1175 = vmatpush1.bf16.xpose.msra.mxu0 0
        %1176 = vmatprep.subr.bf16.mxu0 0
        %1177 = vmatpush1.bf16.xpose.msra.mxu0 0
        %1178 = vmatprep.subr.bf16.mxu0 0
        %1179 = vmatpush1.bf16.xpose.msra.mxu0 0
        %1180 = vmatprep.subr.bf16.mxu0 0
        %1181 = vmatpush1.bf16.xpose.msra.mxu0 0
        %1182 = vmatprep.subr.bf16.mxu0 0
        %1183 = vmatpush1.bf16.xpose.msra.mxu0 0
        %1184 = vmatprep.subr.bf16.mxu0 0
        %1185 = vmatpush1.bf16.xpose.msra.mxu0 0
        %1186 = vmatprep.subr.bf16.mxu0 0
        %1187 = vmatpush1.bf16.xpose.msra.mxu0 0
        %1188 = vmatprep.subr.bf16.mxu0 0
        %1189 = vmatpush1.bf16.xpose.msra.mxu0 0
        %1190 = vmatprep.subr.bf16.mxu0 0
        %1191 = vmatpush1.bf16.xpose.msra.mxu0 0
        %1192 = vmatprep.subr.bf16.mxu0 0
        %1193 = vmatpush1.bf16.xpose.msra.mxu0 0
        %1194 = vmatprep.subr.bf16.mxu0 0
        %1195 = vmatpush1.bf16.xpose.msra.mxu0 0
        %1196 = vmatprep.subr.bf16.mxu0 0
        %1197 = vmatpush1.bf16.xpose.msra.mxu0 0
        %1198 = vmatprep.subr.bf16.mxu0 0
        %1199 = vmatpush1.bf16.xpose.msra.mxu0 0
        %1200 = vmatprep.subr.bf16.mxu0 0
        %1201 = vmatpush1.bf16.xpose.msra.mxu0 0
        %1202 = vmatprep.subr.bf16.mxu0 0
        %1203 = vmatpush1.bf16.xpose.msra.mxu0 0
        %1204 = vmatprep.mubr.bf16.mxu0 0
        %1205 = vmatmul.mubr.bf16.gmra.mrb[0].mxu0 %v1167
        %v1206 = vpop.f32.mrb[0].mxu0
        %v1207 = vadd.f32 0.0, %v1206
        %v1208 = vpop.f32.mrb[0].mxu0
        %v1209 = vpop.f32.mrb[0].mxu0
        %v1210 = vpop.f32.mrb[0].mxu0
        %1211 = vdwg.mxu0
        %v1212 = vmul.f32 %v1207, 0.35355338
        %v1213 = vmax.f32 %v1212, -5.0
        %v1214 = vmin.f32 %v1213, 5.0
        %v1215 = vadd.f32 %v1214, %v1105
        %1216 = vst.msk [vmem:[#allocation2] sm:$0xff] %vm1137, %v1215
        %v1217 = vsel %vm1137, %v1215, -inf
        %1218 = vmax.xlane.f32.xlu0 %v1217
        %v1219 = vpop.xlane.xlu0 %1218
        %v1220 = vsub.f32 %v1215, %v1219
        %v1221 = vmul.f32 %v1220, 1.442695
        %v1222 = vpow.pop %v1221
        %v1223 = vsel %vm1137, %v1222, 0.0
        %1224 = vadd.xlane.f32.xlu0 %v1223
        %v1225 = vpop.xlane.xlu0 %1224
        %v1226 = vrcp.pop %v1225
        %v1227 = vmul.f32 %v1226, %v1155
        %v1228 = vpack.c.bf16 %v1222, %v1222
        %1230 = vrot.lane.b32.xlu0 %v1165, 96
        %v1231 = vpop.permute.xlu0 %1230
        %v1233 = vsel %vm1137, %v1228, 0
        %vm1235 = vcmask 1043456
        %v1237 = vsel %vm1235, %v1231, 0
        %1239 = vmatprep.subr.bf16.mxu0 0
        %1240 = vmatpush1.bf16.msra.mxu0 %v1237
        %1241 = vmatprep.subr.bf16.mxu0 0
        %1242 = vmatpush1.bf16.msra.mxu0 0
        %1243 = vmatprep.subr.bf16.mxu0 0
        %1244 = vmatpush1.bf16.msra.mxu0 0
        %1245 = vmatprep.subr.bf16.mxu0 0
        %1246 = vmatpush1.bf16.msra.mxu0 0
        %1247 = vmatprep.subr.bf16.mxu0 0
        %1248 = vmatpush1.bf16.msra.mxu0 0
        %1249 = vmatprep.subr.bf16.mxu0 0
        %1250 = vmatpush1.bf16.msra.mxu0 0
        %1251 = vmatprep.subr.bf16.mxu0 0
        %1252 = vmatpush1.bf16.msra.mxu0 0
        %1253 = vmatprep.subr.bf16.mxu0 0
        %1254 = vmatpush1.bf16.msra.mxu0 0
        %1255 = vmatprep.subr.bf16.mxu0 0
        %1256 = vmatpush1.bf16.msra.mxu0 0
        %1257 = vmatprep.subr.bf16.mxu0 0
        %1258 = vmatpush1.bf16.msra.mxu0 0
        %1259 = vmatprep.subr.bf16.mxu0 0
        %1260 = vmatpush1.bf16.msra.mxu0 0
        %1261 = vmatprep.subr.bf16.mxu0 0
        %1262 = vmatpush1.bf16.msra.mxu0 0
        %1263 = vmatprep.subr.bf16.mxu0 0
        %1264 = vmatpush1.bf16.msra.mxu0 0
        %1265 = vmatprep.subr.bf16.mxu0 0
        %1266 = vmatpush1.bf16.msra.mxu0 0
        %1267 = vmatprep.subr.bf16.mxu0 0
        %1268 = vmatpush1.bf16.msra.mxu0 0
        %1269 = vmatprep.subr.bf16.mxu0 0
        %1270 = vmatpush1.bf16.msra.mxu0 0
        %1271 = vmatprep.mubr.bf16.mxu0 0
        %1272 = vmatmul.mubr.bf16.gmra.mrb[0].mxu0 %v1233
        %v1273 = vpop.f32.mrb[0].mxu0
        %v1274 = vadd.f32 0.0, %v1273
        %v1275 = vpop.f32.mrb[0].mxu0
        %v1276 = vpop.f32.mrb[0].mxu0
        %v1277 = vpop.f32.mrb[0].mxu0
        %1278 = vdwg.mxu0
        %v1279 = vmul.f32 %v1274, %v1227
        %1281 = vrot.lane.b32.xlu0 %v1164, 120
        %v1282 = vpop.permute.xlu0 %1281
        %1283 = vrot.lane.b32.xlu0 %v1165, 120
        %v1284 = vpop.permute.xlu0 %1283
        %v1286 = vsel %vm1137, %v1282, 0
        %v1289 = vsel %vm1137, %v1284, 0
        %1291 = vmatprep.subr.bf16.mxu0 0
        %1292 = vmatpush1.bf16.xpose.msra.mxu0 %v1289
        %1293 = vmatprep.subr.bf16.mxu0 0
        %1294 = vmatpush1.bf16.xpose.msra.mxu0 0
        %1295 = vmatprep.subr.bf16.mxu0 0
        %1296 = vmatpush1.bf16.xpose.msra.mxu0 0
        %1297 = vmatprep.subr.bf16.mxu0 0
        %1298 = vmatpush1.bf16.xpose.msra.mxu0 0
        %1299 = vmatprep.subr.bf16.mxu0 0
        %1300 = vmatpush1.bf16.xpose.msra.mxu0 0
        %1301 = vmatprep.subr.bf16.mxu0 0
        %1302 = vmatpush1.bf16.xpose.msra.mxu0 0
        %1303 = vmatprep.subr.bf16.mxu0 0
        %1304 = vmatpush1.bf16.xpose.msra.mxu0 0
        %1305 = vmatprep.subr.bf16.mxu0 0
        %1306 = vmatpush1.bf16.xpose.msra.mxu0 0
        %1307 = vmatprep.subr.bf16.mxu0 0
        %1308 = vmatpush1.bf16.xpose.msra.mxu0 0
        %1309 = vmatprep.subr.bf16.mxu0 0
        %1310 = vmatpush1.bf16.xpose.msra.mxu0 0
        %1311 = vmatprep.subr.bf16.mxu0 0
        %1312 = vmatpush1.bf16.xpose.msra.mxu0 0
        %1313 = vmatprep.subr.bf16.mxu0 0
        %1314 = vmatpush1.bf16.xpose.msra.mxu0 0
        %1315 = vmatprep.subr.bf16.mxu0 0
        %1316 = vmatpush1.bf16.xpose.msra.mxu0 0
        %1317 = vmatprep.subr.bf16.mxu0 0
        %1318 = vmatpush1.bf16.xpose.msra.mxu0 0
        %1319 = vmatprep.subr.bf16.mxu0 0
        %1320 = vmatpush1.bf16.xpose.msra.mxu0 0
        %1321 = vmatprep.subr.bf16.mxu0 0
        %1322 = vmatpush1.bf16.xpose.msra.mxu0 0
        %1323 = vmatprep.mubr.bf16.mxu0 0
        %1324 = vmatmul.mubr.bf16.gmra.mrb[0].mxu0 %v1286
        %v1325 = vpop.f32.mrb[0].mxu0
        %v1326 = vadd.f32 0.0, %v1325
        %v1327 = vpop.f32.mrb[0].mxu0
        %v1328 = vpop.f32.mrb[0].mxu0
        %v1329 = vpop.f32.mrb[0].mxu0
        %1330 = vdwg.mxu0
        %v1331 = vmul.f32 %v1326, 0.35355338
        %v1332 = vmax.f32 %v1331, -5.0
        %v1333 = vmin.f32 %v1332, 5.0
        %v1334 = vadd.f32 %v1333, %v1106
        %s1335 = scalar_lea.vmem [#allocation2], 8
        %1336 = vst.msk [vmem:[%s1335] sm:$0xff] %vm1137, %v1334
        %v1337 = vsel %vm1137, %v1334, -inf
        %1338 = vmax.xlane.f32.xlu0 %v1337
        %v1339 = vpop.xlane.xlu0 %1338
        %v1340 = vsub.f32 %v1334, %v1339
        %v1341 = vmul.f32 %v1340, 1.442695
        %v1342 = vpow.pop %v1341
        %v1343 = vsel %vm1137, %v1342, 0.0
        %1344 = vadd.xlane.f32.xlu0 %v1343
        %v1345 = vpop.xlane.xlu0 %1344
        %v1346 = vrcp.pop %v1345
        %v1347 = vmul.f32 %v1346, %v1157
        %v1348 = vpack.c.bf16 %v1342, %v1342
        %1349 = vrot.lane.b32.xlu0 %v1165, 88
        %v1350 = vpop.permute.xlu0 %1349
        %v1352 = vsel %vm1137, %v1348, 0
        %v1355 = vsel %vm1235, %v1350, 0
        %1357 = vmatprep.subr.bf16.mxu0 0
        %1358 = vmatpush1.bf16.msra.mxu0 %v1355
        %1359 = vmatprep.subr.bf16.mxu0 0
        %1360 = vmatpush1.bf16.msra.mxu0 0
        %1361 = vmatprep.subr.bf16.mxu0 0
        %1362 = vmatpush1.bf16.msra.mxu0 0
        %1363 = vmatprep.subr.bf16.mxu0 0
        %1364 = vmatpush1.bf16.msra.mxu0 0
        %1365 = vmatprep.subr.bf16.mxu0 0
        %1366 = vmatpush1.bf16.msra.mxu0 0
        %1367 = vmatprep.subr.bf16.mxu0 0
        %1368 = vmatpush1.bf16.msra.mxu0 0
        %1369 = vmatprep.subr.bf16.mxu0 0
        %1370 = vmatpush1.bf16.msra.mxu0 0
        %1371 = vmatprep.subr.bf16.mxu0 0
        %1372 = vmatpush1.bf16.msra.mxu0 0
        %1373 = vmatprep.subr.bf16.mxu0 0
        %1374 = vmatpush1.bf16.msra.mxu0 0
        %1375 = vmatprep.subr.bf16.mxu0 0
        %1376 = vmatpush1.bf16.msra.mxu0 0
        %1377 = vmatprep.subr.bf16.mxu0 0
        %1378 = vmatpush1.bf16.msra.mxu0 0
        %1379 = vmatprep.subr.bf16.mxu0 0
        %1380 = vmatpush1.bf16.msra.mxu0 0
        %1381 = vmatprep.subr.bf16.mxu0 0
        %1382 = vmatpush1.bf16.msra.mxu0 0
        %1383 = vmatprep.subr.bf16.mxu0 0
        %1384 = vmatpush1.bf16.msra.mxu0 0
        %1385 = vmatprep.subr.bf16.mxu0 0
        %1386 = vmatpush1.bf16.msra.mxu0 0
        %1387 = vmatprep.subr.bf16.mxu0 0
        %1388 = vmatpush1.bf16.msra.mxu0 0
        %1389 = vmatprep.mubr.bf16.mxu0 0
        %1390 = vmatmul.mubr.bf16.gmra.mrb[0].mxu0 %v1352
        %v1391 = vpop.f32.mrb[0].mxu0
        %v1392 = vadd.f32 0.0, %v1391
        %v1393 = vpop.f32.mrb[0].mxu0
        %v1394 = vpop.f32.mrb[0].mxu0
        %v1395 = vpop.f32.mrb[0].mxu0
        %1396 = vdwg.mxu0
        %v1397 = vmul.f32 %v1392, %v1347
        %1398 = vrot.lane.b32.xlu0 %v1164, 112
        %v1399 = vpop.permute.xlu0 %1398
        %1400 = vrot.lane.b32.xlu0 %v1165, 112
        %v1401 = vpop.permute.xlu0 %1400
        %v1403 = vsel %vm1137, %v1399, 0
        %v1406 = vsel %vm1137, %v1401, 0
        %1408 = vmatprep.subr.bf16.mxu0 0
        %1409 = vmatpush1.bf16.xpose.msra.mxu0 %v1406
        %1410 = vmatprep.subr.bf16.mxu0 0
        %1411 = vmatpush1.bf16.xpose.msra.mxu0 0
        %1412 = vmatprep.subr.bf16.mxu0 0
        %1413 = vmatpush1.bf16.xpose.msra.mxu0 0
        %1414 = vmatprep.subr.bf16.mxu0 0
        %1415 = vmatpush1.bf16.xpose.msra.mxu0 0
        %1416 = vmatprep.subr.bf16.mxu0 0
        %1417 = vmatpush1.bf16.xpose.msra.mxu0 0
        %1418 = vmatprep.subr.bf16.mxu0 0
        %1419 = vmatpush1.bf16.xpose.msra.mxu0 0
        %1420 = vmatprep.subr.bf16.mxu0 0
        %1421 = vmatpush1.bf16.xpose.msra.mxu0 0
        %1422 = vmatprep.subr.bf16.mxu0 0
        %1423 = vmatpush1.bf16.xpose.msra.mxu0 0
        %1424 = vmatprep.subr.bf16.mxu0 0
        %1425 = vmatpush1.bf16.xpose.msra.mxu0 0
        %1426 = vmatprep.subr.bf16.mxu0 0
        %1427 = vmatpush1.bf16.xpose.msra.mxu0 0
        %1428 = vmatprep.subr.bf16.mxu0 0
        %1429 = vmatpush1.bf16.xpose.msra.mxu0 0
        %1430 = vmatprep.subr.bf16.mxu0 0
        %1431 = vmatpush1.bf16.xpose.msra.mxu0 0
        %1432 = vmatprep.subr.bf16.mxu0 0
        %1433 = vmatpush1.bf16.xpose.msra.mxu0 0
        %1434 = vmatprep.subr.bf16.mxu0 0
        %1435 = vmatpush1.bf16.xpose.msra.mxu0 0
        %1436 = vmatprep.subr.bf16.mxu0 0
        %1437 = vmatpush1.bf16.xpose.msra.mxu0 0
        %1438 = vmatprep.subr.bf16.mxu0 0
        %1439 = vmatpush1.bf16.xpose.msra.mxu0 0
        %1440 = vmatprep.mubr.bf16.mxu0 0
        %1441 = vmatmul.mubr.bf16.gmra.mrb[0].mxu0 %v1403
        %v1442 = vpop.f32.mrb[0].mxu0
        %v1443 = vadd.f32 0.0, %v1442
        %v1444 = vpop.f32.mrb[0].mxu0
        %v1445 = vpop.f32.mrb[0].mxu0
        %v1446 = vpop.f32.mrb[0].mxu0
        %1447 = vdwg.mxu0
        %v1448 = vmul.f32 %v1443, 0.35355338
        %v1449 = vmax.f32 %v1448, -5.0
        %v1450 = vmin.f32 %v1449, 5.0
        %v1451 = vadd.f32 %v1450, %v1107
        %s1452 = scalar_lea.vmem [#allocation2], 16
        %1453 = vst.msk [vmem:[%s1452] sm:$0xff] %vm1137, %v1451
        %v1454 = vsel %vm1137, %v1451, -inf
        %1455 = vmax.xlane.f32.xlu0 %v1454
        %v1456 = vpop.xlane.xlu0 %1455
        %v1457 = vsub.f32 %v1451, %v1456
        %v1458 = vmul.f32 %v1457, 1.442695
        %v1459 = vpow.pop %v1458
        %v1460 = vsel %vm1137, %v1459, 0.0
        %1461 = vadd.xlane.f32.xlu0 %v1460
        %v1462 = vpop.xlane.xlu0 %1461
        %v1463 = vrcp.pop %v1462
        %v1464 = vmul.f32 %v1463, %v1159
        %v1465 = vpack.c.bf16 %v1459, %v1459
        %1466 = vrot.lane.b32.xlu0 %v1165, 80
        %v1467 = vpop.permute.xlu0 %1466
        %v1469 = vsel %vm1137, %v1465, 0
        %v1472 = vsel %vm1235, %v1467, 0
        %1474 = vmatprep.subr.bf16.mxu0 0
        %1475 = vmatpush1.bf16.msra.mxu0 %v1472
        %1476 = vmatprep.subr.bf16.mxu0 0
        %1477 = vmatpush1.bf16.msra.mxu0 0
        %1478 = vmatprep.subr.bf16.mxu0 0
        %1479 = vmatpush1.bf16.msra.mxu0 0
        %1480 = vmatprep.subr.bf16.mxu0 0
        %1481 = vmatpush1.bf16.msra.mxu0 0
        %1482 = vmatprep.subr.bf16.mxu0 0
        %1483 = vmatpush1.bf16.msra.mxu0 0
        %1484 = vmatprep.subr.bf16.mxu0 0
        %1485 = vmatpush1.bf16.msra.mxu0 0
        %1486 = vmatprep.subr.bf16.mxu0 0
        %1487 = vmatpush1.bf16.msra.mxu0 0
        %1488 = vmatprep.subr.bf16.mxu0 0
        %1489 = vmatpush1.bf16.msra.mxu0 0
        %1490 = vmatprep.subr.bf16.mxu0 0
        %1491 = vmatpush1.bf16.msra.mxu0 0
        %1492 = vmatprep.subr.bf16.mxu0 0
        %1493 = vmatpush1.bf16.msra.mxu0 0
        %1494 = vmatprep.subr.bf16.mxu0 0
        %1495 = vmatpush1.bf16.msra.mxu0 0
        %1496 = vmatprep.subr.bf16.mxu0 0
        %1497 = vmatpush1.bf16.msra.mxu0 0
        %1498 = vmatprep.subr.bf16.mxu0 0
        %1499 = vmatpush1.bf16.msra.mxu0 0
        %1500 = vmatprep.subr.bf16.mxu0 0
        %1501 = vmatpush1.bf16.msra.mxu0 0
        %1502 = vmatprep.subr.bf16.mxu0 0
        %1503 = vmatpush1.bf16.msra.mxu0 0
        %1504 = vmatprep.subr.bf16.mxu0 0
        %1505 = vmatpush1.bf16.msra.mxu0 0
        %1506 = vmatprep.mubr.bf16.mxu0 0
        %1507 = vmatmul.mubr.bf16.gmra.mrb[0].mxu0 %v1469
        %v1508 = vpop.f32.mrb[0].mxu0
        %v1509 = vadd.f32 0.0, %v1508
        %v1510 = vpop.f32.mrb[0].mxu0
        %v1511 = vpop.f32.mrb[0].mxu0
        %v1512 = vpop.f32.mrb[0].mxu0
        %1513 = vdwg.mxu0
        %v1514 = vmul.f32 %v1509, %v1464
        %1515 = vrot.lane.b32.xlu0 %v1164, 104
        %v1516 = vpop.permute.xlu0 %1515
        %1517 = vrot.lane.b32.xlu0 %v1165, 104
        %v1518 = vpop.permute.xlu0 %1517
        %v1520 = vsel %vm1137, %v1516, 0
        %v1523 = vsel %vm1137, %v1518, 0
        %1525 = vmatprep.subr.bf16.mxu0 0
        %1526 = vmatpush1.bf16.xpose.msra.mxu0 %v1523
        %1527 = vmatprep.subr.bf16.mxu0 0
        %1528 = vmatpush1.bf16.xpose.msra.mxu0 0
        %1529 = vmatprep.subr.bf16.mxu0 0
        %1530 = vmatpush1.bf16.xpose.msra.mxu0 0
        %1531 = vmatprep.subr.bf16.mxu0 0
        %1532 = vmatpush1.bf16.xpose.msra.mxu0 0
        %1533 = vmatprep.subr.bf16.mxu0 0
        %1534 = vmatpush1.bf16.xpose.msra.mxu0 0
        %1535 = vmatprep.subr.bf16.mxu0 0
        %1536 = vmatpush1.bf16.xpose.msra.mxu0 0
        %1537 = vmatprep.subr.bf16.mxu0 0
        %1538 = vmatpush1.bf16.xpose.msra.mxu0 0
        %1539 = vmatprep.subr.bf16.mxu0 0
        %1540 = vmatpush1.bf16.xpose.msra.mxu0 0
        %1541 = vmatprep.subr.bf16.mxu0 0
        %1542 = vmatpush1.bf16.xpose.msra.mxu0 0
        %1543 = vmatprep.subr.bf16.mxu0 0
        %1544 = vmatpush1.bf16.xpose.msra.mxu0 0
        %1545 = vmatprep.subr.bf16.mxu0 0
        %1546 = vmatpush1.bf16.xpose.msra.mxu0 0
        %1547 = vmatprep.subr.bf16.mxu0 0
        %1548 = vmatpush1.bf16.xpose.msra.mxu0 0
        %1549 = vmatprep.subr.bf16.mxu0 0
        %1550 = vmatpush1.bf16.xpose.msra.mxu0 0
        %1551 = vmatprep.subr.bf16.mxu0 0
        %1552 = vmatpush1.bf16.xpose.msra.mxu0 0
        %1553 = vmatprep.subr.bf16.mxu0 0
        %1554 = vmatpush1.bf16.xpose.msra.mxu0 0
        %1555 = vmatprep.subr.bf16.mxu0 0
        %1556 = vmatpush1.bf16.xpose.msra.mxu0 0
        %1557 = vmatprep.mubr.bf16.mxu0 0
        %1558 = vmatmul.mubr.bf16.gmra.mrb[0].mxu0 %v1520
        %v1559 = vpop.f32.mrb[0].mxu0
        %v1560 = vadd.f32 0.0, %v1559
        %v1561 = vpop.f32.mrb[0].mxu0
        %v1562 = vpop.f32.mrb[0].mxu0
        %v1563 = vpop.f32.mrb[0].mxu0
        %1564 = vdwg.mxu0
        %v1565 = vmul.f32 %v1560, 0.35355338
        %v1566 = vmax.f32 %v1565, -5.0
        %v1567 = vmin.f32 %v1566, 5.0
        %v1568 = vadd.f32 %v1567, %v1108
        %s1569 = scalar_lea.vmem [#allocation2], 24
        %1570 = vst.msk [vmem:[%s1569] sm:$0xff] %vm1137, %v1568
        %v1571 = vsel %vm1137, %v1568, -inf
        %1572 = vmax.xlane.f32.xlu0 %v1571
        %v1573 = vpop.xlane.xlu0 %1572
        %v1574 = vsub.f32 %v1568, %v1573
        %v1575 = vmul.f32 %v1574, 1.442695
        %v1576 = vpow.pop %v1575
        %v1577 = vsel %vm1137, %v1576, 0.0
        %1578 = vadd.xlane.f32.xlu0 %v1577
        %v1579 = vpop.xlane.xlu0 %1578
        %v1580 = vrcp.pop %v1579
        %v1581 = vmul.f32 %v1580, %v1161
        %v1582 = vpack.c.bf16 %v1576, %v1576
        %1583 = vrot.lane.b32.xlu0 %v1165, 72
        %v1584 = vpop.permute.xlu0 %1583
        %v1586 = vsel %vm1137, %v1582, 0
        %v1589 = vsel %vm1235, %v1584, 0
        %1591 = vmatprep.subr.bf16.mxu0 0
        %1592 = vmatpush1.bf16.msra.mxu0 %v1589
        %1593 = vmatprep.subr.bf16.mxu0 0
        %1594 = vmatpush1.bf16.msra.mxu0 0
        %1595 = vmatprep.subr.bf16.mxu0 0
        %1596 = vmatpush1.bf16.msra.mxu0 0
        %1597 = vmatprep.subr.bf16.mxu0 0
        %1598 = vmatpush1.bf16.msra.mxu0 0
        %1599 = vmatprep.subr.bf16.mxu0 0
        %1600 = vmatpush1.bf16.msra.mxu0 0
        %1601 = vmatprep.subr.bf16.mxu0 0
        %1602 = vmatpush1.bf16.msra.mxu0 0
        %1603 = vmatprep.subr.bf16.mxu0 0
        %1604 = vmatpush1.bf16.msra.mxu0 0
        %1605 = vmatprep.subr.bf16.mxu0 0
        %1606 = vmatpush1.bf16.msra.mxu0 0
        %1607 = vmatprep.subr.bf16.mxu0 0
        %1608 = vmatpush1.bf16.msra.mxu0 0
        %1609 = vmatprep.subr.bf16.mxu0 0
        %1610 = vmatpush1.bf16.msra.mxu0 0
        %1611 = vmatprep.subr.bf16.mxu0 0
        %1612 = vmatpush1.bf16.msra.mxu0 0
        %1613 = vmatprep.subr.bf16.mxu0 0
        %1614 = vmatpush1.bf16.msra.mxu0 0
        %1615 = vmatprep.subr.bf16.mxu0 0
        %1616 = vmatpush1.bf16.msra.mxu0 0
        %1617 = vmatprep.subr.bf16.mxu0 0
        %1618 = vmatpush1.bf16.msra.mxu0 0
        %1619 = vmatprep.subr.bf16.mxu0 0
        %1620 = vmatpush1.bf16.msra.mxu0 0
        %1621 = vmatprep.subr.bf16.mxu0 0
        %1622 = vmatpush1.bf16.msra.mxu0 0
        %1623 = vmatprep.mubr.bf16.mxu0 0
        %1624 = vmatmul.mubr.bf16.gmra.mrb[0].mxu0 %v1586
        %v1625 = vpop.f32.mrb[0].mxu0
        %v1626 = vadd.f32 0.0, %v1625
        %v1627 = vpop.f32.mrb[0].mxu0
        %v1628 = vpop.f32.mrb[0].mxu0
        %v1629 = vpop.f32.mrb[0].mxu0
        %1630 = vdwg.mxu0
        %v1631 = vmul.f32 %v1626, %v1581
        %1633 = vrot.lane.b32.xlu0 %v1397, 8
        %v1634 = vpop.permute.xlu0 %1633
        %1637 = vrot.lane.b32.xlu0 %v1514, 16
        %v1638 = vpop.permute.xlu0 %1637
        %1641 = vrot.lane.b32.xlu0 %v1631, 24
        %v1642 = vpop.permute.xlu0 %1641
        %v1644 = vsel %vm1137, %v1279, %v1634
        %vm1645 = vcmask 130048
        %v1646 = vsel %vm1645, %v1644, %v1638
        %vm1647 = vcmask 195584
        %v1648 = vsel %vm1647, %v1646, %v1642
        %v1649 = vld [vmem:[%s7] sm:$0xf]
        %v1650 = vld [vmem:[%s7 + $0x4] sm:$0xf]
        %v1651 = vld [vmem:[%s7 + $0x8] sm:$0xf]
        %v1652 = vld [vmem:[%s7 + $0xc] sm:$0xf]
        %v1653 = vpack.c.bf16 %v1648, %v1648
        %v1658 = vunpack.c.l.b16 %v1649
        %v1659 = vunpack.c.l.b16 %v1650
        %v1660 = vunpack.c.l.b16 %v1651
        %v1661 = vunpack.c.l.b16 %v1652
        %v1662 = vpack.c.b16 %v1659, %v1658
        %v1663 = vpack.c.b16 %v1661, %v1660
        %v1667 = vsel %vm761, %v1653, 0
        %1669 = vmatprep.subr.bf16.mxu0 0
        %1670 = vmatpush1.bf16.msra.mxu0 %v1662
        %1671 = vmatprep.subr.bf16.mxu0 0
        %1672 = vmatpush1.bf16.msra.mxu0 %v1663
        %1673 = vmatprep.subr.bf16.mxu0 0
        %1674 = vmatpush1.bf16.msra.mxu0 0
        %1675 = vmatprep.subr.bf16.mxu0 0
        %1676 = vmatpush1.bf16.msra.mxu0 0
        %1677 = vmatprep.subr.bf16.mxu0 0
        %1678 = vmatpush1.bf16.msra.mxu0 0
        %1679 = vmatprep.subr.bf16.mxu0 0
        %1680 = vmatpush1.bf16.msra.mxu0 0
        %1681 = vmatprep.subr.bf16.mxu0 0
        %1682 = vmatpush1.bf16.msra.mxu0 0
        %1683 = vmatprep.subr.bf16.mxu0 0
        %1684 = vmatpush1.bf16.msra.mxu0 0
        %1685 = vmatprep.subr.bf16.mxu0 0
        %1686 = vmatpush1.bf16.msra.mxu0 0
        %1687 = vmatprep.subr.bf16.mxu0 0
        %1688 = vmatpush1.bf16.msra.mxu0 0
        %1689 = vmatprep.subr.bf16.mxu0 0
        %1690 = vmatpush1.bf16.msra.mxu0 0
        %1691 = vmatprep.subr.bf16.mxu0 0
        %1692 = vmatpush1.bf16.msra.mxu0 0
        %1693 = vmatprep.subr.bf16.mxu0 0
        %1694 = vmatpush1.bf16.msra.mxu0 0
        %1695 = vmatprep.subr.bf16.mxu0 0
        %1696 = vmatpush1.bf16.msra.mxu0 0
        %1697 = vmatprep.subr.bf16.mxu0 0
        %1698 = vmatpush1.bf16.msra.mxu0 0
        %1699 = vmatprep.subr.bf16.mxu0 0
        %1700 = vmatpush1.bf16.msra.mxu0 0
        %1701 = vmatprep.mubr.bf16.mxu0 0
        %1702 = vmatmul.mubr.bf16.gmra.mrb[0].mxu0 %v1667
        %v1703 = vpop.f32.mrb[0].mxu0
        %v1704 = vadd.f32 0.0, %v1703
        %v1705 = vpop.f32.mrb[0].mxu0
        %v1706 = vpop.f32.mrb[0].mxu0
        %v1707 = vpop.f32.mrb[0].mxu0
        %1708 = vdwg.mxu0
        %v1709 = vld [vmem:[%s736] sm:$0xff]
        %v1710 = vadd.f32 %v1709, %v1704
        %v1711 = vld [vmem:[#allocation11] sm:$0x1]
        %v1712 = vld [vmem:[%s10] sm:$0x1]
        %v1713 = vsel %vm761, %v1710, 0.0
        %1714 = vadd.xlane.f32.xlu0 %v1713
        %v1715 = vpop.xlane.xlu0 %1714
        %v1716 = vmul.f32 %v1715, %v786
        %v1717 = vsub.f32 %v1710, %v1716
        %v1718 = vmul.f32 %v1717, %v1717
        %v1719 = vsel %vm761, %v1718, 0.0
        %1720 = vadd.xlane.f32.xlu0 %v1719
        %v1721 = vpop.xlane.xlu0 %1720
        %v1722 = vmul.f32 %v1721, %v786
        %v1723 = vadd.f32 %v1722, 1e-05
        %v1724 = vrsqrt.pop %v1723
        %v1725 = vmul.f32 %v1717, %v1724
        %v1727 = vlaneseq
        %v1728 = vshrl.u32 %v1727, 7
        %v1729 = vsub.s32 0, %v1728
        %v1730 = vrot.slane %v1711, %v1729
        %v1732 = vmul.f32 %v1725, %v1730
        %v1734 = vlaneseq
        %v1735 = vshrl.u32 %v1734, 7
        %v1736 = vsub.s32 0, %v1735
        %v1737 = vrot.slane %v1712, %v1736
        %v1739 = vadd.f32 %v1732, %v1737
        %v1740 = vld [vmem:[%s11] sm:$0xf]
        %v1741 = vld [vmem:[%s11 + $0x4] sm:$0xf]
        %v1742 = vld [vmem:[%s11 + $0x8] sm:$0xf]
        %v1743 = vld [vmem:[%s11 + $0xc] sm:$0xf]
        %v1744 = vpack.c.bf16 %v1739, %v1739
        %v1749 = vunpack.c.l.b16 %v1740
        %v1750 = vunpack.c.l.b16 %v1741
        %v1751 = vunpack.c.l.b16 %v1742
        %v1752 = vunpack.c.l.b16 %v1743
        %v1753 = vpack.c.b16 %v1750, %v1749
        %v1754 = vpack.c.b16 %v1752, %v1751
        %v1758 = vsel %vm761, %v1744, 0
        %1760 = vmatprep.subr.bf16.mxu0 0
        %1761 = vmatpush1.bf16.msra.mxu0 %v1753
        %1762 = vmatprep.subr.bf16.mxu0 0
        %1763 = vmatpush1.bf16.msra.mxu0 %v1754
        %1764 = vmatprep.subr.bf16.mxu0 0
        %1765 = vmatpush1.bf16.msra.mxu0 0
        %1766 = vmatprep.subr.bf16.mxu0 0
        %1767 = vmatpush1.bf16.msra.mxu0 0
        %1768 = vmatprep.subr.bf16.mxu0 0
        %1769 = vmatpush1.bf16.msra.mxu0 0
        %1770 = vmatprep.subr.bf16.mxu0 0
        %1771 = vmatpush1.bf16.msra.mxu0 0
        %1772 = vmatprep.subr.bf16.mxu0 0
        %1773 = vmatpush1.bf16.msra.mxu0 0
        %1774 = vmatprep.subr.bf16.mxu0 0
        %1775 = vmatpush1.bf16.msra.mxu0 0
        %1776 = vmatprep.subr.bf16.mxu0 0
        %1777 = vmatpush1.bf16.msra.mxu0 0
        %1778 = vmatprep.subr.bf16.mxu0 0
        %1779 = vmatpush1.bf16.msra.mxu0 0
        %1780 = vmatprep.subr.bf16.mxu0 0
        %1781 = vmatpush1.bf16.msra.mxu0 0
        %1782 = vmatprep.subr.bf16.mxu0 0
        %1783 = vmatpush1.bf16.msra.mxu0 0
        %1784 = vmatprep.subr.bf16.mxu0 0
        %1785 = vmatpush1.bf16.msra.mxu0 0
        %1786 = vmatprep.subr.bf16.mxu0 0
        %1787 = vmatpush1.bf16.msra.mxu0 0
        %1788 = vmatprep.subr.bf16.mxu0 0
        %1789 = vmatpush1.bf16.msra.mxu0 0
        %1790 = vmatprep.subr.bf16.mxu0 0
        %1791 = vmatpush1.bf16.msra.mxu0 0
        %1792 = vmatprep.mubr.bf16.mxu0 0
        %1793 = vmatmul.mubr.bf16.gmra.mrb[0].mxu0 %v1758
        %v1794 = vpop.f32.mrb[0].mxu0
        %v1795 = vadd.f32 0.0, %v1794
        %v1796 = vpop.f32.mrb[0].mxu0
        %v1797 = vpop.f32.mrb[0].mxu0
        %v1798 = vpop.f32.mrb[0].mxu0
        %1799 = vdwg.mxu0
        %v1800 = vmax.f32 %v1795, 0.0
        %v1801 = vld [vmem:[%s12] sm:$0xf]
        %v1802 = vld [vmem:[%s12 + $0x4] sm:$0xf]
        %v1803 = vld [vmem:[%s12 + $0x8] sm:$0xf]
        %v1804 = vld [vmem:[%s12 + $0xc] sm:$0xf]
        %v1805 = vld [vmem:[%s12 + $0x10] sm:$0xf]
        %v1806 = vld [vmem:[%s12 + $0x14] sm:$0xf]
        %v1807 = vld [vmem:[%s12 + $0x18] sm:$0xf]
        %v1808 = vld [vmem:[%s12 + $0x1c] sm:$0xf]
        %v1809 = vpack.c.bf16 %v1800, %v1800
        %v1818 = vunpack.c.l.b16 %v1801
        %v1819 = vunpack.c.l.b16 %v1802
        %v1820 = vunpack.c.l.b16 %v1803
        %v1821 = vunpack.c.l.b16 %v1804
        %v1822 = vunpack.c.l.b16 %v1805
        %v1823 = vunpack.c.l.b16 %v1806
        %v1824 = vunpack.c.l.b16 %v1807
        %v1825 = vunpack.c.l.b16 %v1808
        %v1826 = vpack.c.b16 %v1819, %v1818
        %v1827 = vpack.c.b16 %v1821, %v1820
        %v1828 = vpack.c.b16 %v1823, %v1822
        %v1829 = vpack.c.b16 %v1825, %v1824
        %vm1834 = vcmask 523264
        %v1836 = vsel %vm1834, %v1809, 0
        %1838 = vmatprep.subr.bf16.mxu0 0
        %1839 = vmatpush1.bf16.msra.mxu0 %v1826
        %1840 = vmatprep.subr.bf16.mxu0 0
        %1841 = vmatpush1.bf16.msra.mxu0 %v1827
        %1842 = vmatprep.subr.bf16.mxu0 0
        %1843 = vmatpush1.bf16.msra.mxu0 %v1828
        %1844 = vmatprep.subr.bf16.mxu0 0
        %1845 = vmatpush1.bf16.msra.mxu0 %v1829
        %1846 = vmatprep.subr.bf16.mxu0 0
        %1847 = vmatpush1.bf16.msra.mxu0 0
        %1848 = vmatprep.subr.bf16.mxu0 0
        %1849 = vmatpush1.bf16.msra.mxu0 0
        %1850 = vmatprep.subr.bf16.mxu0 0
        %1851 = vmatpush1.bf16.msra.mxu0 0
        %1852 = vmatprep.subr.bf16.mxu0 0
        %1853 = vmatpush1.bf16.msra.mxu0 0
        %1854 = vmatprep.subr.bf16.mxu0 0
        %1855 = vmatpush1.bf16.msra.mxu0 0
        %1856 = vmatprep.subr.bf16.mxu0 0
        %1857 = vmatpush1.bf16.msra.mxu0 0
        %1858 = vmatprep.subr.bf16.mxu0 0
        %1859 = vmatpush1.bf16.msra.mxu0 0
        %1860 = vmatprep.subr.bf16.mxu0 0
        %1861 = vmatpush1.bf16.msra.mxu0 0
        %1862 = vmatprep.subr.bf16.mxu0 0
        %1863 = vmatpush1.bf16.msra.mxu0 0
        %1864 = vmatprep.subr.bf16.mxu0 0
        %1865 = vmatpush1.bf16.msra.mxu0 0
        %1866 = vmatprep.subr.bf16.mxu0 0
        %1867 = vmatpush1.bf16.msra.mxu0 0
        %1868 = vmatprep.subr.bf16.mxu0 0
        %1869 = vmatpush1.bf16.msra.mxu0 0
        %1870 = vmatprep.mubr.bf16.mxu0 0
        %1871 = vmatmul.mubr.bf16.gmra.mrb[0].mxu0 %v1836
        %v1872 = vpop.f32.mrb[0].mxu0
        %v1873 = vadd.f32 0.0, %v1872
        %v1874 = vpop.f32.mrb[0].mxu0
        %v1875 = vpop.f32.mrb[0].mxu0
        %v1876 = vpop.f32.mrb[0].mxu0
        %1877 = vdwg.mxu0
        %v1878 = vmax.f32 %v1873, 0.0
        %v1879 = vadd.f32 %v1710, %v1878
        %1880 = vst.msk [vmem:[%s722] sm:$0xff] %vm761, %v1879
        %v1881 = vld [vmem:[%s638] sm:$0xff]
        %v1882 = vld [vmem:[%s638 + $0x8] sm:$0xff]
        %v1883 = vld [vmem:[%s638 + $0x10] sm:$0xff]
        %v1884 = vld [vmem:[%s638 + $0x18] sm:$0xff]
        %v1885 = vld [vmem:[%s638 + $0x20] sm:$0xff]
        %v1886 = vld [vmem:[%s638 + $0x28] sm:$0xff]
        %v1887 = vld [vmem:[%s638 + $0x30] sm:$0xff]
        %v1888 = vld [vmem:[%s638 + $0x38] sm:$0xff]
        %v1889 = vld [vmem:[#allocation2] sm:$0xff]
        %v1890 = vld [vmem:[#allocation2 + $0x8] sm:$0xff]
        %v1891 = vld [vmem:[#allocation2 + $0x10] sm:$0xff]
        %v1892 = vld [vmem:[#allocation2 + $0x18] sm:$0xff]
        %v1893 = vcombine.low %v1889, %v1891
        %v1894 = vcombine.high %v1889, %v1891
        %v1896 = vunpack.c.l.s4 1983009808
        %v1897 = vunpack.c.0.s8 %v1896
        %v1898 = vlaneseq
        %v1899 = vshrl.u32 %v1898, 7
        %v1900 = vsub.s32 %v1897, %v1899
        %v1901 = vrot.slane %v1893, %v1900
        %v1903 = vunpack.c.l.s4 1983009808
        %v1904 = vunpack.c.0.s8 %v1903
        %v1905 = vlaneseq
        %v1906 = vshrl.u32 %v1905, 7
        %v1907 = vsub.s32 %v1904, %v1906
        %v1908 = vrot.slane %v1894, %v1907
        %v1909 = vcombine.low %v1890, %v1892
        %v1910 = vcombine.high %v1890, %v1892
        %v1912 = vunpack.c.l.s4 1983009808
        %v1913 = vunpack.c.0.s8 %v1912
        %v1914 = vlaneseq
        %v1915 = vshrl.u32 %v1914, 7
        %v1916 = vsub.s32 %v1913, %v1915
        %v1917 = vrot.slane %v1909, %v1916
        %v1919 = vunpack.c.l.s4 1983009808
        %v1920 = vunpack.c.0.s8 %v1919
        %v1921 = vlaneseq
        %v1922 = vshrl.u32 %v1921, 7
        %v1923 = vsub.s32 %v1920, %v1922
        %v1924 = vrot.slane %v1910, %v1923
        %v1925 = vcombine.low %v1901, %v1917
        %v1926 = vcombine.high %v1901, %v1917
        %v1928 = vunpack.c.l.s4 1934713408
        %v1929 = vunpack.c.0.s8 %v1928
        %v1930 = vlaneseq
        %v1931 = vshrl.u32 %v1930, 7
        %v1932 = vsub.s32 %v1929, %v1931
        %v1933 = vrot.slane %v1925, %v1932
        %v1935 = vunpack.c.l.s4 1934713408
        %v1936 = vunpack.c.0.s8 %v1935
        %v1937 = vlaneseq
        %v1938 = vshrl.u32 %v1937, 7
        %v1939 = vsub.s32 %v1936, %v1938
        %v1940 = vrot.slane %v1926, %v1939
        %v1941 = vcombine.low %v1908, %v1924
        %v1942 = vcombine.high %v1908, %v1924
        %v1944 = vunpack.c.l.s4 1934713408
        %v1945 = vunpack.c.0.s8 %v1944
        %v1946 = vlaneseq
        %v1947 = vshrl.u32 %v1946, 7
        %v1948 = vsub.s32 %v1945, %v1947
        %v1949 = vrot.slane %v1941, %v1948
        %v1951 = vunpack.c.l.s4 1934713408
        %v1952 = vunpack.c.0.s8 %v1951
        %v1953 = vlaneseq
        %v1954 = vshrl.u32 %v1953, 7
        %v1955 = vsub.s32 %v1952, %v1954
        %v1956 = vrot.slane %v1942, %v1955
        %v1957 = vcombine.high %v1933, 0.0
        %v1958 = vcombine.high %v1940, 0.0
        %v1959 = vcombine.high %v1949, 0.0
        %v1960 = vcombine.high %v1956, 0.0
        %1962 = vrot.lane.b32.xlu0 %v1957, 8
        %v1963 = vpop.permute.xlu0 %1962
        %1966 = vrot.lane.b32.xlu0 %v1940, 16
        %v1967 = vpop.permute.xlu0 %1966
        %1970 = vrot.lane.b32.xlu0 %v1958, 24
        %v1971 = vpop.permute.xlu0 %1970
        %1974 = vrot.lane.b32.xlu0 %v1949, 32
        %v1975 = vpop.permute.xlu0 %1974
        %1978 = vrot.lane.b32.xlu0 %v1959, 40
        %v1979 = vpop.permute.xlu0 %1978
        %1982 = vrot.lane.b32.xlu0 %v1956, 48
        %v1983 = vpop.permute.xlu0 %1982
        %1986 = vrot.lane.b32.xlu0 %v1960, 56
        %v1987 = vpop.permute.xlu0 %1986
        %v1989 = vsel %vm1137, %v1933, %v1963
        %v1990 = vsel %vm1645, %v1989, %v1967
        %v1991 = vsel %vm1647, %v1990, %v1971
        %v1992 = vsel %vm761, %v1991, %v1975
        %vm1993 = vcmask 326656
        %v1994 = vsel %vm1993, %v1992, %v1979
        %vm1995 = vcmask 392192
        %v1996 = vsel %vm1995, %v1994, %v1983
        %vm1997 = vcmask 457728
        %v1998 = vsel %vm1997, %v1996, %v1987
        %v1999 = vpack.c.bf16 %v1998, %v1998
        %v2000 = vld [vmem:[%s8] sm:$0x3]
        %2001 = vxpose.xlu0.c.b16.start [1/8] %v1999, 128
        %2002 = vxpose.xlu0.c.b16.cont [2/8] 0, 128
        %2003 = vxpose.xlu0.c.b16.cont [3/8] 0, 128
        %2004 = vxpose.xlu0.c.b16.cont [4/8] 0, 128
        %2005 = vxpose.xlu0.c.b16.cont [5/8] 0, 128
        %2006 = vxpose.xlu0.c.b16.cont [6/8] 0, 128
        %2007 = vxpose.xlu0.c.b16.cont [7/8] 0, 128
        %2008 = vxpose.xlu0.c.b16.end [8/8] 0, 128
        %v2009 = vpop.trf.xlu0
        %v2010 = vpop.trf.xlu0
        %v2011 = vpop.trf.xlu0
        %v2012 = vpop.trf.xlu0
        %v2013 = vpop.trf.xlu0
        %v2014 = vpop.trf.xlu0
        %v2015 = vpop.trf.xlu0
        %v2016 = vpop.trf.xlu0
        %vm2017 = vcmask 31744
        %v2019 = vsel %vm2017, %v2009, 0
        %v2022 = vsel %vm2017, %v2010, 0
        %v2025 = vsel %vm2017, %v2011, 0
        %v2028 = vsel %vm2017, %v2012, 0
        %vm2030 = vcmask 1041408
        %v2032 = vsel %vm2030, %v2000, 0
        %2034 = vmatprep.subr.bf16.mxu0 0
        %2035 = vmatpush1.bf16.msra.mxu0 %v2032
        %2036 = vmatprep.subr.bf16.mxu0 0
        %2037 = vmatpush1.bf16.msra.mxu0 0
        %2038 = vmatprep.subr.bf16.mxu0 0
        %2039 = vmatpush1.bf16.msra.mxu0 0
        %2040 = vmatprep.subr.bf16.mxu0 0
        %2041 = vmatpush1.bf16.msra.mxu0 0
        %2042 = vmatprep.subr.bf16.mxu0 0
        %2043 = vmatpush1.bf16.msra.mxu0 0
        %2044 = vmatprep.subr.bf16.mxu0 0
        %2045 = vmatpush1.bf16.msra.mxu0 0
        %2046 = vmatprep.subr.bf16.mxu0 0
        %2047 = vmatpush1.bf16.msra.mxu0 0
        %2048 = vmatprep.subr.bf16.mxu0 0
        %2049 = vmatpush1.bf16.msra.mxu0 0
        %2050 = vmatprep.subr.bf16.mxu0 0
        %2051 = vmatpush1.bf16.msra.mxu0 0
        %2052 = vmatprep.subr.bf16.mxu0 0
        %2053 = vmatpush1.bf16.msra.mxu0 0
        %2054 = vmatprep.subr.bf16.mxu0 0
        %2055 = vmatpush1.bf16.msra.mxu0 0
        %2056 = vmatprep.subr.bf16.mxu0 0
        %2057 = vmatpush1.bf16.msra.mxu0 0
        %2058 = vmatprep.subr.bf16.mxu0 0
        %2059 = vmatpush1.bf16.msra.mxu0 0
        %2060 = vmatprep.subr.bf16.mxu0 0
        %2061 = vmatpush1.bf16.msra.mxu0 0
        %2062 = vmatprep.subr.bf16.mxu0 0
        %2063 = vmatpush1.bf16.msra.mxu0 0
        %2064 = vmatprep.subr.bf16.mxu0 0
        %2065 = vmatpush1.bf16.msra.mxu0 0
        %2066 = vmatprep.mubr.bf16.mxu0 0
        %2067 = vmatmul.mubr.bf16.gmra.mrb[0].mxu0 %v2019
        %v2068 = vpop.f32.mrb[0].mxu0
        %v2069 = vadd.f32 0.0, %v2068
        %v2070 = vpop.f32.mrb[0].mxu0
        %v2071 = vpop.f32.mrb[0].mxu0
        %v2072 = vadd.f32 0.0, %v2071
        %v2073 = vpop.f32.mrb[0].mxu0
        %2074 = vmatprep.mubr.bf16.mxu0 0
        %2075 = vmatmul.mubr.bf16.gmra.mrb[0].mxu0 %v2022
        %v2076 = vpop.f32.mrb[0].mxu0
        %v2077 = vadd.f32 0.0, %v2076
        %v2078 = vpop.f32.mrb[0].mxu0
        %v2079 = vpop.f32.mrb[0].mxu0
        %v2080 = vadd.f32 0.0, %v2079
        %v2081 = vpop.f32.mrb[0].mxu0
        %2082 = vmatprep.mubr.bf16.mxu0 0
        %2083 = vmatmul.mubr.bf16.gmra.mrb[0].mxu0 %v2025
        %v2084 = vpop.f32.mrb[0].mxu0
        %v2085 = vadd.f32 0.0, %v2084
        %v2086 = vpop.f32.mrb[0].mxu0
        %v2087 = vpop.f32.mrb[0].mxu0
        %v2088 = vadd.f32 0.0, %v2087
        %v2089 = vpop.f32.mrb[0].mxu0
        %2090 = vmatprep.mubr.bf16.mxu0 0
        %2091 = vmatmul.mubr.bf16.gmra.mrb[0].mxu0 %v2028
        %v2092 = vpop.f32.mrb[0].mxu0
        %v2093 = vadd.f32 0.0, %v2092
        %v2094 = vpop.f32.mrb[0].mxu0
        %v2095 = vpop.f32.mrb[0].mxu0
        %v2096 = vadd.f32 0.0, %v2095
        %v2097 = vpop.f32.mrb[0].mxu0
        %2098 = vdwg.mxu0
        %v2099 = vadd.f32 %v1881, %v2069
        %v2100 = vadd.f32 %v1882, %v2072
        %v2101 = vadd.f32 %v1883, %v2077
        %v2102 = vadd.f32 %v1884, %v2080
        %v2103 = vadd.f32 %v1885, %v2085
        %v2104 = vadd.f32 %v1886, %v2088
        %v2105 = vadd.f32 %v1887, %v2093
        %v2106 = vadd.f32 %v1888, %v2096
        %v2107 = vld [vmem:[%s13] sm:$0x1]
        %v2108 = vld [vmem:[%s14] sm:$0x1]
        %v2109 = vsel %vm761, %v2099, 0.0
        %2110 = vadd.xlane.f32.xlu0 %v2109
        %v2111 = vpop.xlane.xlu0 %2110
        %v2112 = vsel %vm761, %v2100, 0.0
        %2113 = vadd.xlane.f32.xlu0 %v2112
        %v2114 = vpop.xlane.xlu0 %2113
        %v2115 = vsel %vm761, %v2101, 0.0
        %2116 = vadd.xlane.f32.xlu0 %v2115
        %v2117 = vpop.xlane.xlu0 %2116
        %v2118 = vsel %vm761, %v2102, 0.0
        %2119 = vadd.xlane.f32.xlu0 %v2118
        %v2120 = vpop.xlane.xlu0 %2119
        %v2121 = vsel %vm761, %v2103, 0.0
        %2122 = vadd.xlane.f32.xlu0 %v2121
        %v2123 = vpop.xlane.xlu0 %2122
        %v2124 = vsel %vm761, %v2104, 0.0
        %2125 = vadd.xlane.f32.xlu0 %v2124
        %v2126 = vpop.xlane.xlu0 %2125
        %v2127 = vsel %vm761, %v2105, 0.0
        %2128 = vadd.xlane.f32.xlu0 %v2127
        %v2129 = vpop.xlane.xlu0 %2128
        %v2130 = vsel %vm761, %v2106, 0.0
        %2131 = vadd.xlane.f32.xlu0 %v2130
        %v2132 = vpop.xlane.xlu0 %2131
        %v2133 = vmul.f32 %v2111, %v786
        %v2134 = vmul.f32 %v2114, %v786
        %v2135 = vmul.f32 %v2117, %v786
        %v2136 = vmul.f32 %v2120, %v786
        %v2137 = vmul.f32 %v2123, %v786
        %v2138 = vmul.f32 %v2126, %v786
        %v2139 = vmul.f32 %v2129, %v786
        %v2140 = vmul.f32 %v2132, %v786
        %v2141 = vsub.f32 %v2099, %v2133
        %v2142 = vsub.f32 %v2100, %v2134
        %v2143 = vsub.f32 %v2101, %v2135
        %v2144 = vsub.f32 %v2102, %v2136
        %v2145 = vsub.f32 %v2103, %v2137
        %v2146 = vsub.f32 %v2104, %v2138
        %v2147 = vsub.f32 %v2105, %v2139
        %v2148 = vsub.f32 %v2106, %v2140
        %v2149 = vmul.f32 %v2141, %v2141
        %v2150 = vmul.f32 %v2142, %v2142
        %v2151 = vmul.f32 %v2143, %v2143
        %v2152 = vmul.f32 %v2144, %v2144
        %v2153 = vmul.f32 %v2145, %v2145
        %v2154 = vmul.f32 %v2146, %v2146
        %v2155 = vmul.f32 %v2147, %v2147
        %v2156 = vmul.f32 %v2148, %v2148
        %v2157 = vsel %vm761, %v2149, 0.0
        %2158 = vadd.xlane.f32.xlu0 %v2157
        %v2159 = vpop.xlane.xlu0 %2158
        %v2160 = vsel %vm761, %v2150, 0.0
        %2161 = vadd.xlane.f32.xlu0 %v2160
        %v2162 = vpop.xlane.xlu0 %2161
        %v2163 = vsel %vm761, %v2151, 0.0
        %2164 = vadd.xlane.f32.xlu0 %v2163
        %v2165 = vpop.xlane.xlu0 %2164
        %v2166 = vsel %vm761, %v2152, 0.0
        %2167 = vadd.xlane.f32.xlu0 %v2166
        %v2168 = vpop.xlane.xlu0 %2167
        %v2169 = vsel %vm761, %v2153, 0.0
        %2170 = vadd.xlane.f32.xlu0 %v2169
        %v2171 = vpop.xlane.xlu0 %2170
        %v2172 = vsel %vm761, %v2154, 0.0
        %2173 = vadd.xlane.f32.xlu0 %v2172
        %v2174 = vpop.xlane.xlu0 %2173
        %v2175 = vsel %vm761, %v2155, 0.0
        %2176 = vadd.xlane.f32.xlu0 %v2175
        %v2177 = vpop.xlane.xlu0 %2176
        %v2178 = vsel %vm761, %v2156, 0.0
        %2179 = vadd.xlane.f32.xlu0 %v2178
        %v2180 = vpop.xlane.xlu0 %2179
        %v2181 = vmul.f32 %v2159, %v786
        %v2182 = vmul.f32 %v2162, %v786
        %v2183 = vmul.f32 %v2165, %v786
        %v2184 = vmul.f32 %v2168, %v786
        %v2185 = vmul.f32 %v2171, %v786
        %v2186 = vmul.f32 %v2174, %v786
        %v2187 = vmul.f32 %v2177, %v786
        %v2188 = vmul.f32 %v2180, %v786
        %v2189 = vadd.f32 %v2181, 1e-05
        %v2190 = vadd.f32 %v2182, 1e-05
        %v2191 = vadd.f32 %v2183, 1e-05
        %v2192 = vadd.f32 %v2184, 1e-05
        %v2193 = vadd.f32 %v2185, 1e-05
        %v2194 = vadd.f32 %v2186, 1e-05
        %v2195 = vadd.f32 %v2187, 1e-05
        %v2196 = vadd.f32 %v2188, 1e-05
        %v2197 = vrsqrt.pop %v2189
        %v2198 = vrsqrt.pop %v2190
        %v2199 = vrsqrt.pop %v2191
        %v2200 = vrsqrt.pop %v2192
        %v2201 = vrsqrt.pop %v2193
        %v2202 = vrsqrt.pop %v2194
        %v2203 = vrsqrt.pop %v2195
        %v2204 = vrsqrt.pop %v2196
        %v2205 = vmul.f32 %v2141, %v2197
        %v2206 = vmul.f32 %v2142, %v2198
        %v2207 = vmul.f32 %v2143, %v2199
        %v2208 = vmul.f32 %v2144, %v2200
        %v2209 = vmul.f32 %v2145, %v2201
        %v2210 = vmul.f32 %v2146, %v2202
        %v2211 = vmul.f32 %v2147, %v2203
        %v2212 = vmul.f32 %v2148, %v2204
        %v2214 = vlaneseq
        %v2215 = vshrl.u32 %v2214, 7
        %v2216 = vsub.s32 0, %v2215
        %v2217 = vrot.slane %v2107, %v2216
        %v2219 = vmul.f32 %v2205, %v2217
        %v2220 = vmul.f32 %v2206, %v2217
        %v2221 = vmul.f32 %v2207, %v2217
        %v2222 = vmul.f32 %v2208, %v2217
        %v2223 = vmul.f32 %v2209, %v2217
        %v2224 = vmul.f32 %v2210, %v2217
        %v2225 = vmul.f32 %v2211, %v2217
        %v2226 = vmul.f32 %v2212, %v2217
        %v2228 = vlaneseq
        %v2229 = vshrl.u32 %v2228, 7
        %v2230 = vsub.s32 0, %v2229
        %v2231 = vrot.slane %v2108, %v2230
        %v2233 = vadd.f32 %v2219, %v2231
        %v2234 = vadd.f32 %v2220, %v2231
        %v2235 = vadd.f32 %v2221, %v2231
        %v2236 = vadd.f32 %v2222, %v2231
        %v2237 = vadd.f32 %v2223, %v2231
        %v2238 = vadd.f32 %v2224, %v2231
        %v2239 = vadd.f32 %v2225, %v2231
        %v2240 = vadd.f32 %v2226, %v2231
        %v2241 = vld [vmem:[%s15] sm:$0xf]
        %v2242 = vld [vmem:[%s15 + $0x4] sm:$0xf]
        %v2243 = vld [vmem:[%s15 + $0x8] sm:$0xf]
        %v2244 = vld [vmem:[%s15 + $0xc] sm:$0xf]
        %v2245 = vpack.c.bf16 %v2234, %v2233
        %v2246 = vpack.c.bf16 %v2236, %v2235
        %v2247 = vpack.c.bf16 %v2238, %v2237
        %v2248 = vpack.c.bf16 %v2240, %v2239
        %v2253 = vunpack.c.l.b16 %v2241
        %v2254 = vunpack.c.l.b16 %v2242
        %v2255 = vunpack.c.l.b16 %v2243
        %v2256 = vunpack.c.l.b16 %v2244
        %v2257 = vpack.c.b16 %v2254, %v2253
        %v2258 = vpack.c.b16 %v2256, %v2255
        %v2262 = vsel %vm761, %v2245, 0
        %v2265 = vsel %vm761, %v2246, 0
        %v2268 = vsel %vm761, %v2247, 0
        %v2271 = vsel %vm761, %v2248, 0
        %2273 = vmatprep.subr.bf16.mxu0 0
        %2274 = vmatpush1.bf16.msra.mxu0 %v2257
        %2275 = vmatprep.subr.bf16.mxu0 0
        %2276 = vmatpush1.bf16.msra.mxu0 %v2258
        %2277 = vmatprep.subr.bf16.mxu0 0
        %2278 = vmatpush1.bf16.msra.mxu0 0
        %2279 = vmatprep.subr.bf16.mxu0 0
        %2280 = vmatpush1.bf16.msra.mxu0 0
        %2281 = vmatprep.subr.bf16.mxu0 0
        %2282 = vmatpush1.bf16.msra.mxu0 0
        %2283 = vmatprep.subr.bf16.mxu0 0
        %2284 = vmatpush1.bf16.msra.mxu0 0
        %2285 = vmatprep.subr.bf16.mxu0 0
        %2286 = vmatpush1.bf16.msra.mxu0 0
        %2287 = vmatprep.subr.bf16.mxu0 0
        %2288 = vmatpush1.bf16.msra.mxu0 0
        %2289 = vmatprep.subr.bf16.mxu0 0
        %2290 = vmatpush1.bf16.msra.mxu0 0
        %2291 = vmatprep.subr.bf16.mxu0 0
        %2292 = vmatpush1.bf16.msra.mxu0 0
        %2293 = vmatprep.subr.bf16.mxu0 0
        %2294 = vmatpush1.bf16.msra.mxu0 0
        %2295 = vmatprep.subr.bf16.mxu0 0
        %2296 = vmatpush1.bf16.msra.mxu0 0
        %2297 = vmatprep.subr.bf16.mxu0 0
        %2298 = vmatpush1.bf16.msra.mxu0 0
        %2299 = vmatprep.subr.bf16.mxu0 0
        %2300 = vmatpush1.bf16.msra.mxu0 0
        %2301 = vmatprep.subr.bf16.mxu0 0
        %2302 = vmatpush1.bf16.msra.mxu0 0
        %2303 = vmatprep.subr.bf16.mxu0 0
        %2304 = vmatpush1.bf16.msra.mxu0 0
        %2305 = vmatprep.mubr.bf16.mxu0 0
        %2306 = vmatmul.mubr.bf16.gmra.mrb[0].mxu0 %v2262
        %v2307 = vpop.f32.mrb[0].mxu0
        %v2308 = vadd.f32 0.0, %v2307
        %v2309 = vpop.f32.mrb[0].mxu0
        %v2310 = vpop.f32.mrb[0].mxu0
        %v2311 = vadd.f32 0.0, %v2310
        %v2312 = vpop.f32.mrb[0].mxu0
        %2313 = vmatprep.mubr.bf16.mxu0 0
        %2314 = vmatmul.mubr.bf16.gmra.mrb[0].mxu0 %v2265
        %v2315 = vpop.f32.mrb[0].mxu0
        %v2316 = vadd.f32 0.0, %v2315
        %v2317 = vpop.f32.mrb[0].mxu0
        %v2318 = vpop.f32.mrb[0].mxu0
        %v2319 = vadd.f32 0.0, %v2318
        %v2320 = vpop.f32.mrb[0].mxu0
        %2321 = vmatprep.mubr.bf16.mxu0 0
        %2322 = vmatmul.mubr.bf16.gmra.mrb[0].mxu0 %v2268
        %v2323 = vpop.f32.mrb[0].mxu0
        %v2324 = vadd.f32 0.0, %v2323
        %v2325 = vpop.f32.mrb[0].mxu0
        %v2326 = vpop.f32.mrb[0].mxu0
        %v2327 = vadd.f32 0.0, %v2326
        %v2328 = vpop.f32.mrb[0].mxu0
        %2329 = vmatprep.mubr.bf16.mxu0 0
        %2330 = vmatmul.mubr.bf16.gmra.mrb[0].mxu0 %v2271
        %v2331 = vpop.f32.mrb[0].mxu0
        %v2332 = vadd.f32 0.0, %v2331
        %v2333 = vpop.f32.mrb[0].mxu0
        %v2334 = vpop.f32.mrb[0].mxu0
        %v2335 = vadd.f32 0.0, %v2334
        %v2336 = vpop.f32.mrb[0].mxu0
        %2337 = vdwg.mxu0
        %v2338 = vmax.f32 %v2308, 0.0
        %v2339 = vmax.f32 %v2311, 0.0
        %v2340 = vmax.f32 %v2316, 0.0
        %v2341 = vmax.f32 %v2319, 0.0
        %v2342 = vmax.f32 %v2324, 0.0
        %v2343 = vmax.f32 %v2327, 0.0
        %v2344 = vmax.f32 %v2332, 0.0
        %v2345 = vmax.f32 %v2335, 0.0
        %v2346 = vld [vmem:[%s16] sm:$0xf]
        %v2347 = vld [vmem:[%s16 + $0x4] sm:$0xf]
        %v2348 = vld [vmem:[%s16 + $0x8] sm:$0xf]
        %v2349 = vld [vmem:[%s16 + $0xc] sm:$0xf]
        %v2350 = vld [vmem:[%s16 + $0x10] sm:$0xf]
        %v2351 = vld [vmem:[%s16 + $0x14] sm:$0xf]
        %v2352 = vld [vmem:[%s16 + $0x18] sm:$0xf]
        %v2353 = vld [vmem:[%s16 + $0x1c] sm:$0xf]
        %v2354 = vpack.c.bf16 %v2339, %v2338
        %v2355 = vpack.c.bf16 %v2341, %v2340
        %v2356 = vpack.c.bf16 %v2343, %v2342
        %v2357 = vpack.c.bf16 %v2345, %v2344
        %v2366 = vunpack.c.l.b16 %v2346
        %v2367 = vunpack.c.l.b16 %v2347
        %v2368 = vunpack.c.l.b16 %v2348
        %v2369 = vunpack.c.l.b16 %v2349
        %v2370 = vunpack.c.l.b16 %v2350
        %v2371 = vunpack.c.l.b16 %v2351
        %v2372 = vunpack.c.l.b16 %v2352
        %v2373 = vunpack.c.l.b16 %v2353
        %v2374 = vpack.c.b16 %v2367, %v2366
        %v2375 = vpack.c.b16 %v2369, %v2368
        %v2376 = vpack.c.b16 %v2371, %v2370
        %v2377 = vpack.c.b16 %v2373, %v2372
        %v2383 = vsel %vm1834, %v2354, 0
        %v2386 = vsel %vm1834, %v2355, 0
        %v2389 = vsel %vm1834, %v2356, 0
        %v2392 = vsel %vm1834, %v2357, 0
        %2394 = vmatprep.subr.bf16.mxu0 0
        %2395 = vmatpush1.bf16.msra.mxu0 %v2374
        %2396 = vmatprep.subr.bf16.mxu0 0
        %2397 = vmatpush1.bf16.msra.mxu0 %v2375
        %2398 = vmatprep.subr.bf16.mxu0 0
        %2399 = vmatpush1.bf16.msra.mxu0 %v2376
        %2400 = vmatprep.subr.bf16.mxu0 0
        %2401 = vmatpush1.bf16.msra.mxu0 %v2377
        %2402 = vmatprep.subr.bf16.mxu0 0
        %2403 = vmatpush1.bf16.msra.mxu0 0
        %2404 = vmatprep.subr.bf16.mxu0 0
        %2405 = vmatpush1.bf16.msra.mxu0 0
        %2406 = vmatprep.subr.bf16.mxu0 0
        %2407 = vmatpush1.bf16.msra.mxu0 0
        %2408 = vmatprep.subr.bf16.mxu0 0
        %2409 = vmatpush1.bf16.msra.mxu0 0
        %2410 = vmatprep.subr.bf16.mxu0 0
        %2411 = vmatpush1.bf16.msra.mxu0 0
        %2412 = vmatprep.subr.bf16.mxu0 0
        %2413 = vmatpush1.bf16.msra.mxu0 0
        %2414 = vmatprep.subr.bf16.mxu0 0
        %2415 = vmatpush1.bf16.msra.mxu0 0
        %2416 = vmatprep.subr.bf16.mxu0 0
        %2417 = vmatpush1.bf16.msra.mxu0 0
        %2418 = vmatprep.subr.bf16.mxu0 0
        %2419 = vmatpush1.bf16.msra.mxu0 0
        %2420 = vmatprep.subr.bf16.mxu0 0
        %2421 = vmatpush1.bf16.msra.mxu0 0
        %2422 = vmatprep.subr.bf16.mxu0 0
        %2423 = vmatpush1.bf16.msra.mxu0 0
        %2424 = vmatprep.subr.bf16.mxu0 0
        %2425 = vmatpush1.bf16.msra.mxu0 0
        %2426 = vmatprep.mubr.bf16.mxu0 0
        %2427 = vmatmul.mubr.bf16.gmra.mrb[0].mxu0 %v2383
        %v2428 = vpop.f32.mrb[0].mxu0
        %v2429 = vadd.f32 0.0, %v2428
        %v2430 = vpop.f32.mrb[0].mxu0
        %v2431 = vpop.f32.mrb[0].mxu0
        %v2432 = vadd.f32 0.0, %v2431
        %v2433 = vpop.f32.mrb[0].mxu0
        %2434 = vmatprep.mubr.bf16.mxu0 0
        %2435 = vmatmul.mubr.bf16.gmra.mrb[0].mxu0 %v2386
        %v2436 = vpop.f32.mrb[0].mxu0
        %v2437 = vadd.f32 0.0, %v2436
        %v2438 = vpop.f32.mrb[0].mxu0
        %v2439 = vpop.f32.mrb[0].mxu0
        %v2440 = vadd.f32 0.0, %v2439
        %v2441 = vpop.f32.mrb[0].mxu0
        %2442 = vmatprep.mubr.bf16.mxu0 0
        %2443 = vmatmul.mubr.bf16.gmra.mrb[0].mxu0 %v2389
        %v2444 = vpop.f32.mrb[0].mxu0
        %v2445 = vadd.f32 0.0, %v2444
        %v2446 = vpop.f32.mrb[0].mxu0
        %v2447 = vpop.f32.mrb[0].mxu0
        %v2448 = vadd.f32 0.0, %v2447
        %v2449 = vpop.f32.mrb[0].mxu0
        %2450 = vmatprep.mubr.bf16.mxu0 0
        %2451 = vmatmul.mubr.bf16.gmra.mrb[0].mxu0 %v2392
        %v2452 = vpop.f32.mrb[0].mxu0
        %v2453 = vadd.f32 0.0, %v2452
        %v2454 = vpop.f32.mrb[0].mxu0
        %v2455 = vpop.f32.mrb[0].mxu0
        %v2456 = vadd.f32 0.0, %v2455
        %v2457 = vpop.f32.mrb[0].mxu0
        %2458 = vdwg.mxu0
        %v2459 = vmax.f32 %v2429, 0.0
        %v2460 = vmax.f32 %v2432, 0.0
        %v2461 = vmax.f32 %v2437, 0.0
        %v2462 = vmax.f32 %v2440, 0.0
        %v2463 = vmax.f32 %v2445, 0.0
        %v2464 = vmax.f32 %v2448, 0.0
        %v2465 = vmax.f32 %v2453, 0.0
        %v2466 = vmax.f32 %v2456, 0.0
        %v2467 = vadd.f32 %v2099, %v2459
        %v2468 = vadd.f32 %v2100, %v2460
        %v2469 = vadd.f32 %v2101, %v2461
        %v2470 = vadd.f32 %v2102, %v2462
        %v2471 = vadd.f32 %v2103, %v2463
        %v2472 = vadd.f32 %v2104, %v2464
        %v2473 = vadd.f32 %v2105, %v2465
        %v2474 = vadd.f32 %v2106, %v2466
        %2475 = vst.msk [vmem:[%s729] sm:$0xff] %vm761, %v2467
        %2476 = vst.msk [vmem:[%s729 + $0x8] sm:$0xff] %vm761, %v2468
        %2477 = vst.msk [vmem:[%s729 + $0x10] sm:$0xff] %vm761, %v2469
        %2478 = vst.msk [vmem:[%s729 + $0x18] sm:$0xff] %vm761, %v2470
        %2479 = vst.msk [vmem:[%s729 + $0x20] sm:$0xff] %vm761, %v2471
        %2480 = vst.msk [vmem:[%s729 + $0x28] sm:$0xff] %vm761, %v2472
        %2481 = vst.msk [vmem:[%s729 + $0x30] sm:$0xff] %vm761, %v2473
        %2482 = vst.msk [vmem:[%s729 + $0x38] sm:$0xff] %vm761, %v2474
        %s2483 = sand.u32 %s446, 1
        %s2484 = scalar_lea.sflag [#allocation5], %s2483
        %s2485 = sand.u32 %s446, 1
        %s2486 = smul.addr %s2485, 8
        %s2487 = scalar_lea.vmem [#allocation12], %s2486
        %s2488 = sand.u32 %s474, 1
        %s2489 = scalar_lea.sflag [#allocation14], %s2488
        %s2490 = sand.u32 %s474, 1
        %s2491 = smul.addr %s2490, 64
        %s2492 = scalar_lea.vmem [#allocation13], %s2491
        // Predicated region
        $region109: #{tpu_custom_call.1} parent=87 // pred_check
          %p2493 = pneg %p456
        $region110: #{tpu_custom_call.1} parent=87 // pred_check_branch
          %2495 = sbr.rel (%p2493) target = $region112
        $region111: #{tpu_custom_call.1} parent=87 // pred_region
          %s2497 = ssub.s32 128, 128
          %2498 = vsyncadd %s2484, %s2497
          %s2499 = sadd.s32 %s46, %s45
          %s2500 = smul.addr %s2499, 128
          %s2501 = scalar_lea.hbm %s17, %s2500
          %s2503 = sshll.u32 %s2487, 4
          %s2504 = int_to_ptr.vmem [resolvable:$true] %s2503
          %2506 = dma.vmem_to_hbm [thread:$0]  %s2504, 128, %s2501, %s2484
        $region112: #{tpu_custom_call.1} parent=87 // pred_fallthru
          _
        // Predicated region
        $region113: #{tpu_custom_call.1} parent=87 // pred_check
          %p2507 = pneg %p484
        $region114: #{tpu_custom_call.1} parent=87 // pred_check_branch
          %2509 = sbr.rel (%p2507) target = $region116
        $region115: #{tpu_custom_call.1} parent=87 // pred_region
          %s2510 = smul.u32 8, %s46
          %s2512 = ssub.s32 1024, 1024
          %2513 = vsyncadd %s2489, %s2512
          %s2514 = smul.addr %s45, 8
          %s2515 = sadd.s32 %s2510, %s2514
          %s2516 = smul.addr %s2515, 128
          %s2517 = scalar_lea.hbm %s18, %s2516
          %s2518 = sshll.u32 %s2492, 4
          %s2519 = int_to_ptr.vmem [resolvable:$true] %s2518
          %2524 = dma.vmem_to_hbm [thread:$0]  %s2519, 1024, %s2517, %s2489, 128, 128, 8
        $region116: #{tpu_custom_call.1} parent=87 // pred_fallthru
          _
      $region88: #{tpu_custom_call.1} parent=5 // pred_fallthru
        _
      %p2525 = scmp.le.s32.totalorder 2, %s36
      // Predicated region
      $region117: #{tpu_custom_call.1} parent=5 // pred_check
        %p2526 = pneg %p2525
      $region118: #{tpu_custom_call.1} parent=5 // pred_check_branch
        %2528 = sbr.rel (%p2526) target = $region120
      $region119: #{tpu_custom_call.1} parent=5 // pred_region
        %s2529 = ssub.s32 %s36, 2
        // Predicated region
        $region121: #{tpu_custom_call.1} parent=119 // pred_check
          %p2530 = pneg %p462
        $region122: #{tpu_custom_call.1} parent=119 // pred_check_branch
          %2532 = sbr.rel (%p2530) target = $region124
        $region123: #{tpu_custom_call.1} parent=119 // pred_region
          %s2533 = sand.u32 %s447, 1
          %s2534 = scalar_lea.sflag [#allocation5], %s2533
          %s2535 = sand.u32 %s447, 1
          %s2536 = smul.addr %s2535, 8
          %s2537 = scalar_lea.vmem [#allocation12], %s2536
          %2538 = dma.done %s2534, 128
        $region124: #{tpu_custom_call.1} parent=119 // pred_fallthru
          _
        // Predicated region
        $region125: #{tpu_custom_call.1} parent=119 // pred_check
          %p2539 = pneg %p490
        $region126: #{tpu_custom_call.1} parent=119 // pred_check_branch
          %2541 = sbr.rel (%p2539) target = $region128
        $region127: #{tpu_custom_call.1} parent=119 // pred_region
          %s2542 = sand.u32 %s475, 1
          %s2543 = scalar_lea.sflag [#allocation14], %s2542
          %s2544 = sand.u32 %s475, 1
          %s2545 = smul.addr %s2544, 64
          %s2546 = scalar_lea.vmem [#allocation13], %s2545
          %2547 = dma.done %s2543, 1024
        $region128: #{tpu_custom_call.1} parent=119 // pred_fallthru
          _
      $region120: #{tpu_custom_call.1} parent=5 // pred_fallthru
        _
    $region6: #{tpu_custom_call.1} parent=1 // loop_footer
      %s40 = sadd.s32 1, %s36
    $region7: #{tpu_custom_call.1} parent=1 // loop_footer_branch
      %35 = sbr.rel target = $region3
    $region8: #{tpu_custom_call.1} parent=1 // loop_exit
      _
    %2548 = vsyncpa [#allocation4], 1
    %s2549 = scalar_lea.sflag [#allocation4], 1
    %2550 = vsyncpa %s2549, 1
    %2551 = vsyncpa [#allocation7], 1
    %2552 = vsyncpa [#allocation10], 1
    %2553 = vsyncpa [#allocation5], 1
    %s2554 = scalar_lea.sflag [#allocation5], 1
    %2555 = vsyncpa %s2554, 1
    %2556 = vsyncpa [#allocation14], 1
    %s2557 = scalar_lea.sflag [#allocation14], 1
    %2558 = vsyncpa %s2557, 1

</llo_original>
